<compile_context>
chip_gen: v7x
topology: tpu7x:2x2x1
jax: 0.10.0
libtpu: 0.0.40
codegen_flags: <defaults>
</compile_context>

<pallas_src>
import math

import jax
import jax.numpy as jnp
import numpy as np
from jax.experimental import pallas as pl
from jax.experimental.pallas import tpu as pltpu


def _round_up(x, m):
    return ((x + m - 1) // m) * m


def _vmem_capacity_bytes():
    try:
        info = pltpu.get_tpu_info()
        cap = getattr(info, "vmem_capacity_bytes", None)
        if cap:
            return int(cap)
    except Exception:
        pass
    return 64 << 20  # conservative (v7x-sized) fallback


def _dsconv_kernel(x_ref, wk_ref, pb_ref, o_ref):
    # x_ref : (Hp, Wp, C)     padded NHWC image for this batch element
    # wk_ref: (9, Cout, C)    folded weights, wk[k] = pw * dw_tap_k
    # pb_ref: (Cout, 1)       pointwise bias (f32)
    # o_ref : (Cout, Ht*Wo)   lane-dense output tile for this H tile
    _, Wp, C = x_ref.shape
    Wo = Wp - 2                      # aligned output width (sublane multiple)
    Cout, HW = o_ref.shape
    Ht = HW // Wo                    # output rows produced by this grid step
    h0 = pl.multiple_of(pl.program_id(1) * Ht, Ht)

    # 9 shifted input slabs, each contracted against its folded (Cout, C)
    # weight on the MXU; partials accumulate in f32.
    acc = jnp.zeros((Cout, HW), jnp.float32)
    for k in range(9):
        kh, kw = divmod(k, 3)
        xs = x_ref[pl.ds(h0 + kh, Ht), kw:kw + Wo, :]
        xs = xs.reshape(HW, C)       # Wo % sublane_tile == 0 -> layout no-op
        acc = acc + jax.lax.dot_general(
            wk_ref[k], xs, (((1,), (1,)), ((), ())),
            preferred_element_type=jnp.float32)
    o_ref[...] = (acc + pb_ref[...].astype(jnp.float32)).astype(o_ref.dtype)


def depthwise_separable_conv2d(x_nchw, dw_weight, pw_weight, pw_bias,
                               padding=0, compute_dtype=jnp.float32,
                               max_rows_per_tile=None):
    """Fused depthwise(3x3, groups=Cin, no bias) -> pointwise(1x1, +bias).

    x_nchw:    (N, Cin, H, W)    dw_weight: (Cin, 1, 3, 3)
    pw_weight: (Cout, Cin, 1, 1) pw_bias:   (Cout,)
    returns    (N, Cout, H + 2p - 2, W + 2p - 2)  in float32.
    """
    N, C, H, W = x_nchw.shape
    Cout = pw_weight.shape[0]

    Hp, Wp = H + 2 * padding, W + 2 * padding
    Ho, Wo = Hp - 2, Wp - 2          # true output size (valid 3x3 conv)

    isz = np.dtype(compute_dtype).itemsize
    sub = max(8, 32 // isz)          # sublane tile: 8 for f32, 16 for bf16

    Wo_k = _round_up(Wo, sub)        # makes the in-kernel flatten a no-op
    Wp_pad = Wo_k + 2
    Cout_k = _round_up(Cout, 8)      # unmasked sublane stores on the output
    g = 128 // math.gcd(Wo_k, 128)   # Ht granularity -> lane-dense out blocks

    budget = _vmem_capacity_bytes() * 3 // 4

    def est_vmem(ht):
        # Padded-layout accounting: lane dim -> 128, sublane dim -> tile.
        n_ht_ = -(-Ho // ht)
        hw = ht * Wo_k
        in_b = (n_ht_ * ht + 2) * _round_up(Wp_pad, sub) * _round_up(C, 128) * isz
        out_b = Cout_k * _round_up(hw, 128) * 4
        slab = _round_up(hw, sub) * _round_up(C, 128) * isz
        acc_b = Cout_k * _round_up(hw, 128) * 4
        w_b = 9 * Cout_k * _round_up(C, 128) * isz + Cout_k * 128 * 4
        return 2 * in_b + 2 * out_b + 2 * slab + acc_b + 2 * w_b + (2 << 20)

    # Adaptive H tile: largest tile that fits the per-generation VMEM budget.
    max_rows = 256 if max_rows_per_tile is None else max_rows_per_tile
    if Ho <= max_rows and est_vmem(Ho) <= budget:
        Ht, n_ht = Ho, 1
    else:
        hi = max(g, min((max_rows // g) * g, _round_up(Ho, g)))
        Ht = g
        for cand in range(g, hi + 1, g):
            if est_vmem(cand) <= budget:
                Ht = cand
            else:
                break
        n_ht = -(-Ho // Ht)
    Ho_k = n_ht * Ht
    Hp_pad = Ho_k + 2

    # Single layout shim: NCHW -> NHWC (+ conv & alignment zero padding).
    # TODO(synk): fold the zero padding into the kernel with masked edge taps
    # and accept NHWC callers directly to drop this HBM round trip; for very
    # small C a width-on-lanes layout (kw shifts via pltpu.roll) would avoid
    # padding C to 128 lanes.
    x = jnp.transpose(x_nchw.astype(compute_dtype), (0, 2, 3, 1))
    pad_h = (padding, padding + (Hp_pad - Hp))
    pad_w = (padding, padding + (Wp_pad - Wp))
    if any(pad_h + pad_w):
        x = jnp.pad(x, ((0, 0), pad_h, pad_w, (0, 0)))

    # Fold the depthwise taps into the pointwise weights (tiny, done once).
    dw = dw_weight.reshape(C, 9).astype(jnp.float32)           # (C, 9)
    pw = pw_weight[:, :, 0, 0].astype(jnp.float32)             # (Cout, C)
    wk = pw[None, :, :] * dw.T[:, None, :]                     # (9, Cout, C)
    pb = pw_bias.astype(jnp.float32)
    if Cout_k != Cout:
        wk = jnp.pad(wk, ((0, 0), (0, Cout_k - Cout), (0, 0)))
        pb = jnp.pad(pb, (0, Cout_k - Cout))
    wk = wk.astype(compute_dtype)
    pb = pb.reshape(Cout_k, 1)

    vmem_limit = int(min(budget, max(est_vmem(Ht) + (4 << 20), 32 << 20)))

    def make_call(x_buffering):
        x_kwargs = {} if x_buffering is None else dict(
            pipeline_mode=pl.Buffered(x_buffering))
        return pl.pallas_call(
            _dsconv_kernel,
            out_shape=jax.ShapeDtypeStruct((N, Cout_k, Ho_k * Wo_k), jnp.float32),
            grid=(N, n_ht),
            in_specs=[
                # Full padded image per batch element; its block index is
                # constant along h, so it is fetched once per image and (when
                # supported) kept single-buffered.
                pl.BlockSpec((None, Hp_pad, Wp_pad, C),
                             lambda n, h: (n, 0, 0, 0), **x_kwargs),
                pl.BlockSpec((9, Cout_k, C), lambda n, h: (0, 0, 0)),
                pl.BlockSpec((Cout_k, 1), lambda n, h: (0, 0)),
            ],
            out_specs=pl.BlockSpec((None, Cout_k, Ht * Wo_k),
                                   lambda n, h: (n, 0, h)),
            compiler_params=pltpu.CompilerParams(
                # Batch on the "parallel" axis so v7x's two cores take
                # disjoint images (no duplicated image DMA); h is "arbitrary".
                dimension_semantics=("parallel", "arbitrary"),
                vmem_limit_bytes=vmem_limit,
            ),
        )

    try:
        out_flat = jax.block_until_ready(make_call(1)(x, wk, pb))
    except Exception:
        # pl.Buffered(1) not accepted by this jax build -> default buffering.
        out_flat = make_call(None)(x, wk, pb)

    # NC(HW) -> NCHW is a pure reshape; slice only if alignment padding exists.
    out = out_flat.reshape(N, Cout_k, Ho_k, Wo_k)
    if (Cout_k, Ho_k, Wo_k) != (Cout, Ho, Wo):
        out = out[:, :Cout, :Ho, :Wo]
    return out


def _reference(x, dw_weight, pw_weight, pw_bias, padding):
    dn = ("NCHW", "OIHW", "NCHW")
    cin = x.shape[1]
    y = jax.lax.conv_general_dilated(
        x, dw_weight, (1, 1), [(padding, padding)] * 2,
        dimension_numbers=dn, feature_group_count=cin)
    y = jax.lax.conv_general_dilated(
        y, pw_weight, (1, 1), [(0, 0)] * 2, dimension_numbers=dn)
    return y + pw_bias.reshape(1, -1, 1, 1)


if __name__ == "__main__":
    key = jax.random.PRNGKey(0)

    def _check(k, n, cin, cout, h, w, padding, compute_dtype=jnp.float32,
               max_rows_per_tile=None, rtol=2e-4, atol=2e-5):
        k1, k2, k3, k4 = jax.random.split(k, 4)
        x = jax.random.normal(k1, (n, cin, h, w), jnp.float32)
        dw_w = jax.random.normal(k2, (cin, 1, 3, 3), jnp.float32) * 0.1
        pw_w = jax.random.normal(k3, (cout, cin, 1, 1), jnp.float32) * 0.1
        pw_b = jax.random.normal(k4, (cout,), jnp.float32) * 0.1
        out = jax.block_until_ready(
            depthwise_separable_conv2d(x, dw_w, pw_w, pw_b, padding,
                                       compute_dtype=compute_dtype,
                                       max_rows_per_tile=max_rows_per_tile))
        ref = _reference(x, dw_w, pw_w, pw_b, padding)
        assert out.shape == ref.shape, (out.shape, ref.shape)
        np.testing.assert_allclose(np.asarray(out), np.asarray(ref),
                                   rtol=rtol, atol=atol)

    k1, k2, k3 = jax.random.split(key, 3)
    # Module-default config (padding=0), single H tile.
    _check(k1, n=2, cin=4, cout=8, h=16, w=16, padding=0)
    # padding=1, forced multi-H-tile path, padded-Cout path (12 -> 16).
    _check(k2, n=1, cin=8, cout=12, h=40, w=22, padding=1,
           max_rows_per_tile=16)
    # bf16 staging path (v6e/v7x HBM/VMEM saver).  Best-effort: skipped if the
    # backend rejects packed-dtype sublane-offset slices.
    try:
        _check(k3, n=1, cin=8, cout=12, h=24, w=20, padding=1,
               compute_dtype=jnp.bfloat16, rtol=5e-2, atol=1e-2)
    except Exception:
        pass
    print("KERNEL_OK")
</pallas_src>

<mosaic_0001>
module attributes {stable_mosaic.version = 11 : i64} {
  func.func @_dsconv_kernel(%arg0: i32, %arg1: i32, %arg2: memref<1x16x18x4xf32, #tpu.memory_space<vmem>>, %arg3: memref<9x8x4xf32, #tpu.memory_space<vmem>>, %arg4: memref<8x1xf32, #tpu.memory_space<vmem>>, %arg5: memref<1x8x224xf32, #tpu.memory_space<vmem>>) attributes {dimension_semantics = [#tpu.dimension_semantics<parallel>, #tpu.dimension_semantics<arbitrary>], iteration_bounds = array<i64: 2, 1>, scalar_prefetch = 0 : i64, scratch_operands = 0 : i64, tpu.core_type = #tpu.core_type<tc>, window_params = [{pipeline_mode = #tpu.pipeline_mode<synchronous>, transform_indices = @transform_0, window_bounds = array<i64: 1, 16, 18, 4>}, {pipeline_mode = #tpu.pipeline_mode<synchronous>, transform_indices = @transform_1, window_bounds = array<i64: 9, 8, 4>}, {pipeline_mode = #tpu.pipeline_mode<synchronous>, transform_indices = @transform_2, window_bounds = array<i64: 8, 1>}, {transform_indices = @transform_3, window_bounds = array<i64: 1, 8, 224>}]} {
    %c14_i32 = arith.constant 14 : i32
    %0 = arith.muli %arg1, %c14_i32 : i32
    %1 = tpu.assume_multiple %0, 14 : i32
    %cst = arith.constant 0.000000e+00 : f32
    %2 = vector.broadcast %cst : f32 to vector<8x224xf32>
    %c0_i32 = arith.constant 0 : i32
    %3 = arith.addi %1, %c0_i32 : i32
    %c0 = arith.constant 0 : index
    %4 = arith.index_cast %3 : i32 to index
    %c0_0 = arith.constant 0 : index
    %c0_1 = arith.constant 0 : index
    %5 = vector.load %arg2[%c0, %4, %c0_0, %c0_1] : memref<1x16x18x4xf32, #tpu.memory_space<vmem>>, vector<1x14x16x4xf32>
    %6 = vector.shape_cast %5 : vector<1x14x16x4xf32> to vector<14x16x4xf32>
    %7 = vector.shape_cast %6 : vector<14x16x4xf32> to vector<224x4xf32>
    %c0_2 = arith.constant 0 : index
    %c0_3 = arith.constant 0 : index
    %c0_4 = arith.constant 0 : index
    %8 = vector.load %arg3[%c0_2, %c0_3, %c0_4] : memref<9x8x4xf32, #tpu.memory_space<vmem>>, vector<1x8x4xf32>
    %9 = vector.shape_cast %8 : vector<1x8x4xf32> to vector<8x4xf32>
    %cst_5 = arith.constant dense<0.000000e+00> : vector<8x224xf32>
    %10 = tpu.matmul %9, %7, %cst_5 {dimension_numbers = #tpu.dot_dimension_numbers<[1], [1], [0], [0], [0, 0, 1, 0], [], []>} : vector<8x4xf32>, vector<224x4xf32>, vector<8x224xf32> -> vector<8x224xf32>
    %11 = arith.addf %2, %10 : vector<8x224xf32>
    %c0_i32_6 = arith.constant 0 : i32
    %12 = arith.addi %1, %c0_i32_6 : i32
    %c0_7 = arith.constant 0 : index
    %13 = arith.index_cast %12 : i32 to index
    %c1 = arith.constant 1 : index
    %c0_8 = arith.constant 0 : index
    %14 = vector.load %arg2[%c0_7, %13, %c1, %c0_8] : memref<1x16x18x4xf32, #tpu.memory_space<vmem>>, vector<1x14x16x4xf32>
    %15 = vector.shape_cast %14 : vector<1x14x16x4xf32> to vector<14x16x4xf32>
    %16 = vector.shape_cast %15 : vector<14x16x4xf32> to vector<224x4xf32>
    %c1_9 = arith.constant 1 : index
    %c0_10 = arith.constant 0 : index
    %c0_11 = arith.constant 0 : index
    %17 = vector.load %arg3[%c1_9, %c0_10, %c0_11] : memref<9x8x4xf32, #tpu.memory_space<vmem>>, vector<1x8x4xf32>
    %18 = vector.shape_cast %17 : vector<1x8x4xf32> to vector<8x4xf32>
    %cst_12 = arith.constant dense<0.000000e+00> : vector<8x224xf32>
    %19 = tpu.matmul %18, %16, %cst_12 {dimension_numbers = #tpu.dot_dimension_numbers<[1], [1], [0], [0], [0, 0, 1, 0], [], []>} : vector<8x4xf32>, vector<224x4xf32>, vector<8x224xf32> -> vector<8x224xf32>
    %20 = arith.addf %11, %19 : vector<8x224xf32>
    %c0_i32_13 = arith.constant 0 : i32
    %21 = arith.addi %1, %c0_i32_13 : i32
    %c0_14 = arith.constant 0 : index
    %22 = arith.index_cast %21 : i32 to index
    %c2 = arith.constant 2 : index
    %c0_15 = arith.constant 0 : index
    %23 = vector.load %arg2[%c0_14, %22, %c2, %c0_15] : memref<1x16x18x4xf32, #tpu.memory_space<vmem>>, vector<1x14x16x4xf32>
    %24 = vector.shape_cast %23 : vector<1x14x16x4xf32> to vector<14x16x4xf32>
    %25 = vector.shape_cast %24 : vector<14x16x4xf32> to vector<224x4xf32>
    %c2_16 = arith.constant 2 : index
    %c0_17 = arith.constant 0 : index
    %c0_18 = arith.constant 0 : index
    %26 = vector.load %arg3[%c2_16, %c0_17, %c0_18] : memref<9x8x4xf32, #tpu.memory_space<vmem>>, vector<1x8x4xf32>
    %27 = vector.shape_cast %26 : vector<1x8x4xf32> to vector<8x4xf32>
    %cst_19 = arith.constant dense<0.000000e+00> : vector<8x224xf32>
    %28 = tpu.matmul %27, %25, %cst_19 {dimension_numbers = #tpu.dot_dimension_numbers<[1], [1], [0], [0], [0, 0, 1, 0], [], []>} : vector<8x4xf32>, vector<224x4xf32>, vector<8x224xf32> -> vector<8x224xf32>
    %29 = arith.addf %20, %28 : vector<8x224xf32>
    %c1_i32 = arith.constant 1 : i32
    %30 = arith.addi %1, %c1_i32 : i32
    %c0_20 = arith.constant 0 : index
    %31 = arith.index_cast %30 : i32 to index
    %c0_21 = arith.constant 0 : index
    %c0_22 = arith.constant 0 : index
    %32 = vector.load %arg2[%c0_20, %31, %c0_21, %c0_22] : memref<1x16x18x4xf32, #tpu.memory_space<vmem>>, vector<1x14x16x4xf32>
    %33 = vector.shape_cast %32 : vector<1x14x16x4xf32> to vector<14x16x4xf32>
    %34 = vector.shape_cast %33 : vector<14x16x4xf32> to vector<224x4xf32>
    %c3 = arith.constant 3 : index
    %c0_23 = arith.constant 0 : index
    %c0_24 = arith.constant 0 : index
    %35 = vector.load %arg3[%c3, %c0_23, %c0_24] : memref<9x8x4xf32, #tpu.memory_space<vmem>>, vector<1x8x4xf32>
    %36 = vector.shape_cast %35 : vector<1x8x4xf32> to vector<8x4xf32>
    %cst_25 = arith.constant dense<0.000000e+00> : vector<8x224xf32>
    %37 = tpu.matmul %36, %34, %cst_25 {dimension_numbers = #tpu.dot_dimension_numbers<[1], [1], [0], [0], [0, 0, 1, 0], [], []>} : vector<8x4xf32>, vector<224x4xf32>, vector<8x224xf32> -> vector<8x224xf32>
    %38 = arith.addf %29, %37 : vector<8x224xf32>
    %c1_i32_26 = arith.constant 1 : i32
    %39 = arith.addi %1, %c1_i32_26 : i32
    %c0_27 = arith.constant 0 : index
    %40 = arith.index_cast %39 : i32 to index
    %c1_28 = arith.constant 1 : index
    %c0_29 = arith.constant 0 : index
    %41 = vector.load %arg2[%c0_27, %40, %c1_28, %c0_29] : memref<1x16x18x4xf32, #tpu.memory_space<vmem>>, vector<1x14x16x4xf32>
    %42 = vector.shape_cast %41 : vector<1x14x16x4xf32> to vector<14x16x4xf32>
    %43 = vector.shape_cast %42 : vector<14x16x4xf32> to vector<224x4xf32>
    %c4 = arith.constant 4 : index
    %c0_30 = arith.constant 0 : index
    %c0_31 = arith.constant 0 : index
    %44 = vector.load %arg3[%c4, %c0_30, %c0_31] : memref<9x8x4xf32, #tpu.memory_space<vmem>>, vector<1x8x4xf32>
    %45 = vector.shape_cast %44 : vector<1x8x4xf32> to vector<8x4xf32>
    %cst_32 = arith.constant dense<0.000000e+00> : vector<8x224xf32>
    %46 = tpu.matmul %45, %43, %cst_32 {dimension_numbers = #tpu.dot_dimension_numbers<[1], [1], [0], [0], [0, 0, 1, 0], [], []>} : vector<8x4xf32>, vector<224x4xf32>, vector<8x224xf32> -> vector<8x224xf32>
    %47 = arith.addf %38, %46 : vector<8x224xf32>
    %c1_i32_33 = arith.constant 1 : i32
    %48 = arith.addi %1, %c1_i32_33 : i32
    %c0_34 = arith.constant 0 : index
    %49 = arith.index_cast %48 : i32 to index
    %c2_35 = arith.constant 2 : index
    %c0_36 = arith.constant 0 : index
    %50 = vector.load %arg2[%c0_34, %49, %c2_35, %c0_36] : memref<1x16x18x4xf32, #tpu.memory_space<vmem>>, vector<1x14x16x4xf32>
    %51 = vector.shape_cast %50 : vector<1x14x16x4xf32> to vector<14x16x4xf32>
    %52 = vector.shape_cast %51 : vector<14x16x4xf32> to vector<224x4xf32>
    %c5 = arith.constant 5 : index
    %c0_37 = arith.constant 0 : index
    %c0_38 = arith.constant 0 : index
    %53 = vector.load %arg3[%c5, %c0_37, %c0_38] : memref<9x8x4xf32, #tpu.memory_space<vmem>>, vector<1x8x4xf32>
    %54 = vector.shape_cast %53 : vector<1x8x4xf32> to vector<8x4xf32>
    %cst_39 = arith.constant dense<0.000000e+00> : vector<8x224xf32>
    %55 = tpu.matmul %54, %52, %cst_39 {dimension_numbers = #tpu.dot_dimension_numbers<[1], [1], [0], [0], [0, 0, 1, 0], [], []>} : vector<8x4xf32>, vector<224x4xf32>, vector<8x224xf32> -> vector<8x224xf32>
    %56 = arith.addf %47, %55 : vector<8x224xf32>
    %c2_i32 = arith.constant 2 : i32
    %57 = arith.addi %1, %c2_i32 : i32
    %c0_40 = arith.constant 0 : index
    %58 = arith.index_cast %57 : i32 to index
    %c0_41 = arith.constant 0 : index
    %c0_42 = arith.constant 0 : index
    %59 = vector.load %arg2[%c0_40, %58, %c0_41, %c0_42] : memref<1x16x18x4xf32, #tpu.memory_space<vmem>>, vector<1x14x16x4xf32>
    %60 = vector.shape_cast %59 : vector<1x14x16x4xf32> to vector<14x16x4xf32>
    %61 = vector.shape_cast %60 : vector<14x16x4xf32> to vector<224x4xf32>
    %c6 = arith.constant 6 : index
    %c0_43 = arith.constant 0 : index
    %c0_44 = arith.constant 0 : index
    %62 = vector.load %arg3[%c6, %c0_43, %c0_44] : memref<9x8x4xf32, #tpu.memory_space<vmem>>, vector<1x8x4xf32>
    %63 = vector.shape_cast %62 : vector<1x8x4xf32> to vector<8x4xf32>
    %cst_45 = arith.constant dense<0.000000e+00> : vector<8x224xf32>
    %64 = tpu.matmul %63, %61, %cst_45 {dimension_numbers = #tpu.dot_dimension_numbers<[1], [1], [0], [0], [0, 0, 1, 0], [], []>} : vector<8x4xf32>, vector<224x4xf32>, vector<8x224xf32> -> vector<8x224xf32>
    %65 = arith.addf %56, %64 : vector<8x224xf32>
    %c2_i32_46 = arith.constant 2 : i32
    %66 = arith.addi %1, %c2_i32_46 : i32
    %c0_47 = arith.constant 0 : index
    %67 = arith.index_cast %66 : i32 to index
    %c1_48 = arith.constant 1 : index
    %c0_49 = arith.constant 0 : index
    %68 = vector.load %arg2[%c0_47, %67, %c1_48, %c0_49] : memref<1x16x18x4xf32, #tpu.memory_space<vmem>>, vector<1x14x16x4xf32>
    %69 = vector.shape_cast %68 : vector<1x14x16x4xf32> to vector<14x16x4xf32>
    %70 = vector.shape_cast %69 : vector<14x16x4xf32> to vector<224x4xf32>
    %c7 = arith.constant 7 : index
    %c0_50 = arith.constant 0 : index
    %c0_51 = arith.constant 0 : index
    %71 = vector.load %arg3[%c7, %c0_50, %c0_51] : memref<9x8x4xf32, #tpu.memory_space<vmem>>, vector<1x8x4xf32>
    %72 = vector.shape_cast %71 : vector<1x8x4xf32> to vector<8x4xf32>
    %cst_52 = arith.constant dense<0.000000e+00> : vector<8x224xf32>
    %73 = tpu.matmul %72, %70, %cst_52 {dimension_numbers = #tpu.dot_dimension_numbers<[1], [1], [0], [0], [0, 0, 1, 0], [], []>} : vector<8x4xf32>, vector<224x4xf32>, vector<8x224xf32> -> vector<8x224xf32>
    %74 = arith.addf %65, %73 : vector<8x224xf32>
    %c2_i32_53 = arith.constant 2 : i32
    %75 = arith.addi %1, %c2_i32_53 : i32
    %c0_54 = arith.constant 0 : index
    %76 = arith.index_cast %75 : i32 to index
    %c2_55 = arith.constant 2 : index
    %c0_56 = arith.constant 0 : index
    %77 = vector.load %arg2[%c0_54, %76, %c2_55, %c0_56] : memref<1x16x18x4xf32, #tpu.memory_space<vmem>>, vector<1x14x16x4xf32>
    %78 = vector.shape_cast %77 : vector<1x14x16x4xf32> to vector<14x16x4xf32>
    %79 = vector.shape_cast %78 : vector<14x16x4xf32> to vector<224x4xf32>
    %c8 = arith.constant 8 : index
    %c0_57 = arith.constant 0 : index
    %c0_58 = arith.constant 0 : index
    %80 = vector.load %arg3[%c8, %c0_57, %c0_58] : memref<9x8x4xf32, #tpu.memory_space<vmem>>, vector<1x8x4xf32>
    %81 = vector.shape_cast %80 : vector<1x8x4xf32> to vector<8x4xf32>
    %cst_59 = arith.constant dense<0.000000e+00> : vector<8x224xf32>
    %82 = tpu.matmul %81, %79, %cst_59 {dimension_numbers = #tpu.dot_dimension_numbers<[1], [1], [0], [0], [0, 0, 1, 0], [], []>} : vector<8x4xf32>, vector<224x4xf32>, vector<8x224xf32> -> vector<8x224xf32>
    %83 = arith.addf %74, %82 : vector<8x224xf32>
    %c0_60 = arith.constant 0 : index
    %c0_61 = arith.constant 0 : index
    %84 = vector.load %arg4[%c0_60, %c0_61] : memref<8x1xf32, #tpu.memory_space<vmem>>, vector<8x1xf32>
    %85 = vector.broadcast %84 : vector<8x1xf32> to vector<8x224xf32>
    %86 = arith.addf %83, %85 : vector<8x224xf32>
    %c0_62 = arith.constant 0 : index
    %c0_63 = arith.constant 0 : index
    %c0_64 = arith.constant 0 : index
    %87 = vector.load %arg5[%c0_62, %c0_63, %c0_64] : memref<1x8x224xf32, #tpu.memory_space<vmem>>, vector<1x8x224xf32>
    %88 = vector.shape_cast %87 : vector<1x8x224xf32> to vector<8x224xf32>
    %89 = vector.shape_cast %86 : vector<8x224xf32> to vector<1x8x224xf32>
    tpu.vector_store %arg5[%c0_62, %c0_63, %c0_64], %89 {strides = array<i32>} : memref<1x8x224xf32, #tpu.memory_space<vmem>>, vector<1x8x224xf32>,
    return
  }
  func.func @transform_0(%arg0: i32, %arg1: i32) -> (i32, i32, i32, i32) {
    %c0_i32 = arith.constant 0 : i32
    %c0_i32_0 = arith.constant 0 : i32
    %c0_i32_1 = arith.constant 0 : i32
    %c0_i32_2 = arith.constant 0 : i32
    return %arg0, %c0_i32, %c0_i32_0, %c0_i32_1 : i32, i32, i32, i32
  }
  func.func @transform_1(%arg0: i32, %arg1: i32) -> (i32, i32, i32) {
    %c0_i32 = arith.constant 0 : i32
    %c0_i32_0 = arith.constant 0 : i32
    %c0_i32_1 = arith.constant 0 : i32
    %c0_i32_2 = arith.constant 0 : i32
    return %c0_i32, %c0_i32_0, %c0_i32_1 : i32, i32, i32
  }
  func.func @transform_2(%arg0: i32, %arg1: i32) -> (i32, i32) {
    %c0_i32 = arith.constant 0 : i32
    %c0_i32_0 = arith.constant 0 : i32
    %c0_i32_1 = arith.constant 0 : i32
    return %c0_i32, %c0_i32_0 : i32, i32
  }
  func.func @transform_3(%arg0: i32, %arg1: i32) -> (i32, i32, i32) {
    %c0_i32 = arith.constant 0 : i32
    %c0_i32_0 = arith.constant 0 : i32
    return %arg0, %c0_i32, %arg1 : i32, i32, i32
  }
}

module attributes {stable_mosaic.version = 11 : i64} {
  func.func @_dsconv_kernel(%arg0: i32, %arg1: i32, %arg2: memref<1x16x18x4xf32, #tpu.memory_space<vmem>>, %arg3: memref<9x8x4xf32, #tpu.memory_space<vmem>>, %arg4: memref<8x1xf32, #tpu.memory_space<vmem>>, %arg5: memref<1x8x224xf32, #tpu.memory_space<vmem>>) attributes {dimension_semantics = [#tpu.dimension_semantics<parallel>, #tpu.dimension_semantics<arbitrary>], iteration_bounds = array<i64: 2, 1>, scalar_prefetch = 0 : i64, scratch_operands = 0 : i64, tpu.core_type = #tpu.core_type<tc>, window_params = [{transform_indices = @transform_0, window_bounds = array<i64: 1, 16, 18, 4>}, {pipeline_mode = #tpu.pipeline_mode<synchronous>, transform_indices = @transform_1, window_bounds = array<i64: 9, 8, 4>}, {pipeline_mode = #tpu.pipeline_mode<synchronous>, transform_indices = @transform_2, window_bounds = array<i64: 8, 1>}, {transform_indices = @transform_3, window_bounds = array<i64: 1, 8, 224>}]} {
    %c14_i32 = arith.constant 14 : i32
    %0 = arith.muli %arg1, %c14_i32 : i32
    %1 = tpu.assume_multiple %0, 14 : i32
    %cst = arith.constant 0.000000e+00 : f32
    %2 = vector.broadcast %cst : f32 to vector<8x224xf32>
    %c0_i32 = arith.constant 0 : i32
    %3 = arith.addi %1, %c0_i32 : i32
    %c0 = arith.constant 0 : index
    %4 = arith.index_cast %3 : i32 to index
    %c0_0 = arith.constant 0 : index
    %c0_1 = arith.constant 0 : index
    %5 = vector.load %arg2[%c0, %4, %c0_0, %c0_1] : memref<1x16x18x4xf32, #tpu.memory_space<vmem>>, vector<1x14x16x4xf32>
    %6 = vector.shape_cast %5 : vector<1x14x16x4xf32> to vector<14x16x4xf32>
    %7 = vector.shape_cast %6 : vector<14x16x4xf32> to vector<224x4xf32>
    %c0_2 = arith.constant 0 : index
    %c0_3 = arith.constant 0 : index
    %c0_4 = arith.constant 0 : index
    %8 = vector.load %arg3[%c0_2, %c0_3, %c0_4] : memref<9x8x4xf32, #tpu.memory_space<vmem>>, vector<1x8x4xf32>
    %9 = vector.shape_cast %8 : vector<1x8x4xf32> to vector<8x4xf32>
    %cst_5 = arith.constant dense<0.000000e+00> : vector<8x224xf32>
    %10 = tpu.matmul %9, %7, %cst_5 {dimension_numbers = #tpu.dot_dimension_numbers<[1], [1], [0], [0], [0, 0, 1, 0], [], []>} : vector<8x4xf32>, vector<224x4xf32>, vector<8x224xf32> -> vector<8x224xf32>
    %11 = arith.addf %2, %10 : vector<8x224xf32>
    %c0_i32_6 = arith.constant 0 : i32
    %12 = arith.addi %1, %c0_i32_6 : i32
    %c0_7 = arith.constant 0 : index
    %13 = arith.index_cast %12 : i32 to index
    %c1 = arith.constant 1 : index
    %c0_8 = arith.constant 0 : index
    %14 = vector.load %arg2[%c0_7, %13, %c1, %c0_8] : memref<1x16x18x4xf32, #tpu.memory_space<vmem>>, vector<1x14x16x4xf32>
    %15 = vector.shape_cast %14 : vector<1x14x16x4xf32> to vector<14x16x4xf32>
    %16 = vector.shape_cast %15 : vector<14x16x4xf32> to vector<224x4xf32>
    %c1_9 = arith.constant 1 : index
    %c0_10 = arith.constant 0 : index
    %c0_11 = arith.constant 0 : index
    %17 = vector.load %arg3[%c1_9, %c0_10, %c0_11] : memref<9x8x4xf32, #tpu.memory_space<vmem>>, vector<1x8x4xf32>
    %18 = vector.shape_cast %17 : vector<1x8x4xf32> to vector<8x4xf32>
    %cst_12 = arith.constant dense<0.000000e+00> : vector<8x224xf32>
    %19 = tpu.matmul %18, %16, %cst_12 {dimension_numbers = #tpu.dot_dimension_numbers<[1], [1], [0], [0], [0, 0, 1, 0], [], []>} : vector<8x4xf32>, vector<224x4xf32>, vector<8x224xf32> -> vector<8x224xf32>
    %20 = arith.addf %11, %19 : vector<8x224xf32>
    %c0_i32_13 = arith.constant 0 : i32
    %21 = arith.addi %1, %c0_i32_13 : i32
    %c0_14 = arith.constant 0 : index
    %22 = arith.index_cast %21 : i32 to index
    %c2 = arith.constant 2 : index
    %c0_15 = arith.constant 0 : index
    %23 = vector.load %arg2[%c0_14, %22, %c2, %c0_15] : memref<1x16x18x4xf32, #tpu.memory_space<vmem>>, vector<1x14x16x4xf32>
    %24 = vector.shape_cast %23 : vector<1x14x16x4xf32> to vector<14x16x4xf32>
    %25 = vector.shape_cast %24 : vector<14x16x4xf32> to vector<224x4xf32>
    %c2_16 = arith.constant 2 : index
    %c0_17 = arith.constant 0 : index
    %c0_18 = arith.constant 0 : index
    %26 = vector.load %arg3[%c2_16, %c0_17, %c0_18] : memref<9x8x4xf32, #tpu.memory_space<vmem>>, vector<1x8x4xf32>
    %27 = vector.shape_cast %26 : vector<1x8x4xf32> to vector<8x4xf32>
    %cst_19 = arith.constant dense<0.000000e+00> : vector<8x224xf32>
    %28 = tpu.matmul %27, %25, %cst_19 {dimension_numbers = #tpu.dot_dimension_numbers<[1], [1], [0], [0], [0, 0, 1, 0], [], []>} : vector<8x4xf32>, vector<224x4xf32>, vector<8x224xf32> -> vector<8x224xf32>
    %29 = arith.addf %20, %28 : vector<8x224xf32>
    %c1_i32 = arith.constant 1 : i32
    %30 = arith.addi %1, %c1_i32 : i32
    %c0_20 = arith.constant 0 : index
    %31 = arith.index_cast %30 : i32 to index
    %c0_21 = arith.constant 0 : index
    %c0_22 = arith.constant 0 : index
    %32 = vector.load %arg2[%c0_20, %31, %c0_21, %c0_22] : memref<1x16x18x4xf32, #tpu.memory_space<vmem>>, vector<1x14x16x4xf32>
    %33 = vector.shape_cast %32 : vector<1x14x16x4xf32> to vector<14x16x4xf32>
    %34 = vector.shape_cast %33 : vector<14x16x4xf32> to vector<224x4xf32>
    %c3 = arith.constant 3 : index
    %c0_23 = arith.constant 0 : index
    %c0_24 = arith.constant 0 : index
    %35 = vector.load %arg3[%c3, %c0_23, %c0_24] : memref<9x8x4xf32, #tpu.memory_space<vmem>>, vector<1x8x4xf32>
    %36 = vector.shape_cast %35 : vector<1x8x4xf32> to vector<8x4xf32>
    %cst_25 = arith.constant dense<0.000000e+00> : vector<8x224xf32>
    %37 = tpu.matmul %36, %34, %cst_25 {dimension_numbers = #tpu.dot_dimension_numbers<[1], [1], [0], [0], [0, 0, 1, 0], [], []>} : vector<8x4xf32>, vector<224x4xf32>, vector<8x224xf32> -> vector<8x224xf32>
    %38 = arith.addf %29, %37 : vector<8x224xf32>
    %c1_i32_26 = arith.constant 1 : i32
    %39 = arith.addi %1, %c1_i32_26 : i32
    %c0_27 = arith.constant 0 : index
    %40 = arith.index_cast %39 : i32 to index
    %c1_28 = arith.constant 1 : index
    %c0_29 = arith.constant 0 : index
    %41 = vector.load %arg2[%c0_27, %40, %c1_28, %c0_29] : memref<1x16x18x4xf32, #tpu.memory_space<vmem>>, vector<1x14x16x4xf32>
    %42 = vector.shape_cast %41 : vector<1x14x16x4xf32> to vector<14x16x4xf32>
    %43 = vector.shape_cast %42 : vector<14x16x4xf32> to vector<224x4xf32>
    %c4 = arith.constant 4 : index
    %c0_30 = arith.constant 0 : index
    %c0_31 = arith.constant 0 : index
    %44 = vector.load %arg3[%c4, %c0_30, %c0_31] : memref<9x8x4xf32, #tpu.memory_space<vmem>>, vector<1x8x4xf32>
    %45 = vector.shape_cast %44 : vector<1x8x4xf32> to vector<8x4xf32>
    %cst_32 = arith.constant dense<0.000000e+00> : vector<8x224xf32>
    %46 = tpu.matmul %45, %43, %cst_32 {dimension_numbers = #tpu.dot_dimension_numbers<[1], [1], [0], [0], [0, 0, 1, 0], [], []>} : vector<8x4xf32>, vector<224x4xf32>, vector<8x224xf32> -> vector<8x224xf32>
    %47 = arith.addf %38, %46 : vector<8x224xf32>
    %c1_i32_33 = arith.constant 1 : i32
    %48 = arith.addi %1, %c1_i32_33 : i32
    %c0_34 = arith.constant 0 : index
    %49 = arith.index_cast %48 : i32 to index
    %c2_35 = arith.constant 2 : index
    %c0_36 = arith.constant 0 : index
    %50 = vector.load %arg2[%c0_34, %49, %c2_35, %c0_36] : memref<1x16x18x4xf32, #tpu.memory_space<vmem>>, vector<1x14x16x4xf32>
    %51 = vector.shape_cast %50 : vector<1x14x16x4xf32> to vector<14x16x4xf32>
    %52 = vector.shape_cast %51 : vector<14x16x4xf32> to vector<224x4xf32>
    %c5 = arith.constant 5 : index
    %c0_37 = arith.constant 0 : index
    %c0_38 = arith.constant 0 : index
    %53 = vector.load %arg3[%c5, %c0_37, %c0_38] : memref<9x8x4xf32, #tpu.memory_space<vmem>>, vector<1x8x4xf32>
    %54 = vector.shape_cast %53 : vector<1x8x4xf32> to vector<8x4xf32>
    %cst_39 = arith.constant dense<0.000000e+00> : vector<8x224xf32>
    %55 = tpu.matmul %54, %52, %cst_39 {dimension_numbers = #tpu.dot_dimension_numbers<[1], [1], [0], [0], [0, 0, 1, 0], [], []>} : vector<8x4xf32>, vector<224x4xf32>, vector<8x224xf32> -> vector<8x224xf32>
    %56 = arith.addf %47, %55 : vector<8x224xf32>
    %c2_i32 = arith.constant 2 : i32
    %57 = arith.addi %1, %c2_i32 : i32
    %c0_40 = arith.constant 0 : index
    %58 = arith.index_cast %57 : i32 to index
    %c0_41 = arith.constant 0 : index
    %c0_42 = arith.constant 0 : index
    %59 = vector.load %arg2[%c0_40, %58, %c0_41, %c0_42] : memref<1x16x18x4xf32, #tpu.memory_space<vmem>>, vector<1x14x16x4xf32>
    %60 = vector.shape_cast %59 : vector<1x14x16x4xf32> to vector<14x16x4xf32>
    %61 = vector.shape_cast %60 : vector<14x16x4xf32> to vector<224x4xf32>
    %c6 = arith.constant 6 : index
    %c0_43 = arith.constant 0 : index
    %c0_44 = arith.constant 0 : index
    %62 = vector.load %arg3[%c6, %c0_43, %c0_44] : memref<9x8x4xf32, #tpu.memory_space<vmem>>, vector<1x8x4xf32>
    %63 = vector.shape_cast %62 : vector<1x8x4xf32> to vector<8x4xf32>
    %cst_45 = arith.constant dense<0.000000e+00> : vector<8x224xf32>
    %64 = tpu.matmul %63, %61, %cst_45 {dimension_numbers = #tpu.dot_dimension_numbers<[1], [1], [0], [0], [0, 0, 1, 0], [], []>} : vector<8x4xf32>, vector<224x4xf32>, vector<8x224xf32> -> vector<8x224xf32>
    %65 = arith.addf %56, %64 : vector<8x224xf32>
    %c2_i32_46 = arith.constant 2 : i32
    %66 = arith.addi %1, %c2_i32_46 : i32
    %c0_47 = arith.constant 0 : index
    %67 = arith.index_cast %66 : i32 to index
    %c1_48 = arith.constant 1 : index
    %c0_49 = arith.constant 0 : index
    %68 = vector.load %arg2[%c0_47, %67, %c1_48, %c0_49] : memref<1x16x18x4xf32, #tpu.memory_space<vmem>>, vector<1x14x16x4xf32>
    %69 = vector.shape_cast %68 : vector<1x14x16x4xf32> to vector<14x16x4xf32>
    %70 = vector.shape_cast %69 : vector<14x16x4xf32> to vector<224x4xf32>
    %c7 = arith.constant 7 : index
    %c0_50 = arith.constant 0 : index
    %c0_51 = arith.constant 0 : index
    %71 = vector.load %arg3[%c7, %c0_50, %c0_51] : memref<9x8x4xf32, #tpu.memory_space<vmem>>, vector<1x8x4xf32>
    %72 = vector.shape_cast %71 : vector<1x8x4xf32> to vector<8x4xf32>
    %cst_52 = arith.constant dense<0.000000e+00> : vector<8x224xf32>
    %73 = tpu.matmul %72, %70, %cst_52 {dimension_numbers = #tpu.dot_dimension_numbers<[1], [1], [0], [0], [0, 0, 1, 0], [], []>} : vector<8x4xf32>, vector<224x4xf32>, vector<8x224xf32> -> vector<8x224xf32>
    %74 = arith.addf %65, %73 : vector<8x224xf32>
    %c2_i32_53 = arith.constant 2 : i32
    %75 = arith.addi %1, %c2_i32_53 : i32
    %c0_54 = arith.constant 0 : index
    %76 = arith.index_cast %75 : i32 to index
    %c2_55 = arith.constant 2 : index
    %c0_56 = arith.constant 0 : index
    %77 = vector.load %arg2[%c0_54, %76, %c2_55, %c0_56] : memref<1x16x18x4xf32, #tpu.memory_space<vmem>>, vector<1x14x16x4xf32>
    %78 = vector.shape_cast %77 : vector<1x14x16x4xf32> to vector<14x16x4xf32>
    %79 = vector.shape_cast %78 : vector<14x16x4xf32> to vector<224x4xf32>
    %c8 = arith.constant 8 : index
    %c0_57 = arith.constant 0 : index
    %c0_58 = arith.constant 0 : index
    %80 = vector.load %arg3[%c8, %c0_57, %c0_58] : memref<9x8x4xf32, #tpu.memory_space<vmem>>, vector<1x8x4xf32>
    %81 = vector.shape_cast %80 : vector<1x8x4xf32> to vector<8x4xf32>
    %cst_59 = arith.constant dense<0.000000e+00> : vector<8x224xf32>
    %82 = tpu.matmul %81, %79, %cst_59 {dimension_numbers = #tpu.dot_dimension_numbers<[1], [1], [0], [0], [0, 0, 1, 0], [], []>} : vector<8x4xf32>, vector<224x4xf32>, vector<8x224xf32> -> vector<8x224xf32>
    %83 = arith.addf %74, %82 : vector<8x224xf32>
    %c0_60 = arith.constant 0 : index
    %c0_61 = arith.constant 0 : index
    %84 = vector.load %arg4[%c0_60, %c0_61] : memref<8x1xf32, #tpu.memory_space<vmem>>, vector<8x1xf32>
    %85 = vector.broadcast %84 : vector<8x1xf32> to vector<8x224xf32>
    %86 = arith.addf %83, %85 : vector<8x224xf32>
    %c0_62 = arith.constant 0 : index
    %c0_63 = arith.constant 0 : index
    %c0_64 = arith.constant 0 : index
    %87 = vector.load %arg5[%c0_62, %c0_63, %c0_64] : memref<1x8x224xf32, #tpu.memory_space<vmem>>, vector<1x8x224xf32>
    %88 = vector.shape_cast %87 : vector<1x8x224xf32> to vector<8x224xf32>
    %89 = vector.shape_cast %86 : vector<8x224xf32> to vector<1x8x224xf32>
    tpu.vector_store %arg5[%c0_62, %c0_63, %c0_64], %89 {strides = array<i32>} : memref<1x8x224xf32, #tpu.memory_space<vmem>>, vector<1x8x224xf32>,
    return
  }
  func.func @transform_0(%arg0: i32, %arg1: i32) -> (i32, i32, i32, i32) {
    %c0_i32 = arith.constant 0 : i32
    %c0_i32_0 = arith.constant 0 : i32
    %c0_i32_1 = arith.constant 0 : i32
    %c0_i32_2 = arith.constant 0 : i32
    return %arg0, %c0_i32, %c0_i32_0, %c0_i32_1 : i32, i32, i32, i32
  }
  func.func @transform_1(%arg0: i32, %arg1: i32) -> (i32, i32, i32) {
    %c0_i32 = arith.constant 0 : i32
    %c0_i32_0 = arith.constant 0 : i32
    %c0_i32_1 = arith.constant 0 : i32
    %c0_i32_2 = arith.constant 0 : i32
    return %c0_i32, %c0_i32_0, %c0_i32_1 : i32, i32, i32
  }
  func.func @transform_2(%arg0: i32, %arg1: i32) -> (i32, i32) {
    %c0_i32 = arith.constant 0 : i32
    %c0_i32_0 = arith.constant 0 : i32
    %c0_i32_1 = arith.constant 0 : i32
    return %c0_i32, %c0_i32_0 : i32, i32
  }
  func.func @transform_3(%arg0: i32, %arg1: i32) -> (i32, i32, i32) {
    %c0_i32 = arith.constant 0 : i32
    %c0_i32_0 = arith.constant 0 : i32
    return %arg0, %c0_i32, %arg1 : i32, i32, i32
  }
}

</mosaic_0001>

<llo_original>
// kernel: tpu_custom_call.1
$region0: #{tpu_custom_call.1}
  #allocation0 [shape = 'u32[]', space=smem, size = 0x4, offset = 0x4, fixed_abs, tag = 'smem constant byte address 0x4 - core index']
  #allocation1 [shape = 'u32[144,128]{1,0:T(1,128)}', space=vmem, size = 0x12000, scoped, tag = 'internal scratch']
  %s0 = inlined_call_operand.vmem [shape: f32[2,16,18,4], index: 0, kind: input, shape index: {}]
  %s1 = inlined_call_operand.vmem [shape: f32[9,8,4], index: 1, kind: input, shape index: {}]
  %s2 = inlined_call_operand.vmem [shape: f32[8,1], index: 2, kind: input, shape index: {}]
  %s3 = inlined_call_operand.hbm [shape: f32[2,8,224], index: 3, kind: output, shape index: {}]
  %s4 = sld [smem:[#allocation0]]
  $region45: #{tpu_custom_call.1} parent=0
    _
  %s6 = ssub.s32 1, %s4
  %s7 = scalar_select 0, %s6, %s4
  $region1: #{tpu_custom_call.1} parent=0
    #allocation2 [shape = 'u8[16384]{0}', space=vmem, size = 0x4000, scoped, tag = 'output window, operand 0']
    #allocation3 [shape = 's32[2]{0}', space=sflag, size = 0x8, scoped, tag = 'scoped memory for tpu_custom_call.1']
    %8 = vsyncpa [#allocation3], 0
    %s9 = scalar_lea.sflag [#allocation3], 1
    %10 = vsyncpa %s9, 0
    loop: start=0, step=1, limit=4
    $region2: #{tpu_custom_call.1} parent=1 // loop_pre_header
      _
    $region3: #{tpu_custom_call.1} parent=1 // loop_header
      %s12 = sphi 0, %s16
      %p13 = scmp.ge.s32.totalorder %s12, 4
      %s19 = sphi 0, %s31
      %s20 = sphi 0, %s27
      %s21 = sphi 0, %s19
      %s22 = sphi 0, %s20
      %s23 = sphi 0, %s21
      %s24 = sphi 0, %s22
      %s34 = sphi 0, %s36
      %s37 = sphi 0, %s34
      %s38 = sphi 0, %s37
      %s54 = sphi 0, %s38
      %s58 = sphi 0, %s58
      %s60 = sphi 0, %s58
      %s61 = sphi 0, %s60
      %s75 = sphi 0, %s61
      %s79 = sphi 0, %s79
      %s81 = sphi 0, %s79
      %s82 = sphi 0, %s81
      %s96 = sphi 0, %s82
      %s104 = sphi 0, %s106
      %s107 = sphi 0, %s104
      %s108 = sphi 0, %s107
      %s124 = sphi 0, %s108
    $region4: #{tpu_custom_call.1} parent=1 // loop_header_branch
      %15 = sbr.rel (%p13) target = $region8
    $region5: #{tpu_custom_call.1} parent=1 // loop_body
      %s17 = ssub.s32 %s12, 1
      %s18 = ssub.s32 %s12, 2
      %s25 = sadd.s32 1, %s20
      %p26 = scmp.ge.s32.totalorder %s25, 1
      %s27 = scalar_select %p26, 0, %s25
      %s28 = sadd.s32 1, %s19
      %s29 = scalar_select %p26, %s28, %s19
      %p30 = scmp.ge.s32.totalorder %s29, 2
      %s31 = scalar_select %p30, 0, %s29
      %s32 = ssub.s32 %s19, %s31
      %p33 = scmp.eq.s32.totalorder %s32, 0
      %s35 = sadd.s32 %s34, 1
      %s36 = scalar_select %p33, %s34, %s35
      %p39 = pneg %p33
      %p40 = scmp.eq.s32.totalorder %s12, 1
      %p41 = por %p39, %p40
      %p42 = scmp.ne.s32.totalorder %s34, %s37
      %p43 = scmp.eq.s32.totalorder %s12, 0
      %p44 = por %p42, %p43
      %p45 = scmp.ne.s32.totalorder %s34, %s37
      %p46 = scmp.eq.s32.totalorder %s17, 1
      %p47 = por %p45, %p46
      %p48 = scmp.ne.s32.totalorder %s37, %s38
      %p49 = scmp.eq.s32.totalorder %s17, 0
      %p50 = por %p48, %p49
      %p51 = scmp.ne.s32.totalorder %s37, %s38
      %p52 = scmp.eq.s32.totalorder %s18, 1
      %p53 = por %p51, %p52
      %p55 = scmp.ne.s32.totalorder %s38, %s54
      %p56 = scmp.eq.s32.totalorder %s18, 0
      %p57 = por %p55, %p56
      %s59 = sadd.s32 %s58, 1
      %p62 = scmp.eq.s32.totalorder %s12, 1
      %p63 = scmp.ne.s32.totalorder %s58, %s60
      %p64 = scmp.eq.s32.totalorder %s12, 0
      %p65 = por %p63, %p64
      %p66 = scmp.ne.s32.totalorder %s58, %s60
      %p67 = scmp.eq.s32.totalorder %s17, 1
      %p68 = por %p66, %p67
      %p69 = scmp.ne.s32.totalorder %s60, %s61
      %p70 = scmp.eq.s32.totalorder %s17, 0
      %p71 = por %p69, %p70
      %p72 = scmp.ne.s32.totalorder %s60, %s61
      %p73 = scmp.eq.s32.totalorder %s18, 1
      %p74 = por %p72, %p73
      %p76 = scmp.ne.s32.totalorder %s61, %s75
      %p77 = scmp.eq.s32.totalorder %s18, 0
      %p78 = por %p76, %p77
      %s80 = sadd.s32 %s79, 1
      %p83 = scmp.eq.s32.totalorder %s12, 1
      %p84 = scmp.ne.s32.totalorder %s79, %s81
      %p85 = scmp.eq.s32.totalorder %s12, 0
      %p86 = por %p84, %p85
      %p87 = scmp.ne.s32.totalorder %s79, %s81
      %p88 = scmp.eq.s32.totalorder %s17, 1
      %p89 = por %p87, %p88
      %p90 = scmp.ne.s32.totalorder %s81, %s82
      %p91 = scmp.eq.s32.totalorder %s17, 0
      %p92 = por %p90, %p91
      %p93 = scmp.ne.s32.totalorder %s81, %s82
      %p94 = scmp.eq.s32.totalorder %s18, 1
      %p95 = por %p93, %p94
      %p97 = scmp.ne.s32.totalorder %s82, %s96
      %p98 = scmp.eq.s32.totalorder %s18, 0
      %p99 = por %p97, %p98
      %s100 = ssub.s32 %s19, %s31
      %s101 = ssub.s32 %s20, %s27
      %s102 = sor.u32 %s100, %s101
      %p103 = scmp.eq.s32.totalorder %s102, 0
      %s105 = sadd.s32 %s104, 1
      %s106 = scalar_select %p103, %s104, %s105
      %p109 = pneg %p103
      %p110 = scmp.eq.s32.totalorder %s12, 1
      %p111 = por %p109, %p110
      %p112 = scmp.ne.s32.totalorder %s104, %s107
      %p113 = scmp.eq.s32.totalorder %s12, 0
      %p114 = por %p112, %p113
      %p115 = scmp.ne.s32.totalorder %s104, %s107
      %p116 = scmp.eq.s32.totalorder %s17, 1
      %p117 = por %p115, %p116
      %p118 = scmp.ne.s32.totalorder %s107, %s108
      %p119 = scmp.eq.s32.totalorder %s17, 0
      %p120 = por %p118, %p119
      %p121 = scmp.ne.s32.totalorder %s107, %s108
      %p122 = scmp.eq.s32.totalorder %s18, 1
      %p123 = por %p121, %p122
      %p125 = scmp.ne.s32.totalorder %s108, %s124
      %p126 = scmp.eq.s32.totalorder %s18, 0
      %p127 = por %p125, %p126
      %p128 = scmp.le.s32.totalorder 1, %s12
      %p129 = scmp.lt.s32.totalorder %s12, 3
      %p130 = pnand %p128, %p129
      %p131 = pneg %p130
      // Predicated region
      $region9: #{tpu_custom_call.1} parent=5 // pred_check
        _
      $region10: #{tpu_custom_call.1} parent=5 // pred_check_branch
        %133 = sbr.rel (%p130) target = $region12
      $region11: #{tpu_custom_call.1} parent=5 // pred_region
        %s134 = ssub.s32 %s12, 1
        // Predicated region
        $region13: #{tpu_custom_call.1} parent=11 // pred_check
          %p135 = pneg %p50
        $region14: #{tpu_custom_call.1} parent=11 // pred_check_branch
          %137 = sbr.rel (%p135) target = $region16
        $region15: #{tpu_custom_call.1} parent=11 // pred_region
          %p138 = scmp.lt.s32.totalorder %s21, 1
          %s139 = scalar_select %p138, %s21, 1
          %s140 = smul.addr %s139, 48
          %s141 = smul.addr %s140, 8
          %s142 = scalar_lea.vmem %s0, %s141
        $region16: #{tpu_custom_call.1} parent=11 // pred_fallthru
          _
        // Predicated region
        $region17: #{tpu_custom_call.1} parent=11 // pred_check
          %p143 = pneg %p71
        $region18: #{tpu_custom_call.1} parent=11 // pred_check_branch
          %145 = sbr.rel (%p143) target = $region20
        $region19: #{tpu_custom_call.1} parent=11 // pred_region
          _
        $region20: #{tpu_custom_call.1} parent=11 // pred_fallthru
          _
        // Predicated region
        $region21: #{tpu_custom_call.1} parent=11 // pred_check
          %p146 = pneg %p92
        $region22: #{tpu_custom_call.1} parent=11 // pred_check_branch
          %148 = sbr.rel (%p146) target = $region24
        $region23: #{tpu_custom_call.1} parent=11 // pred_region
          _
        $region24: #{tpu_custom_call.1} parent=11 // pred_fallthru
          _
      $region12: #{tpu_custom_call.1} parent=5 // pred_fallthru
        _
      %p149 = scmp.lt.s32.totalorder %s12, 2
      // Predicated region
      $region25: #{tpu_custom_call.1} parent=5 // pred_check
        %p150 = pneg %p149
      $region26: #{tpu_custom_call.1} parent=5 // pred_check_branch
        %152 = sbr.rel (%p150) target = $region28
      $region27: #{tpu_custom_call.1} parent=5 // pred_region
        _
      $region28: #{tpu_custom_call.1} parent=5 // pred_fallthru
        _
      %p153 = scmp.le.s32.totalorder 1, %s12
      %p154 = scmp.lt.s32.totalorder %s12, 3
      %p155 = pnand %p153, %p154
      %p156 = pneg %p155
      // Predicated region
      $region29: #{tpu_custom_call.1} parent=5 // pred_check
        _
      $region30: #{tpu_custom_call.1} parent=5 // pred_check_branch
        %158 = sbr.rel (%p155) target = $region32
      $region31: #{tpu_custom_call.1} parent=5 // pred_region
        %s159 = ssub.s32 %s12, 1
        %p160 = scmp.lt.s32.totalorder %s21, 1
        %s161 = scalar_select %p160, %s21, 1
        %s162 = smul.addr %s161, 48
        %s163 = smul.addr %s162, 8
        %s164 = scalar_lea.vmem %s0, %s163
        %p165 = pneg %p50
        %p166 = pneg %p47
        %p167 = pneg %p71
        %p168 = pneg %p68
        %p169 = pneg %p92
        %p170 = pneg %p89
        %p171 = pneg %p120
        %p172 = pneg %p117
        %s173 = sand.u32 %s107, 1
        %s174 = scalar_lea.sflag [#allocation3], %s173
        %s175 = sand.u32 %s107, 1
        %s176 = smul.addr %s175, 16
        %s177 = scalar_lea.vmem [#allocation2], %s176
        %p178 = scmp.lt.s32.totalorder %s21, 1
        %s179 = scalar_select %p178, %s21, 1
        %s180 = smul.addr %s179, 48
        %s181 = smul.addr %s180, 8
        %s182 = scalar_lea.vmem %s0, %s181
        %s183 = smul.u32 2, %s22
        %s184 = smul.u32 %s22, 14
        %s185 = smul.u32 %s184, 24
        %s186 = scalar_lea.vmem %s182, %s185
        %v187 = vld [vmem:[%s186] sm:$0xff]
        %v188 = vld [vmem:[%s186 + $0x8] sm:$0xff]
        %v189 = vld [vmem:[%s186 + $0x18] sm:$0xff]
        %v190 = vld [vmem:[%s186 + $0x20] sm:$0xff]
        %v191 = vld [vmem:[%s186 + $0x30] sm:$0xff]
        %v192 = vld [vmem:[%s186 + $0x38] sm:$0xff]
        %v193 = vld [vmem:[%s186 + $0x48] sm:$0xff]
        %v194 = vld [vmem:[%s186 + $0x50] sm:$0xff]
        %v195 = vld [vmem:[%s186 + $0x60] sm:$0xff]
        %v196 = vld [vmem:[%s186 + $0x68] sm:$0xff]
        %v197 = vld [vmem:[%s186 + $0x78] sm:$0xff]
        %v198 = vld [vmem:[%s186 + $0x80] sm:$0xff]
        %v199 = vld [vmem:[%s186 + $0x90] sm:$0xff]
        %v200 = vld [vmem:[%s186 + $0x98] sm:$0xff]
        %v201 = vld [vmem:[%s186 + $0xa8] sm:$0xff]
        %v202 = vld [vmem:[%s186 + $0xb0] sm:$0xff]
        %v203 = vld [vmem:[%s186 + $0xc0] sm:$0xff]
        %v204 = vld [vmem:[%s186 + $0xc8] sm:$0xff]
        %v205 = vld [vmem:[%s186 + $0xd8] sm:$0xff]
        %v206 = vld [vmem:[%s186 + $0xe0] sm:$0xff]
        %v207 = vld [vmem:[%s186 + $0xf0] sm:$0xff]
        %v208 = vld [vmem:[%s186 + $0xf8] sm:$0xff]
        %v209 = vld [vmem:[%s186 + $0x108] sm:$0xff]
        %v210 = vld [vmem:[%s186 + $0x110] sm:$0xff]
        %v211 = vld [vmem:[%s186 + $0x120] sm:$0xff]
        %v212 = vld [vmem:[%s186 + $0x128] sm:$0xff]
        %v213 = vld [vmem:[%s186 + $0x138] sm:$0xff]
        %v214 = vld [vmem:[%s186 + $0x140] sm:$0xff]
        %v215 = vld [vmem:[%s1] sm:$0xff]
        %v216 = vld [vmem:[%s186 + $0x1] sm:$0xff]
        %v217 = vld [vmem:[%s186 + $0x9] sm:$0xff]
        %v218 = vld [vmem:[%s186 + $0x19] sm:$0xff]
        %v219 = vld [vmem:[%s186 + $0x21] sm:$0xff]
        %v220 = vld [vmem:[%s186 + $0x31] sm:$0xff]
        %v221 = vld [vmem:[%s186 + $0x39] sm:$0xff]
        %v222 = vld [vmem:[%s186 + $0x49] sm:$0xff]
        %v223 = vld [vmem:[%s186 + $0x51] sm:$0xff]
        %v224 = vld [vmem:[%s186 + $0x61] sm:$0xff]
        %v225 = vld [vmem:[%s186 + $0x69] sm:$0xff]
        %v226 = vld [vmem:[%s186 + $0x79] sm:$0xff]
        %v227 = vld [vmem:[%s186 + $0x81] sm:$0xff]
        %v228 = vld [vmem:[%s186 + $0x91] sm:$0xff]
        %v229 = vld [vmem:[%s186 + $0x99] sm:$0xff]
        %v230 = vld [vmem:[%s186 + $0xa9] sm:$0xff]
        %v231 = vld [vmem:[%s186 + $0xb1] sm:$0xff]
        %v232 = vld [vmem:[%s186 + $0xc1] sm:$0xff]
        %v233 = vld [vmem:[%s186 + $0xc9] sm:$0xff]
        %v234 = vld [vmem:[%s186 + $0xd9] sm:$0xff]
        %v235 = vld [vmem:[%s186 + $0xe1] sm:$0xff]
        %v236 = vld [vmem:[%s186 + $0xf1] sm:$0xff]
        %v237 = vld [vmem:[%s186 + $0xf9] sm:$0xff]
        %v238 = vld [vmem:[%s186 + $0x109] sm:$0xff]
        %v239 = vld [vmem:[%s186 + $0x111] sm:$0xff]
        %v240 = vld [vmem:[%s186 + $0x121] sm:$0xff]
        %v241 = vld [vmem:[%s186 + $0x129] sm:$0xff]
        %v242 = vld [vmem:[%s186 + $0x139] sm:$0xff]
        %v243 = vld [vmem:[%s186 + $0x141] sm:$0xff]
        %s244 = scalar_lea.vmem %s1, 8
        %v245 = vld [vmem:[%s244] sm:$0xff]
        %vm246 = vcmask 31744
        %v248 = vsel %vm246, %v245, 0
        %v251 = vsel %vm246, %v216, 0
        %v254 = vsel %vm246, %v217, 0
        %v257 = vsel %vm246, %v218, 0
        %v260 = vsel %vm246, %v219, 0
        %v263 = vsel %vm246, %v220, 0
        %v266 = vsel %vm246, %v221, 0
        %v269 = vsel %vm246, %v222, 0
        %v272 = vsel %vm246, %v223, 0
        %v275 = vsel %vm246, %v224, 0
        %v278 = vsel %vm246, %v225, 0
        %v281 = vsel %vm246, %v226, 0
        %v284 = vsel %vm246, %v227, 0
        %v287 = vsel %vm246, %v228, 0
        %v290 = vsel %vm246, %v229, 0
        %v293 = vsel %vm246, %v230, 0
        %v296 = vsel %vm246, %v231, 0
        %v299 = vsel %vm246, %v232, 0
        %v302 = vsel %vm246, %v233, 0
        %v305 = vsel %vm246, %v234, 0
        %v308 = vsel %vm246, %v235, 0
        %v311 = vsel %vm246, %v236, 0
        %v314 = vsel %vm246, %v237, 0
        %v317 = vsel %vm246, %v238, 0
        %v320 = vsel %vm246, %v239, 0
        %v323 = vsel %vm246, %v240, 0
        %v326 = vsel %vm246, %v241, 0
        %v329 = vsel %vm246, %v242, 0
        %v332 = vsel %vm246, %v243, 0
        %334 = vmatprep.subr.mxu0 0.0
        %335 = vmatpush1.xpose.msra.mxu0 %v251
        %336 = vmatprep.subr.mxu0 0.0
        %337 = vmatpush1.xpose.msra.mxu0 %v254
        %338 = vmatprep.subr.mxu0 0.0
        %339 = vmatpush1.xpose.msra.mxu0 %v257
        %340 = vmatprep.subr.mxu0 0.0
        %341 = vmatpush1.xpose.msra.mxu0 %v260
        %342 = vmatprep.subr.mxu0 0.0
        %343 = vmatpush1.xpose.msra.mxu0 %v263
        %344 = vmatprep.subr.mxu0 0.0
        %345 = vmatpush1.xpose.msra.mxu0 %v266
        %346 = vmatprep.subr.mxu0 0.0
        %347 = vmatpush1.xpose.msra.mxu0 %v269
        %348 = vmatprep.subr.mxu0 0.0
        %349 = vmatpush1.xpose.msra.mxu0 %v272
        %350 = vmatprep.subr.mxu0 0.0
        %351 = vmatpush1.xpose.msra.mxu0 %v275
        %352 = vmatprep.subr.mxu0 0.0
        %353 = vmatpush1.xpose.msra.mxu0 %v278
        %354 = vmatprep.subr.mxu0 0.0
        %355 = vmatpush1.xpose.msra.mxu0 %v281
        %356 = vmatprep.subr.mxu0 0.0
        %357 = vmatpush1.xpose.msra.mxu0 %v284
        %358 = vmatprep.subr.mxu0 0.0
        %359 = vmatpush1.xpose.msra.mxu0 %v287
        %360 = vmatprep.subr.mxu0 0.0
        %361 = vmatpush1.xpose.msra.mxu0 %v290
        %362 = vmatprep.subr.mxu0 0.0
        %363 = vmatpush1.xpose.msra.mxu0 %v293
        %364 = vmatprep.subr.mxu0 0.0
        %365 = vmatpush1.xpose.msra.mxu0 %v296
        %366 = vmatprep.subr.mxu0 0.0
        %367 = vmatpush1.xpose.msra.mxu0 %v299
        %368 = vmatprep.subr.mxu0 0.0
        %369 = vmatpush1.xpose.msra.mxu0 %v302
        %370 = vmatprep.subr.mxu0 0.0
        %371 = vmatpush1.xpose.msra.mxu0 %v305
        %372 = vmatprep.subr.mxu0 0.0
        %373 = vmatpush1.xpose.msra.mxu0 %v308
        %374 = vmatprep.subr.mxu0 0.0
        %375 = vmatpush1.xpose.msra.mxu0 %v311
        %376 = vmatprep.subr.mxu0 0.0
        %377 = vmatpush1.xpose.msra.mxu0 %v314
        %378 = vmatprep.subr.mxu0 0.0
        %379 = vmatpush1.xpose.msra.mxu0 %v317
        %380 = vmatprep.subr.mxu0 0.0
        %381 = vmatpush1.xpose.msra.mxu0 %v320
        %382 = vmatprep.subr.mxu0 0.0
        %383 = vmatpush1.xpose.msra.mxu0 %v323
        %384 = vmatprep.subr.mxu0 0.0
        %385 = vmatpush1.xpose.msra.mxu0 %v326
        %386 = vmatprep.subr.mxu0 0.0
        %387 = vmatpush1.xpose.msra.mxu0 %v329
        %388 = vmatprep.subr.mxu0 0.0
        %389 = vmatpush1.xpose.msra.mxu0 %v332
        %390 = vmatprep.subr.mxu0 0.0
        %391 = vmatpush1.xpose.msra.mxu0 0.0
        %392 = vmatprep.subr.mxu0 0.0
        %393 = vmatpush1.xpose.msra.mxu0 0.0
        %394 = vmatprep.subr.mxu0 0.0
        %395 = vmatpush1.xpose.msra.mxu0 0.0
        %396 = vmatprep.subr.mxu0 0.0
        %397 = vmatpush1.xpose.msra.mxu0 0.0
        %398 = vmatprep.mubr.f32.mxu0 0.0
        %399 = vmatmul.mubr.f32.gmra.mrb[0].mxu0 %v248
        %v400 = vpop.f32.mrb[0].mxu0
        %v401 = vadd.f32 0.0, %v400
        %v402 = vpop.f32.mrb[0].mxu0
        %v403 = vadd.f32 0.0, %v402
        %404 = vdwg.mxu0
        %v406 = vsel %vm246, %v215, 0
        %v409 = vsel %vm246, %v187, 0
        %v412 = vsel %vm246, %v188, 0
        %v415 = vsel %vm246, %v189, 0
        %v418 = vsel %vm246, %v190, 0
        %v421 = vsel %vm246, %v191, 0
        %v424 = vsel %vm246, %v192, 0
        %v427 = vsel %vm246, %v193, 0
        %v430 = vsel %vm246, %v194, 0
        %v433 = vsel %vm246, %v195, 0
        %v436 = vsel %vm246, %v196, 0
        %v439 = vsel %vm246, %v197, 0
        %v442 = vsel %vm246, %v198, 0
        %v445 = vsel %vm246, %v199, 0
        %v448 = vsel %vm246, %v200, 0
        %v451 = vsel %vm246, %v201, 0
        %v454 = vsel %vm246, %v202, 0
        %v457 = vsel %vm246, %v203, 0
        %v460 = vsel %vm246, %v204, 0
        %v463 = vsel %vm246, %v205, 0
        %v466 = vsel %vm246, %v206, 0
        %v469 = vsel %vm246, %v207, 0
        %v472 = vsel %vm246, %v208, 0
        %v475 = vsel %vm246, %v209, 0
        %v478 = vsel %vm246, %v210, 0
        %v481 = vsel %vm246, %v211, 0
        %v484 = vsel %vm246, %v212, 0
        %v487 = vsel %vm246, %v213, 0
        %v490 = vsel %vm246, %v214, 0
        %492 = vmatprep.subr.mxu0 0.0
        %493 = vmatpush1.xpose.msra.mxu0 %v409
        %494 = vmatprep.subr.mxu0 0.0
        %495 = vmatpush1.xpose.msra.mxu0 %v412
        %496 = vmatprep.subr.mxu0 0.0
        %497 = vmatpush1.xpose.msra.mxu0 %v415
        %498 = vmatprep.subr.mxu0 0.0
        %499 = vmatpush1.xpose.msra.mxu0 %v418
        %500 = vmatprep.subr.mxu0 0.0
        %501 = vmatpush1.xpose.msra.mxu0 %v421
        %502 = vmatprep.subr.mxu0 0.0
        %503 = vmatpush1.xpose.msra.mxu0 %v424
        %504 = vmatprep.subr.mxu0 0.0
        %505 = vmatpush1.xpose.msra.mxu0 %v427
        %506 = vmatprep.subr.mxu0 0.0
        %507 = vmatpush1.xpose.msra.mxu0 %v430
        %508 = vmatprep.subr.mxu0 0.0
        %509 = vmatpush1.xpose.msra.mxu0 %v433
        %510 = vmatprep.subr.mxu0 0.0
        %511 = vmatpush1.xpose.msra.mxu0 %v436
        %512 = vmatprep.subr.mxu0 0.0
        %513 = vmatpush1.xpose.msra.mxu0 %v439
        %514 = vmatprep.subr.mxu0 0.0
        %515 = vmatpush1.xpose.msra.mxu0 %v442
        %516 = vmatprep.subr.mxu0 0.0
        %517 = vmatpush1.xpose.msra.mxu0 %v445
        %518 = vmatprep.subr.mxu0 0.0
        %519 = vmatpush1.xpose.msra.mxu0 %v448
        %520 = vmatprep.subr.mxu0 0.0
        %521 = vmatpush1.xpose.msra.mxu0 %v451
        %522 = vmatprep.subr.mxu0 0.0
        %523 = vmatpush1.xpose.msra.mxu0 %v454
        %524 = vmatprep.subr.mxu0 0.0
        %525 = vmatpush1.xpose.msra.mxu0 %v457
        %526 = vmatprep.subr.mxu0 0.0
        %527 = vmatpush1.xpose.msra.mxu0 %v460
        %528 = vmatprep.subr.mxu0 0.0
        %529 = vmatpush1.xpose.msra.mxu0 %v463
        %530 = vmatprep.subr.mxu0 0.0
        %531 = vmatpush1.xpose.msra.mxu0 %v466
        %532 = vmatprep.subr.mxu0 0.0
        %533 = vmatpush1.xpose.msra.mxu0 %v469
        %534 = vmatprep.subr.mxu0 0.0
        %535 = vmatpush1.xpose.msra.mxu0 %v472
        %536 = vmatprep.subr.mxu0 0.0
        %537 = vmatpush1.xpose.msra.mxu0 %v475
        %538 = vmatprep.subr.mxu0 0.0
        %539 = vmatpush1.xpose.msra.mxu0 %v478
        %540 = vmatprep.subr.mxu0 0.0
        %541 = vmatpush1.xpose.msra.mxu0 %v481
        %542 = vmatprep.subr.mxu0 0.0
        %543 = vmatpush1.xpose.msra.mxu0 %v484
        %544 = vmatprep.subr.mxu0 0.0
        %545 = vmatpush1.xpose.msra.mxu0 %v487
        %546 = vmatprep.subr.mxu0 0.0
        %547 = vmatpush1.xpose.msra.mxu0 %v490
        %548 = vmatprep.subr.mxu0 0.0
        %549 = vmatpush1.xpose.msra.mxu0 0.0
        %550 = vmatprep.subr.mxu0 0.0
        %551 = vmatpush1.xpose.msra.mxu0 0.0
        %552 = vmatprep.subr.mxu0 0.0
        %553 = vmatpush1.xpose.msra.mxu0 0.0
        %554 = vmatprep.subr.mxu0 0.0
        %555 = vmatpush1.xpose.msra.mxu0 0.0
        %556 = vmatprep.mubr.f32.mxu0 0.0
        %557 = vmatmul.mubr.f32.gmra.mrb[0].mxu0 %v406
        %v558 = vpop.f32.mrb[0].mxu0
        %v559 = vadd.f32 %v401, %v558
        %v560 = vpop.f32.mrb[0].mxu0
        %v561 = vadd.f32 %v403, %v560
        %562 = vdwg.mxu0
        %v563 = vld [vmem:[%s186 + $0x2] sm:$0xff]
        %v564 = vld [vmem:[%s186 + $0xa] sm:$0xff]
        %v565 = vld [vmem:[%s186 + $0x1a] sm:$0xff]
        %v566 = vld [vmem:[%s186 + $0x22] sm:$0xff]
        %v567 = vld [vmem:[%s186 + $0x32] sm:$0xff]
        %v568 = vld [vmem:[%s186 + $0x3a] sm:$0xff]
        %v569 = vld [vmem:[%s186 + $0x4a] sm:$0xff]
        %v570 = vld [vmem:[%s186 + $0x52] sm:$0xff]
        %v571 = vld [vmem:[%s186 + $0x62] sm:$0xff]
        %v572 = vld [vmem:[%s186 + $0x6a] sm:$0xff]
        %v573 = vld [vmem:[%s186 + $0x7a] sm:$0xff]
        %v574 = vld [vmem:[%s186 + $0x82] sm:$0xff]
        %v575 = vld [vmem:[%s186 + $0x92] sm:$0xff]
        %v576 = vld [vmem:[%s186 + $0x9a] sm:$0xff]
        %v577 = vld [vmem:[%s186 + $0xaa] sm:$0xff]
        %v578 = vld [vmem:[%s186 + $0xb2] sm:$0xff]
        %v579 = vld [vmem:[%s186 + $0xc2] sm:$0xff]
        %v580 = vld [vmem:[%s186 + $0xca] sm:$0xff]
        %v581 = vld [vmem:[%s186 + $0xda] sm:$0xff]
        %v582 = vld [vmem:[%s186 + $0xe2] sm:$0xff]
        %v583 = vld [vmem:[%s186 + $0xf2] sm:$0xff]
        %v584 = vld [vmem:[%s186 + $0xfa] sm:$0xff]
        %v585 = vld [vmem:[%s186 + $0x10a] sm:$0xff]
        %v586 = vld [vmem:[%s186 + $0x112] sm:$0xff]
        %v587 = vld [vmem:[%s186 + $0x122] sm:$0xff]
        %v588 = vld [vmem:[%s186 + $0x12a] sm:$0xff]
        %v589 = vld [vmem:[%s186 + $0x13a] sm:$0xff]
        %v590 = vld [vmem:[%s186 + $0x142] sm:$0xff]
        %s591 = scalar_lea.vmem %s1, 16
        %v592 = vld [vmem:[%s591] sm:$0xff]
        %v594 = vsel %vm246, %v592, 0
        %v597 = vsel %vm246, %v563, 0
        %v600 = vsel %vm246, %v564, 0
        %v603 = vsel %vm246, %v565, 0
        %v606 = vsel %vm246, %v566, 0
        %v609 = vsel %vm246, %v567, 0
        %v612 = vsel %vm246, %v568, 0
        %v615 = vsel %vm246, %v569, 0
        %v618 = vsel %vm246, %v570, 0
        %v621 = vsel %vm246, %v571, 0
        %v624 = vsel %vm246, %v572, 0
        %v627 = vsel %vm246, %v573, 0
        %v630 = vsel %vm246, %v574, 0
        %v633 = vsel %vm246, %v575, 0
        %v636 = vsel %vm246, %v576, 0
        %v639 = vsel %vm246, %v577, 0
        %v642 = vsel %vm246, %v578, 0
        %v645 = vsel %vm246, %v579, 0
        %v648 = vsel %vm246, %v580, 0
        %v651 = vsel %vm246, %v581, 0
        %v654 = vsel %vm246, %v582, 0
        %v657 = vsel %vm246, %v583, 0
        %v660 = vsel %vm246, %v584, 0
        %v663 = vsel %vm246, %v585, 0
        %v666 = vsel %vm246, %v586, 0
        %v669 = vsel %vm246, %v587, 0
        %v672 = vsel %vm246, %v588, 0
        %v675 = vsel %vm246, %v589, 0
        %v678 = vsel %vm246, %v590, 0
        %680 = vmatprep.subr.mxu0 0.0
        %681 = vmatpush1.xpose.msra.mxu0 %v597
        %682 = vmatprep.subr.mxu0 0.0
        %683 = vmatpush1.xpose.msra.mxu0 %v600
        %684 = vmatprep.subr.mxu0 0.0
        %685 = vmatpush1.xpose.msra.mxu0 %v603
        %686 = vmatprep.subr.mxu0 0.0
        %687 = vmatpush1.xpose.msra.mxu0 %v606
        %688 = vmatprep.subr.mxu0 0.0
        %689 = vmatpush1.xpose.msra.mxu0 %v609
        %690 = vmatprep.subr.mxu0 0.0
        %691 = vmatpush1.xpose.msra.mxu0 %v612
        %692 = vmatprep.subr.mxu0 0.0
        %693 = vmatpush1.xpose.msra.mxu0 %v615
        %694 = vmatprep.subr.mxu0 0.0
        %695 = vmatpush1.xpose.msra.mxu0 %v618
        %696 = vmatprep.subr.mxu0 0.0
        %697 = vmatpush1.xpose.msra.mxu0 %v621
        %698 = vmatprep.subr.mxu0 0.0
        %699 = vmatpush1.xpose.msra.mxu0 %v624
        %700 = vmatprep.subr.mxu0 0.0
        %701 = vmatpush1.xpose.msra.mxu0 %v627
        %702 = vmatprep.subr.mxu0 0.0
        %703 = vmatpush1.xpose.msra.mxu0 %v630
        %704 = vmatprep.subr.mxu0 0.0
        %705 = vmatpush1.xpose.msra.mxu0 %v633
        %706 = vmatprep.subr.mxu0 0.0
        %707 = vmatpush1.xpose.msra.mxu0 %v636
        %708 = vmatprep.subr.mxu0 0.0
        %709 = vmatpush1.xpose.msra.mxu0 %v639
        %710 = vmatprep.subr.mxu0 0.0
        %711 = vmatpush1.xpose.msra.mxu0 %v642
        %712 = vmatprep.subr.mxu0 0.0
        %713 = vmatpush1.xpose.msra.mxu0 %v645
        %714 = vmatprep.subr.mxu0 0.0
        %715 = vmatpush1.xpose.msra.mxu0 %v648
        %716 = vmatprep.subr.mxu0 0.0
        %717 = vmatpush1.xpose.msra.mxu0 %v651
        %718 = vmatprep.subr.mxu0 0.0
        %719 = vmatpush1.xpose.msra.mxu0 %v654
        %720 = vmatprep.subr.mxu0 0.0
        %721 = vmatpush1.xpose.msra.mxu0 %v657
        %722 = vmatprep.subr.mxu0 0.0
        %723 = vmatpush1.xpose.msra.mxu0 %v660
        %724 = vmatprep.subr.mxu0 0.0
        %725 = vmatpush1.xpose.msra.mxu0 %v663
        %726 = vmatprep.subr.mxu0 0.0
        %727 = vmatpush1.xpose.msra.mxu0 %v666
        %728 = vmatprep.subr.mxu0 0.0
        %729 = vmatpush1.xpose.msra.mxu0 %v669
        %730 = vmatprep.subr.mxu0 0.0
        %731 = vmatpush1.xpose.msra.mxu0 %v672
        %732 = vmatprep.subr.mxu0 0.0
        %733 = vmatpush1.xpose.msra.mxu0 %v675
        %734 = vmatprep.subr.mxu0 0.0
        %735 = vmatpush1.xpose.msra.mxu0 %v678
        %736 = vmatprep.subr.mxu0 0.0
        %737 = vmatpush1.xpose.msra.mxu0 0.0
        %738 = vmatprep.subr.mxu0 0.0
        %739 = vmatpush1.xpose.msra.mxu0 0.0
        %740 = vmatprep.subr.mxu0 0.0
        %741 = vmatpush1.xpose.msra.mxu0 0.0
        %742 = vmatprep.subr.mxu0 0.0
        %743 = vmatpush1.xpose.msra.mxu0 0.0
        %744 = vmatprep.mubr.f32.mxu0 0.0
        %745 = vmatmul.mubr.f32.gmra.mrb[0].mxu0 %v594
        %v746 = vpop.f32.mrb[0].mxu0
        %v747 = vadd.f32 0.0, %v746
        %v748 = vpop.f32.mrb[0].mxu0
        %v749 = vadd.f32 0.0, %v748
        %750 = vdwg.mxu0
        %v751 = vadd.f32 %v559, %v747
        %v752 = vadd.f32 %v561, %v749
        %s753 = sadd.s32 %s184, 1
        %s754 = smul.u32 %s753, 24
        %s755 = scalar_lea.vmem %s182, %s754
        %v756 = vld [vmem:[%s755] sm:$0xff]
        %v757 = vld [vmem:[%s755 + $0x8] sm:$0xff]
        %v758 = vld [vmem:[%s755 + $0x18] sm:$0xff]
        %v759 = vld [vmem:[%s755 + $0x20] sm:$0xff]
        %v760 = vld [vmem:[%s755 + $0x30] sm:$0xff]
        %v761 = vld [vmem:[%s755 + $0x38] sm:$0xff]
        %v762 = vld [vmem:[%s755 + $0x48] sm:$0xff]
        %v763 = vld [vmem:[%s755 + $0x50] sm:$0xff]
        %v764 = vld [vmem:[%s755 + $0x60] sm:$0xff]
        %v765 = vld [vmem:[%s755 + $0x68] sm:$0xff]
        %v766 = vld [vmem:[%s755 + $0x78] sm:$0xff]
        %v767 = vld [vmem:[%s755 + $0x80] sm:$0xff]
        %v768 = vld [vmem:[%s755 + $0x90] sm:$0xff]
        %v769 = vld [vmem:[%s755 + $0x98] sm:$0xff]
        %v770 = vld [vmem:[%s755 + $0xa8] sm:$0xff]
        %v771 = vld [vmem:[%s755 + $0xb0] sm:$0xff]
        %v772 = vld [vmem:[%s755 + $0xc0] sm:$0xff]
        %v773 = vld [vmem:[%s755 + $0xc8] sm:$0xff]
        %v774 = vld [vmem:[%s755 + $0xd8] sm:$0xff]
        %v775 = vld [vmem:[%s755 + $0xe0] sm:$0xff]
        %v776 = vld [vmem:[%s755 + $0xf0] sm:$0xff]
        %v777 = vld [vmem:[%s755 + $0xf8] sm:$0xff]
        %v778 = vld [vmem:[%s755 + $0x108] sm:$0xff]
        %v779 = vld [vmem:[%s755 + $0x110] sm:$0xff]
        %v780 = vld [vmem:[%s755 + $0x120] sm:$0xff]
        %v781 = vld [vmem:[%s755 + $0x128] sm:$0xff]
        %v782 = vld [vmem:[%s755 + $0x138] sm:$0xff]
        %v783 = vld [vmem:[%s755 + $0x140] sm:$0xff]
        %s784 = scalar_lea.vmem %s1, 24
        %v785 = vld [vmem:[%s784] sm:$0xff]
        %v787 = vsel %vm246, %v785, 0
        %v790 = vsel %vm246, %v756, 0
        %v793 = vsel %vm246, %v757, 0
        %v796 = vsel %vm246, %v758, 0
        %v799 = vsel %vm246, %v759, 0
        %v802 = vsel %vm246, %v760, 0
        %v805 = vsel %vm246, %v761, 0
        %v808 = vsel %vm246, %v762, 0
        %v811 = vsel %vm246, %v763, 0
        %v814 = vsel %vm246, %v764, 0
        %v817 = vsel %vm246, %v765, 0
        %v820 = vsel %vm246, %v766, 0
        %v823 = vsel %vm246, %v767, 0
        %v826 = vsel %vm246, %v768, 0
        %v829 = vsel %vm246, %v769, 0
        %v832 = vsel %vm246, %v770, 0
        %v835 = vsel %vm246, %v771, 0
        %v838 = vsel %vm246, %v772, 0
        %v841 = vsel %vm246, %v773, 0
        %v844 = vsel %vm246, %v774, 0
        %v847 = vsel %vm246, %v775, 0
        %v850 = vsel %vm246, %v776, 0
        %v853 = vsel %vm246, %v777, 0
        %v856 = vsel %vm246, %v778, 0
        %v859 = vsel %vm246, %v779, 0
        %v862 = vsel %vm246, %v780, 0
        %v865 = vsel %vm246, %v781, 0
        %v868 = vsel %vm246, %v782, 0
        %v871 = vsel %vm246, %v783, 0
        %873 = vmatprep.subr.mxu0 0.0
        %874 = vmatpush1.xpose.msra.mxu0 %v790
        %875 = vmatprep.subr.mxu0 0.0
        %876 = vmatpush1.xpose.msra.mxu0 %v793
        %877 = vmatprep.subr.mxu0 0.0
        %878 = vmatpush1.xpose.msra.mxu0 %v796
        %879 = vmatprep.subr.mxu0 0.0
        %880 = vmatpush1.xpose.msra.mxu0 %v799
        %881 = vmatprep.subr.mxu0 0.0
        %882 = vmatpush1.xpose.msra.mxu0 %v802
        %883 = vmatprep.subr.mxu0 0.0
        %884 = vmatpush1.xpose.msra.mxu0 %v805
        %885 = vmatprep.subr.mxu0 0.0
        %886 = vmatpush1.xpose.msra.mxu0 %v808
        %887 = vmatprep.subr.mxu0 0.0
        %888 = vmatpush1.xpose.msra.mxu0 %v811
        %889 = vmatprep.subr.mxu0 0.0
        %890 = vmatpush1.xpose.msra.mxu0 %v814
        %891 = vmatprep.subr.mxu0 0.0
        %892 = vmatpush1.xpose.msra.mxu0 %v817
        %893 = vmatprep.subr.mxu0 0.0
        %894 = vmatpush1.xpose.msra.mxu0 %v820
        %895 = vmatprep.subr.mxu0 0.0
        %896 = vmatpush1.xpose.msra.mxu0 %v823
        %897 = vmatprep.subr.mxu0 0.0
        %898 = vmatpush1.xpose.msra.mxu0 %v826
        %899 = vmatprep.subr.mxu0 0.0
        %900 = vmatpush1.xpose.msra.mxu0 %v829
        %901 = vmatprep.subr.mxu0 0.0
        %902 = vmatpush1.xpose.msra.mxu0 %v832
        %903 = vmatprep.subr.mxu0 0.0
        %904 = vmatpush1.xpose.msra.mxu0 %v835
        %905 = vmatprep.subr.mxu0 0.0
        %906 = vmatpush1.xpose.msra.mxu0 %v838
        %907 = vmatprep.subr.mxu0 0.0
        %908 = vmatpush1.xpose.msra.mxu0 %v841
        %909 = vmatprep.subr.mxu0 0.0
        %910 = vmatpush1.xpose.msra.mxu0 %v844
        %911 = vmatprep.subr.mxu0 0.0
        %912 = vmatpush1.xpose.msra.mxu0 %v847
        %913 = vmatprep.subr.mxu0 0.0
        %914 = vmatpush1.xpose.msra.mxu0 %v850
        %915 = vmatprep.subr.mxu0 0.0
        %916 = vmatpush1.xpose.msra.mxu0 %v853
        %917 = vmatprep.subr.mxu0 0.0
        %918 = vmatpush1.xpose.msra.mxu0 %v856
        %919 = vmatprep.subr.mxu0 0.0
        %920 = vmatpush1.xpose.msra.mxu0 %v859
        %921 = vmatprep.subr.mxu0 0.0
        %922 = vmatpush1.xpose.msra.mxu0 %v862
        %923 = vmatprep.subr.mxu0 0.0
        %924 = vmatpush1.xpose.msra.mxu0 %v865
        %925 = vmatprep.subr.mxu0 0.0
        %926 = vmatpush1.xpose.msra.mxu0 %v868
        %927 = vmatprep.subr.mxu0 0.0
        %928 = vmatpush1.xpose.msra.mxu0 %v871
        %929 = vmatprep.subr.mxu0 0.0
        %930 = vmatpush1.xpose.msra.mxu0 0.0
        %931 = vmatprep.subr.mxu0 0.0
        %932 = vmatpush1.xpose.msra.mxu0 0.0
        %933 = vmatprep.subr.mxu0 0.0
        %934 = vmatpush1.xpose.msra.mxu0 0.0
        %935 = vmatprep.subr.mxu0 0.0
        %936 = vmatpush1.xpose.msra.mxu0 0.0
        %937 = vmatprep.mubr.f32.mxu0 0.0
        %938 = vmatmul.mubr.f32.gmra.mrb[0].mxu0 %v787
        %v939 = vpop.f32.mrb[0].mxu0
        %v940 = vadd.f32 0.0, %v939
        %v941 = vpop.f32.mrb[0].mxu0
        %v942 = vadd.f32 0.0, %v941
        %943 = vdwg.mxu0
        %v944 = vadd.f32 %v751, %v940
        %v945 = vadd.f32 %v752, %v942
        %v946 = vld [vmem:[%s755 + $0x1] sm:$0xff]
        %v947 = vld [vmem:[%s755 + $0x9] sm:$0xff]
        %v948 = vld [vmem:[%s755 + $0x19] sm:$0xff]
        %v949 = vld [vmem:[%s755 + $0x21] sm:$0xff]
        %v950 = vld [vmem:[%s755 + $0x31] sm:$0xff]
        %v951 = vld [vmem:[%s755 + $0x39] sm:$0xff]
        %v952 = vld [vmem:[%s755 + $0x49] sm:$0xff]
        %v953 = vld [vmem:[%s755 + $0x51] sm:$0xff]
        %v954 = vld [vmem:[%s755 + $0x61] sm:$0xff]
        %v955 = vld [vmem:[%s755 + $0x69] sm:$0xff]
        %v956 = vld [vmem:[%s755 + $0x79] sm:$0xff]
        %v957 = vld [vmem:[%s755 + $0x81] sm:$0xff]
        %v958 = vld [vmem:[%s755 + $0x91] sm:$0xff]
        %v959 = vld [vmem:[%s755 + $0x99] sm:$0xff]
        %v960 = vld [vmem:[%s755 + $0xa9] sm:$0xff]
        %v961 = vld [vmem:[%s755 + $0xb1] sm:$0xff]
        %v962 = vld [vmem:[%s755 + $0xc1] sm:$0xff]
        %v963 = vld [vmem:[%s755 + $0xc9] sm:$0xff]
        %v964 = vld [vmem:[%s755 + $0xd9] sm:$0xff]
        %v965 = vld [vmem:[%s755 + $0xe1] sm:$0xff]
        %v966 = vld [vmem:[%s755 + $0xf1] sm:$0xff]
        %v967 = vld [vmem:[%s755 + $0xf9] sm:$0xff]
        %v968 = vld [vmem:[%s755 + $0x109] sm:$0xff]
        %v969 = vld [vmem:[%s755 + $0x111] sm:$0xff]
        %v970 = vld [vmem:[%s755 + $0x121] sm:$0xff]
        %v971 = vld [vmem:[%s755 + $0x129] sm:$0xff]
        %v972 = vld [vmem:[%s755 + $0x139] sm:$0xff]
        %v973 = vld [vmem:[%s755 + $0x141] sm:$0xff]
        %s974 = scalar_lea.vmem %s1, 32
        %v975 = vld [vmem:[%s974] sm:$0xff]
        %v977 = vsel %vm246, %v975, 0
        %v980 = vsel %vm246, %v946, 0
        %v983 = vsel %vm246, %v947, 0
        %v986 = vsel %vm246, %v948, 0
        %v989 = vsel %vm246, %v949, 0
        %v992 = vsel %vm246, %v950, 0
        %v995 = vsel %vm246, %v951, 0
        %v998 = vsel %vm246, %v952, 0
        %v1001 = vsel %vm246, %v953, 0
        %v1004 = vsel %vm246, %v954, 0
        %v1007 = vsel %vm246, %v955, 0
        %v1010 = vsel %vm246, %v956, 0
        %v1013 = vsel %vm246, %v957, 0
        %v1016 = vsel %vm246, %v958, 0
        %v1019 = vsel %vm246, %v959, 0
        %v1022 = vsel %vm246, %v960, 0
        %v1025 = vsel %vm246, %v961, 0
        %v1028 = vsel %vm246, %v962, 0
        %v1031 = vsel %vm246, %v963, 0
        %v1034 = vsel %vm246, %v964, 0
        %v1037 = vsel %vm246, %v965, 0
        %v1040 = vsel %vm246, %v966, 0
        %v1043 = vsel %vm246, %v967, 0
        %v1046 = vsel %vm246, %v968, 0
        %v1049 = vsel %vm246, %v969, 0
        %v1052 = vsel %vm246, %v970, 0
        %v1055 = vsel %vm246, %v971, 0
        %v1058 = vsel %vm246, %v972, 0
        %v1061 = vsel %vm246, %v973, 0
        %1063 = vmatprep.subr.mxu0 0.0
        %1064 = vmatpush1.xpose.msra.mxu0 %v980
        %1065 = vmatprep.subr.mxu0 0.0
        %1066 = vmatpush1.xpose.msra.mxu0 %v983
        %1067 = vmatprep.subr.mxu0 0.0
        %1068 = vmatpush1.xpose.msra.mxu0 %v986
        %1069 = vmatprep.subr.mxu0 0.0
        %1070 = vmatpush1.xpose.msra.mxu0 %v989
        %1071 = vmatprep.subr.mxu0 0.0
        %1072 = vmatpush1.xpose.msra.mxu0 %v992
        %1073 = vmatprep.subr.mxu0 0.0
        %1074 = vmatpush1.xpose.msra.mxu0 %v995
        %1075 = vmatprep.subr.mxu0 0.0
        %1076 = vmatpush1.xpose.msra.mxu0 %v998
        %1077 = vmatprep.subr.mxu0 0.0
        %1078 = vmatpush1.xpose.msra.mxu0 %v1001
        %1079 = vmatprep.subr.mxu0 0.0
        %1080 = vmatpush1.xpose.msra.mxu0 %v1004
        %1081 = vmatprep.subr.mxu0 0.0
        %1082 = vmatpush1.xpose.msra.mxu0 %v1007
        %1083 = vmatprep.subr.mxu0 0.0
        %1084 = vmatpush1.xpose.msra.mxu0 %v1010
        %1085 = vmatprep.subr.mxu0 0.0
        %1086 = vmatpush1.xpose.msra.mxu0 %v1013
        %1087 = vmatprep.subr.mxu0 0.0
        %1088 = vmatpush1.xpose.msra.mxu0 %v1016
        %1089 = vmatprep.subr.mxu0 0.0
        %1090 = vmatpush1.xpose.msra.mxu0 %v1019
        %1091 = vmatprep.subr.mxu0 0.0
        %1092 = vmatpush1.xpose.msra.mxu0 %v1022
        %1093 = vmatprep.subr.mxu0 0.0
        %1094 = vmatpush1.xpose.msra.mxu0 %v1025
        %1095 = vmatprep.subr.mxu0 0.0
        %1096 = vmatpush1.xpose.msra.mxu0 %v1028
        %1097 = vmatprep.subr.mxu0 0.0
        %1098 = vmatpush1.xpose.msra.mxu0 %v1031
        %1099 = vmatprep.subr.mxu0 0.0
        %1100 = vmatpush1.xpose.msra.mxu0 %v1034
        %1101 = vmatprep.subr.mxu0 0.0
        %1102 = vmatpush1.xpose.msra.mxu0 %v1037
        %1103 = vmatprep.subr.mxu0 0.0
        %1104 = vmatpush1.xpose.msra.mxu0 %v1040
        %1105 = vmatprep.subr.mxu0 0.0
        %1106 = vmatpush1.xpose.msra.mxu0 %v1043
        %1107 = vmatprep.subr.mxu0 0.0
        %1108 = vmatpush1.xpose.msra.mxu0 %v1046
        %1109 = vmatprep.subr.mxu0 0.0
        %1110 = vmatpush1.xpose.msra.mxu0 %v1049
        %1111 = vmatprep.subr.mxu0 0.0
        %1112 = vmatpush1.xpose.msra.mxu0 %v1052
        %1113 = vmatprep.subr.mxu0 0.0
        %1114 = vmatpush1.xpose.msra.mxu0 %v1055
        %1115 = vmatprep.subr.mxu0 0.0
        %1116 = vmatpush1.xpose.msra.mxu0 %v1058
        %1117 = vmatprep.subr.mxu0 0.0
        %1118 = vmatpush1.xpose.msra.mxu0 %v1061
        %1119 = vmatprep.subr.mxu0 0.0
        %1120 = vmatpush1.xpose.msra.mxu0 0.0
        %1121 = vmatprep.subr.mxu0 0.0
        %1122 = vmatpush1.xpose.msra.mxu0 0.0
        %1123 = vmatprep.subr.mxu0 0.0
        %1124 = vmatpush1.xpose.msra.mxu0 0.0
        %1125 = vmatprep.subr.mxu0 0.0
        %1126 = vmatpush1.xpose.msra.mxu0 0.0
        %1127 = vmatprep.mubr.f32.mxu0 0.0
        %1128 = vmatmul.mubr.f32.gmra.mrb[0].mxu0 %v977
        %v1129 = vpop.f32.mrb[0].mxu0
        %v1130 = vadd.f32 0.0, %v1129
        %v1131 = vpop.f32.mrb[0].mxu0
        %v1132 = vadd.f32 0.0, %v1131
        %1133 = vdwg.mxu0
        %v1134 = vadd.f32 %v944, %v1130
        %v1135 = vadd.f32 %v945, %v1132
        %v1136 = vld [vmem:[%s755 + $0x2] sm:$0xff]
        %v1137 = vld [vmem:[%s755 + $0xa] sm:$0xff]
        %v1138 = vld [vmem:[%s755 + $0x1a] sm:$0xff]
        %v1139 = vld [vmem:[%s755 + $0x22] sm:$0xff]
        %v1140 = vld [vmem:[%s755 + $0x32] sm:$0xff]
        %v1141 = vld [vmem:[%s755 + $0x3a] sm:$0xff]
        %v1142 = vld [vmem:[%s755 + $0x4a] sm:$0xff]
        %v1143 = vld [vmem:[%s755 + $0x52] sm:$0xff]
        %v1144 = vld [vmem:[%s755 + $0x62] sm:$0xff]
        %v1145 = vld [vmem:[%s755 + $0x6a] sm:$0xff]
        %v1146 = vld [vmem:[%s755 + $0x7a] sm:$0xff]
        %v1147 = vld [vmem:[%s755 + $0x82] sm:$0xff]
        %v1148 = vld [vmem:[%s755 + $0x92] sm:$0xff]
        %v1149 = vld [vmem:[%s755 + $0x9a] sm:$0xff]
        %v1150 = vld [vmem:[%s755 + $0xaa] sm:$0xff]
        %v1151 = vld [vmem:[%s755 + $0xb2] sm:$0xff]
        %v1152 = vld [vmem:[%s755 + $0xc2] sm:$0xff]
        %v1153 = vld [vmem:[%s755 + $0xca] sm:$0xff]
        %v1154 = vld [vmem:[%s755 + $0xda] sm:$0xff]
        %v1155 = vld [vmem:[%s755 + $0xe2] sm:$0xff]
        %v1156 = vld [vmem:[%s755 + $0xf2] sm:$0xff]
        %v1157 = vld [vmem:[%s755 + $0xfa] sm:$0xff]
        %v1158 = vld [vmem:[%s755 + $0x10a] sm:$0xff]
        %v1159 = vld [vmem:[%s755 + $0x112] sm:$0xff]
        %v1160 = vld [vmem:[%s755 + $0x122] sm:$0xff]
        %v1161 = vld [vmem:[%s755 + $0x12a] sm:$0xff]
        %v1162 = vld [vmem:[%s755 + $0x13a] sm:$0xff]
        %v1163 = vld [vmem:[%s755 + $0x142] sm:$0xff]
        %s1164 = scalar_lea.vmem %s1, 40
        %v1165 = vld [vmem:[%s1164] sm:$0xff]
        %v1167 = vsel %vm246, %v1165, 0
        %v1170 = vsel %vm246, %v1136, 0
        %v1173 = vsel %vm246, %v1137, 0
        %v1176 = vsel %vm246, %v1138, 0
        %v1179 = vsel %vm246, %v1139, 0
        %v1182 = vsel %vm246, %v1140, 0
        %v1185 = vsel %vm246, %v1141, 0
        %v1188 = vsel %vm246, %v1142, 0
        %v1191 = vsel %vm246, %v1143, 0
        %v1194 = vsel %vm246, %v1144, 0
        %v1197 = vsel %vm246, %v1145, 0
        %v1200 = vsel %vm246, %v1146, 0
        %v1203 = vsel %vm246, %v1147, 0
        %v1206 = vsel %vm246, %v1148, 0
        %v1209 = vsel %vm246, %v1149, 0
        %v1212 = vsel %vm246, %v1150, 0
        %v1215 = vsel %vm246, %v1151, 0
        %v1218 = vsel %vm246, %v1152, 0
        %v1221 = vsel %vm246, %v1153, 0
        %v1224 = vsel %vm246, %v1154, 0
        %v1227 = vsel %vm246, %v1155, 0
        %v1230 = vsel %vm246, %v1156, 0
        %v1233 = vsel %vm246, %v1157, 0
        %v1236 = vsel %vm246, %v1158, 0
        %v1239 = vsel %vm246, %v1159, 0
        %v1242 = vsel %vm246, %v1160, 0
        %v1245 = vsel %vm246, %v1161, 0
        %v1248 = vsel %vm246, %v1162, 0
        %v1251 = vsel %vm246, %v1163, 0
        %1253 = vmatprep.subr.mxu0 0.0
        %1254 = vmatpush1.xpose.msra.mxu0 %v1170
        %1255 = vmatprep.subr.mxu0 0.0
        %1256 = vmatpush1.xpose.msra.mxu0 %v1173
        %1257 = vmatprep.subr.mxu0 0.0
        %1258 = vmatpush1.xpose.msra.mxu0 %v1176
        %1259 = vmatprep.subr.mxu0 0.0
        %1260 = vmatpush1.xpose.msra.mxu0 %v1179
        %1261 = vmatprep.subr.mxu0 0.0
        %1262 = vmatpush1.xpose.msra.mxu0 %v1182
        %1263 = vmatprep.subr.mxu0 0.0
        %1264 = vmatpush1.xpose.msra.mxu0 %v1185
        %1265 = vmatprep.subr.mxu0 0.0
        %1266 = vmatpush1.xpose.msra.mxu0 %v1188
        %1267 = vmatprep.subr.mxu0 0.0
        %1268 = vmatpush1.xpose.msra.mxu0 %v1191
        %1269 = vmatprep.subr.mxu0 0.0
        %1270 = vmatpush1.xpose.msra.mxu0 %v1194
        %1271 = vmatprep.subr.mxu0 0.0
        %1272 = vmatpush1.xpose.msra.mxu0 %v1197
        %1273 = vmatprep.subr.mxu0 0.0
        %1274 = vmatpush1.xpose.msra.mxu0 %v1200
        %1275 = vmatprep.subr.mxu0 0.0
        %1276 = vmatpush1.xpose.msra.mxu0 %v1203
        %1277 = vmatprep.subr.mxu0 0.0
        %1278 = vmatpush1.xpose.msra.mxu0 %v1206
        %1279 = vmatprep.subr.mxu0 0.0
        %1280 = vmatpush1.xpose.msra.mxu0 %v1209
        %1281 = vmatprep.subr.mxu0 0.0
        %1282 = vmatpush1.xpose.msra.mxu0 %v1212
        %1283 = vmatprep.subr.mxu0 0.0
        %1284 = vmatpush1.xpose.msra.mxu0 %v1215
        %1285 = vmatprep.subr.mxu0 0.0
        %1286 = vmatpush1.xpose.msra.mxu0 %v1218
        %1287 = vmatprep.subr.mxu0 0.0
        %1288 = vmatpush1.xpose.msra.mxu0 %v1221
        %1289 = vmatprep.subr.mxu0 0.0
        %1290 = vmatpush1.xpose.msra.mxu0 %v1224
        %1291 = vmatprep.subr.mxu0 0.0
        %1292 = vmatpush1.xpose.msra.mxu0 %v1227
        %1293 = vmatprep.subr.mxu0 0.0
        %1294 = vmatpush1.xpose.msra.mxu0 %v1230
        %1295 = vmatprep.subr.mxu0 0.0
        %1296 = vmatpush1.xpose.msra.mxu0 %v1233
        %1297 = vmatprep.subr.mxu0 0.0
        %1298 = vmatpush1.xpose.msra.mxu0 %v1236
        %1299 = vmatprep.subr.mxu0 0.0
        %1300 = vmatpush1.xpose.msra.mxu0 %v1239
        %1301 = vmatprep.subr.mxu0 0.0
        %1302 = vmatpush1.xpose.msra.mxu0 %v1242
        %1303 = vmatprep.subr.mxu0 0.0
        %1304 = vmatpush1.xpose.msra.mxu0 %v1245
        %1305 = vmatprep.subr.mxu0 0.0
        %1306 = vmatpush1.xpose.msra.mxu0 %v1248
        %1307 = vmatprep.subr.mxu0 0.0
        %1308 = vmatpush1.xpose.msra.mxu0 %v1251
        %1309 = vmatprep.subr.mxu0 0.0
        %1310 = vmatpush1.xpose.msra.mxu0 0.0
        %1311 = vmatprep.subr.mxu0 0.0
        %1312 = vmatpush1.xpose.msra.mxu0 0.0
        %1313 = vmatprep.subr.mxu0 0.0
        %1314 = vmatpush1.xpose.msra.mxu0 0.0
        %1315 = vmatprep.subr.mxu0 0.0
        %1316 = vmatpush1.xpose.msra.mxu0 0.0
        %1317 = vmatprep.mubr.f32.mxu0 0.0
        %1318 = vmatmul.mubr.f32.gmra.mrb[0].mxu0 %v1167
        %v1319 = vpop.f32.mrb[0].mxu0
        %v1320 = vadd.f32 0.0, %v1319
        %v1321 = vpop.f32.mrb[0].mxu0
        %v1322 = vadd.f32 0.0, %v1321
        %1323 = vdwg.mxu0
        %v1324 = vadd.f32 %v1134, %v1320
        %v1325 = vadd.f32 %v1135, %v1322
        %s1326 = sadd.s32 %s184, 2
        %s1327 = smul.u32 %s1326, 24
        %s1328 = scalar_lea.vmem %s182, %s1327
        %v1329 = vld [vmem:[%s1328] sm:$0xff]
        %v1330 = vld [vmem:[%s1328 + $0x8] sm:$0xff]
        %v1331 = vld [vmem:[%s1328 + $0x18] sm:$0xff]
        %v1332 = vld [vmem:[%s1328 + $0x20] sm:$0xff]
        %v1333 = vld [vmem:[%s1328 + $0x30] sm:$0xff]
        %v1334 = vld [vmem:[%s1328 + $0x38] sm:$0xff]
        %v1335 = vld [vmem:[%s1328 + $0x48] sm:$0xff]
        %v1336 = vld [vmem:[%s1328 + $0x50] sm:$0xff]
        %v1337 = vld [vmem:[%s1328 + $0x60] sm:$0xff]
        %v1338 = vld [vmem:[%s1328 + $0x68] sm:$0xff]
        %v1339 = vld [vmem:[%s1328 + $0x78] sm:$0xff]
        %v1340 = vld [vmem:[%s1328 + $0x80] sm:$0xff]
        %v1341 = vld [vmem:[%s1328 + $0x90] sm:$0xff]
        %v1342 = vld [vmem:[%s1328 + $0x98] sm:$0xff]
        %v1343 = vld [vmem:[%s1328 + $0xa8] sm:$0xff]
        %v1344 = vld [vmem:[%s1328 + $0xb0] sm:$0xff]
        %v1345 = vld [vmem:[%s1328 + $0xc0] sm:$0xff]
        %v1346 = vld [vmem:[%s1328 + $0xc8] sm:$0xff]
        %v1347 = vld [vmem:[%s1328 + $0xd8] sm:$0xff]
        %v1348 = vld [vmem:[%s1328 + $0xe0] sm:$0xff]
        %v1349 = vld [vmem:[%s1328 + $0xf0] sm:$0xff]
        %v1350 = vld [vmem:[%s1328 + $0xf8] sm:$0xff]
        %v1351 = vld [vmem:[%s1328 + $0x108] sm:$0xff]
        %v1352 = vld [vmem:[%s1328 + $0x110] sm:$0xff]
        %v1353 = vld [vmem:[%s1328 + $0x120] sm:$0xff]
        %v1354 = vld [vmem:[%s1328 + $0x128] sm:$0xff]
        %v1355 = vld [vmem:[%s1328 + $0x138] sm:$0xff]
        %v1356 = vld [vmem:[%s1328 + $0x140] sm:$0xff]
        %s1357 = scalar_lea.vmem %s1, 48
        %v1358 = vld [vmem:[%s1357] sm:$0xff]
        %v1360 = vsel %vm246, %v1358, 0
        %v1363 = vsel %vm246, %v1329, 0
        %v1366 = vsel %vm246, %v1330, 0
        %v1369 = vsel %vm246, %v1331, 0
        %v1372 = vsel %vm246, %v1332, 0
        %v1375 = vsel %vm246, %v1333, 0
        %v1378 = vsel %vm246, %v1334, 0
        %v1381 = vsel %vm246, %v1335, 0
        %v1384 = vsel %vm246, %v1336, 0
        %v1387 = vsel %vm246, %v1337, 0
        %v1390 = vsel %vm246, %v1338, 0
        %v1393 = vsel %vm246, %v1339, 0
        %v1396 = vsel %vm246, %v1340, 0
        %v1399 = vsel %vm246, %v1341, 0
        %v1402 = vsel %vm246, %v1342, 0
        %v1405 = vsel %vm246, %v1343, 0
        %v1408 = vsel %vm246, %v1344, 0
        %v1411 = vsel %vm246, %v1345, 0
        %v1414 = vsel %vm246, %v1346, 0
        %v1417 = vsel %vm246, %v1347, 0
        %v1420 = vsel %vm246, %v1348, 0
        %v1423 = vsel %vm246, %v1349, 0
        %v1426 = vsel %vm246, %v1350, 0
        %v1429 = vsel %vm246, %v1351, 0
        %v1432 = vsel %vm246, %v1352, 0
        %v1435 = vsel %vm246, %v1353, 0
        %v1438 = vsel %vm246, %v1354, 0
        %v1441 = vsel %vm246, %v1355, 0
        %v1444 = vsel %vm246, %v1356, 0
        %1446 = vmatprep.subr.mxu0 0.0
        %1447 = vmatpush1.xpose.msra.mxu0 %v1363
        %1448 = vmatprep.subr.mxu0 0.0
        %1449 = vmatpush1.xpose.msra.mxu0 %v1366
        %1450 = vmatprep.subr.mxu0 0.0
        %1451 = vmatpush1.xpose.msra.mxu0 %v1369
        %1452 = vmatprep.subr.mxu0 0.0
        %1453 = vmatpush1.xpose.msra.mxu0 %v1372
        %1454 = vmatprep.subr.mxu0 0.0
        %1455 = vmatpush1.xpose.msra.mxu0 %v1375
        %1456 = vmatprep.subr.mxu0 0.0
        %1457 = vmatpush1.xpose.msra.mxu0 %v1378
        %1458 = vmatprep.subr.mxu0 0.0
        %1459 = vmatpush1.xpose.msra.mxu0 %v1381
        %1460 = vmatprep.subr.mxu0 0.0
        %1461 = vmatpush1.xpose.msra.mxu0 %v1384
        %1462 = vmatprep.subr.mxu0 0.0
        %1463 = vmatpush1.xpose.msra.mxu0 %v1387
        %1464 = vmatprep.subr.mxu0 0.0
        %1465 = vmatpush1.xpose.msra.mxu0 %v1390
        %1466 = vmatprep.subr.mxu0 0.0
        %1467 = vmatpush1.xpose.msra.mxu0 %v1393
        %1468 = vmatprep.subr.mxu0 0.0
        %1469 = vmatpush1.xpose.msra.mxu0 %v1396
        %1470 = vmatprep.subr.mxu0 0.0
        %1471 = vmatpush1.xpose.msra.mxu0 %v1399
        %1472 = vmatprep.subr.mxu0 0.0
        %1473 = vmatpush1.xpose.msra.mxu0 %v1402
        %1474 = vmatprep.subr.mxu0 0.0
        %1475 = vmatpush1.xpose.msra.mxu0 %v1405
        %1476 = vmatprep.subr.mxu0 0.0
        %1477 = vmatpush1.xpose.msra.mxu0 %v1408
        %1478 = vmatprep.subr.mxu0 0.0
        %1479 = vmatpush1.xpose.msra.mxu0 %v1411
        %1480 = vmatprep.subr.mxu0 0.0
        %1481 = vmatpush1.xpose.msra.mxu0 %v1414
        %1482 = vmatprep.subr.mxu0 0.0
        %1483 = vmatpush1.xpose.msra.mxu0 %v1417
        %1484 = vmatprep.subr.mxu0 0.0
        %1485 = vmatpush1.xpose.msra.mxu0 %v1420
        %1486 = vmatprep.subr.mxu0 0.0
        %1487 = vmatpush1.xpose.msra.mxu0 %v1423
        %1488 = vmatprep.subr.mxu0 0.0
        %1489 = vmatpush1.xpose.msra.mxu0 %v1426
        %1490 = vmatprep.subr.mxu0 0.0
        %1491 = vmatpush1.xpose.msra.mxu0 %v1429
        %1492 = vmatprep.subr.mxu0 0.0
        %1493 = vmatpush1.xpose.msra.mxu0 %v1432
        %1494 = vmatprep.subr.mxu0 0.0
        %1495 = vmatpush1.xpose.msra.mxu0 %v1435
        %1496 = vmatprep.subr.mxu0 0.0
        %1497 = vmatpush1.xpose.msra.mxu0 %v1438
        %1498 = vmatprep.subr.mxu0 0.0
        %1499 = vmatpush1.xpose.msra.mxu0 %v1441
        %1500 = vmatprep.subr.mxu0 0.0
        %1501 = vmatpush1.xpose.msra.mxu0 %v1444
        %1502 = vmatprep.subr.mxu0 0.0
        %1503 = vmatpush1.xpose.msra.mxu0 0.0
        %1504 = vmatprep.subr.mxu0 0.0
        %1505 = vmatpush1.xpose.msra.mxu0 0.0
        %1506 = vmatprep.subr.mxu0 0.0
        %1507 = vmatpush1.xpose.msra.mxu0 0.0
        %1508 = vmatprep.subr.mxu0 0.0
        %1509 = vmatpush1.xpose.msra.mxu0 0.0
        %1510 = vmatprep.mubr.f32.mxu0 0.0
        %1511 = vmatmul.mubr.f32.gmra.mrb[0].mxu0 %v1360
        %v1512 = vpop.f32.mrb[0].mxu0
        %v1513 = vadd.f32 0.0, %v1512
        %v1514 = vpop.f32.mrb[0].mxu0
        %v1515 = vadd.f32 0.0, %v1514
        %1516 = vdwg.mxu0
        %v1517 = vadd.f32 %v1324, %v1513
        %v1518 = vadd.f32 %v1325, %v1515
        %v1519 = vld [vmem:[%s1328 + $0x1] sm:$0xff]
        %v1520 = vld [vmem:[%s1328 + $0x9] sm:$0xff]
        %v1521 = vld [vmem:[%s1328 + $0x19] sm:$0xff]
        %v1522 = vld [vmem:[%s1328 + $0x21] sm:$0xff]
        %v1523 = vld [vmem:[%s1328 + $0x31] sm:$0xff]
        %v1524 = vld [vmem:[%s1328 + $0x39] sm:$0xff]
        %v1525 = vld [vmem:[%s1328 + $0x49] sm:$0xff]
        %v1526 = vld [vmem:[%s1328 + $0x51] sm:$0xff]
        %v1527 = vld [vmem:[%s1328 + $0x61] sm:$0xff]
        %v1528 = vld [vmem:[%s1328 + $0x69] sm:$0xff]
        %v1529 = vld [vmem:[%s1328 + $0x79] sm:$0xff]
        %v1530 = vld [vmem:[%s1328 + $0x81] sm:$0xff]
        %v1531 = vld [vmem:[%s1328 + $0x91] sm:$0xff]
        %v1532 = vld [vmem:[%s1328 + $0x99] sm:$0xff]
        %v1533 = vld [vmem:[%s1328 + $0xa9] sm:$0xff]
        %v1534 = vld [vmem:[%s1328 + $0xb1] sm:$0xff]
        %v1535 = vld [vmem:[%s1328 + $0xc1] sm:$0xff]
        %v1536 = vld [vmem:[%s1328 + $0xc9] sm:$0xff]
        %v1537 = vld [vmem:[%s1328 + $0xd9] sm:$0xff]
        %v1538 = vld [vmem:[%s1328 + $0xe1] sm:$0xff]
        %v1539 = vld [vmem:[%s1328 + $0xf1] sm:$0xff]
        %v1540 = vld [vmem:[%s1328 + $0xf9] sm:$0xff]
        %v1541 = vld [vmem:[%s1328 + $0x109] sm:$0xff]
        %v1542 = vld [vmem:[%s1328 + $0x111] sm:$0xff]
        %v1543 = vld [vmem:[%s1328 + $0x121] sm:$0xff]
        %v1544 = vld [vmem:[%s1328 + $0x129] sm:$0xff]
        %v1545 = vld [vmem:[%s1328 + $0x139] sm:$0xff]
        %v1546 = vld [vmem:[%s1328 + $0x141] sm:$0xff]
        %s1547 = scalar_lea.vmem %s1, 56
        %v1548 = vld [vmem:[%s1547] sm:$0xff]
        %v1550 = vsel %vm246, %v1548, 0
        %v1553 = vsel %vm246, %v1519, 0
        %v1556 = vsel %vm246, %v1520, 0
        %v1559 = vsel %vm246, %v1521, 0
        %v1562 = vsel %vm246, %v1522, 0
        %v1565 = vsel %vm246, %v1523, 0
        %v1568 = vsel %vm246, %v1524, 0
        %v1571 = vsel %vm246, %v1525, 0
        %v1574 = vsel %vm246, %v1526, 0
        %v1577 = vsel %vm246, %v1527, 0
        %v1580 = vsel %vm246, %v1528, 0
        %v1583 = vsel %vm246, %v1529, 0
        %v1586 = vsel %vm246, %v1530, 0
        %v1589 = vsel %vm246, %v1531, 0
        %v1592 = vsel %vm246, %v1532, 0
        %v1595 = vsel %vm246, %v1533, 0
        %v1598 = vsel %vm246, %v1534, 0
        %v1601 = vsel %vm246, %v1535, 0
        %v1604 = vsel %vm246, %v1536, 0
        %v1607 = vsel %vm246, %v1537, 0
        %v1610 = vsel %vm246, %v1538, 0
        %v1613 = vsel %vm246, %v1539, 0
        %v1616 = vsel %vm246, %v1540, 0
        %v1619 = vsel %vm246, %v1541, 0
        %v1622 = vsel %vm246, %v1542, 0
        %v1625 = vsel %vm246, %v1543, 0
        %v1628 = vsel %vm246, %v1544, 0
        %v1631 = vsel %vm246, %v1545, 0
        %v1634 = vsel %vm246, %v1546, 0
        %1636 = vmatprep.subr.mxu0 0.0
        %1637 = vmatpush1.xpose.msra.mxu0 %v1553
        %1638 = vmatprep.subr.mxu0 0.0
        %1639 = vmatpush1.xpose.msra.mxu0 %v1556
        %1640 = vmatprep.subr.mxu0 0.0
        %1641 = vmatpush1.xpose.msra.mxu0 %v1559
        %1642 = vmatprep.subr.mxu0 0.0
        %1643 = vmatpush1.xpose.msra.mxu0 %v1562
        %1644 = vmatprep.subr.mxu0 0.0
        %1645 = vmatpush1.xpose.msra.mxu0 %v1565
        %1646 = vmatprep.subr.mxu0 0.0
        %1647 = vmatpush1.xpose.msra.mxu0 %v1568
        %1648 = vmatprep.subr.mxu0 0.0
        %1649 = vmatpush1.xpose.msra.mxu0 %v1571
        %1650 = vmatprep.subr.mxu0 0.0
        %1651 = vmatpush1.xpose.msra.mxu0 %v1574
        %1652 = vmatprep.subr.mxu0 0.0
        %1653 = vmatpush1.xpose.msra.mxu0 %v1577
        %1654 = vmatprep.subr.mxu0 0.0
        %1655 = vmatpush1.xpose.msra.mxu0 %v1580
        %1656 = vmatprep.subr.mxu0 0.0
        %1657 = vmatpush1.xpose.msra.mxu0 %v1583
        %1658 = vmatprep.subr.mxu0 0.0
        %1659 = vmatpush1.xpose.msra.mxu0 %v1586
        %1660 = vmatprep.subr.mxu0 0.0
        %1661 = vmatpush1.xpose.msra.mxu0 %v1589
        %1662 = vmatprep.subr.mxu0 0.0
        %1663 = vmatpush1.xpose.msra.mxu0 %v1592
        %1664 = vmatprep.subr.mxu0 0.0
        %1665 = vmatpush1.xpose.msra.mxu0 %v1595
        %1666 = vmatprep.subr.mxu0 0.0
        %1667 = vmatpush1.xpose.msra.mxu0 %v1598
        %1668 = vmatprep.subr.mxu0 0.0
        %1669 = vmatpush1.xpose.msra.mxu0 %v1601
        %1670 = vmatprep.subr.mxu0 0.0
        %1671 = vmatpush1.xpose.msra.mxu0 %v1604
        %1672 = vmatprep.subr.mxu0 0.0
        %1673 = vmatpush1.xpose.msra.mxu0 %v1607
        %1674 = vmatprep.subr.mxu0 0.0
        %1675 = vmatpush1.xpose.msra.mxu0 %v1610
        %1676 = vmatprep.subr.mxu0 0.0
        %1677 = vmatpush1.xpose.msra.mxu0 %v1613
        %1678 = vmatprep.subr.mxu0 0.0
        %1679 = vmatpush1.xpose.msra.mxu0 %v1616
        %1680 = vmatprep.subr.mxu0 0.0
        %1681 = vmatpush1.xpose.msra.mxu0 %v1619
        %1682 = vmatprep.subr.mxu0 0.0
        %1683 = vmatpush1.xpose.msra.mxu0 %v1622
        %1684 = vmatprep.subr.mxu0 0.0
        %1685 = vmatpush1.xpose.msra.mxu0 %v1625
        %1686 = vmatprep.subr.mxu0 0.0
        %1687 = vmatpush1.xpose.msra.mxu0 %v1628
        %1688 = vmatprep.subr.mxu0 0.0
        %1689 = vmatpush1.xpose.msra.mxu0 %v1631
        %1690 = vmatprep.subr.mxu0 0.0
        %1691 = vmatpush1.xpose.msra.mxu0 %v1634
        %1692 = vmatprep.subr.mxu0 0.0
        %1693 = vmatpush1.xpose.msra.mxu0 0.0
        %1694 = vmatprep.subr.mxu0 0.0
        %1695 = vmatpush1.xpose.msra.mxu0 0.0
        %1696 = vmatprep.subr.mxu0 0.0
        %1697 = vmatpush1.xpose.msra.mxu0 0.0
        %1698 = vmatprep.subr.mxu0 0.0
        %1699 = vmatpush1.xpose.msra.mxu0 0.0
        %1700 = vmatprep.mubr.f32.mxu0 0.0
        %1701 = vmatmul.mubr.f32.gmra.mrb[0].mxu0 %v1550
        %v1702 = vpop.f32.mrb[0].mxu0
        %v1703 = vadd.f32 0.0, %v1702
        %v1704 = vpop.f32.mrb[0].mxu0
        %v1705 = vadd.f32 0.0, %v1704
        %1706 = vdwg.mxu0
        %v1707 = vadd.f32 %v1517, %v1703
        %v1708 = vadd.f32 %v1518, %v1705
        %v1709 = vld [vmem:[%s1328 + $0x2] sm:$0xff]
        %v1710 = vld [vmem:[%s1328 + $0xa] sm:$0xff]
        %v1711 = vld [vmem:[%s1328 + $0x1a] sm:$0xff]
        %v1712 = vld [vmem:[%s1328 + $0x22] sm:$0xff]
        %v1713 = vld [vmem:[%s1328 + $0x32] sm:$0xff]
        %v1714 = vld [vmem:[%s1328 + $0x3a] sm:$0xff]
        %v1715 = vld [vmem:[%s1328 + $0x4a] sm:$0xff]
        %v1716 = vld [vmem:[%s1328 + $0x52] sm:$0xff]
        %v1717 = vld [vmem:[%s1328 + $0x62] sm:$0xff]
        %v1718 = vld [vmem:[%s1328 + $0x6a] sm:$0xff]
        %v1719 = vld [vmem:[%s1328 + $0x7a] sm:$0xff]
        %v1720 = vld [vmem:[%s1328 + $0x82] sm:$0xff]
        %v1721 = vld [vmem:[%s1328 + $0x92] sm:$0xff]
        %v1722 = vld [vmem:[%s1328 + $0x9a] sm:$0xff]
        %v1723 = vld [vmem:[%s1328 + $0xaa] sm:$0xff]
        %v1724 = vld [vmem:[%s1328 + $0xb2] sm:$0xff]
        %v1725 = vld [vmem:[%s1328 + $0xc2] sm:$0xff]
        %v1726 = vld [vmem:[%s1328 + $0xca] sm:$0xff]
        %v1727 = vld [vmem:[%s1328 + $0xda] sm:$0xff]
        %v1728 = vld [vmem:[%s1328 + $0xe2] sm:$0xff]
        %v1729 = vld [vmem:[%s1328 + $0xf2] sm:$0xff]
        %v1730 = vld [vmem:[%s1328 + $0xfa] sm:$0xff]
        %v1731 = vld [vmem:[%s1328 + $0x10a] sm:$0xff]
        %v1732 = vld [vmem:[%s1328 + $0x112] sm:$0xff]
        %v1733 = vld [vmem:[%s1328 + $0x122] sm:$0xff]
        %v1734 = vld [vmem:[%s1328 + $0x12a] sm:$0xff]
        %v1735 = vld [vmem:[%s1328 + $0x13a] sm:$0xff]
        %v1736 = vld [vmem:[%s1328 + $0x142] sm:$0xff]
        %s1737 = scalar_lea.vmem %s1, 64
        %v1738 = vld [vmem:[%s1737] sm:$0xff]
        %v1740 = vsel %vm246, %v1738, 0
        %v1743 = vsel %vm246, %v1709, 0
        %v1746 = vsel %vm246, %v1710, 0
        %v1749 = vsel %vm246, %v1711, 0
        %v1752 = vsel %vm246, %v1712, 0
        %v1755 = vsel %vm246, %v1713, 0
        %v1758 = vsel %vm246, %v1714, 0
        %v1761 = vsel %vm246, %v1715, 0
        %v1764 = vsel %vm246, %v1716, 0
        %v1767 = vsel %vm246, %v1717, 0
        %v1770 = vsel %vm246, %v1718, 0
        %v1773 = vsel %vm246, %v1719, 0
        %v1776 = vsel %vm246, %v1720, 0
        %v1779 = vsel %vm246, %v1721, 0
        %v1782 = vsel %vm246, %v1722, 0
        %v1785 = vsel %vm246, %v1723, 0
        %v1788 = vsel %vm246, %v1724, 0
        %v1791 = vsel %vm246, %v1725, 0
        %v1794 = vsel %vm246, %v1726, 0
        %v1797 = vsel %vm246, %v1727, 0
        %v1800 = vsel %vm246, %v1728, 0
        %v1803 = vsel %vm246, %v1729, 0
        %v1806 = vsel %vm246, %v1730, 0
        %v1809 = vsel %vm246, %v1731, 0
        %v1812 = vsel %vm246, %v1732, 0
        %v1815 = vsel %vm246, %v1733, 0
        %v1818 = vsel %vm246, %v1734, 0
        %v1821 = vsel %vm246, %v1735, 0
        %v1824 = vsel %vm246, %v1736, 0
        %1826 = vmatprep.subr.mxu0 0.0
        %1827 = vmatpush1.xpose.msra.mxu0 %v1743
        %1828 = vmatprep.subr.mxu0 0.0
        %1829 = vmatpush1.xpose.msra.mxu0 %v1746
        %1830 = vmatprep.subr.mxu0 0.0
        %1831 = vmatpush1.xpose.msra.mxu0 %v1749
        %1832 = vmatprep.subr.mxu0 0.0
        %1833 = vmatpush1.xpose.msra.mxu0 %v1752
        %1834 = vmatprep.subr.mxu0 0.0
        %1835 = vmatpush1.xpose.msra.mxu0 %v1755
        %1836 = vmatprep.subr.mxu0 0.0
        %1837 = vmatpush1.xpose.msra.mxu0 %v1758
        %1838 = vmatprep.subr.mxu0 0.0
        %1839 = vmatpush1.xpose.msra.mxu0 %v1761
        %1840 = vmatprep.subr.mxu0 0.0
        %1841 = vmatpush1.xpose.msra.mxu0 %v1764
        %1842 = vmatprep.subr.mxu0 0.0
        %1843 = vmatpush1.xpose.msra.mxu0 %v1767
        %1844 = vmatprep.subr.mxu0 0.0
        %1845 = vmatpush1.xpose.msra.mxu0 %v1770
        %1846 = vmatprep.subr.mxu0 0.0
        %1847 = vmatpush1.xpose.msra.mxu0 %v1773
        %1848 = vmatprep.subr.mxu0 0.0
        %1849 = vmatpush1.xpose.msra.mxu0 %v1776
        %1850 = vmatprep.subr.mxu0 0.0
        %1851 = vmatpush1.xpose.msra.mxu0 %v1779
        %1852 = vmatprep.subr.mxu0 0.0
        %1853 = vmatpush1.xpose.msra.mxu0 %v1782
        %1854 = vmatprep.subr.mxu0 0.0
        %1855 = vmatpush1.xpose.msra.mxu0 %v1785
        %1856 = vmatprep.subr.mxu0 0.0
        %1857 = vmatpush1.xpose.msra.mxu0 %v1788
        %1858 = vmatprep.subr.mxu0 0.0
        %1859 = vmatpush1.xpose.msra.mxu0 %v1791
        %1860 = vmatprep.subr.mxu0 0.0
        %1861 = vmatpush1.xpose.msra.mxu0 %v1794
        %1862 = vmatprep.subr.mxu0 0.0
        %1863 = vmatpush1.xpose.msra.mxu0 %v1797
        %1864 = vmatprep.subr.mxu0 0.0
        %1865 = vmatpush1.xpose.msra.mxu0 %v1800
        %1866 = vmatprep.subr.mxu0 0.0
        %1867 = vmatpush1.xpose.msra.mxu0 %v1803
        %1868 = vmatprep.subr.mxu0 0.0
        %1869 = vmatpush1.xpose.msra.mxu0 %v1806
        %1870 = vmatprep.subr.mxu0 0.0
        %1871 = vmatpush1.xpose.msra.mxu0 %v1809
        %1872 = vmatprep.subr.mxu0 0.0
        %1873 = vmatpush1.xpose.msra.mxu0 %v1812
        %1874 = vmatprep.subr.mxu0 0.0
        %1875 = vmatpush1.xpose.msra.mxu0 %v1815
        %1876 = vmatprep.subr.mxu0 0.0
        %1877 = vmatpush1.xpose.msra.mxu0 %v1818
        %1878 = vmatprep.subr.mxu0 0.0
        %1879 = vmatpush1.xpose.msra.mxu0 %v1821
        %1880 = vmatprep.subr.mxu0 0.0
        %1881 = vmatpush1.xpose.msra.mxu0 %v1824
        %1882 = vmatprep.subr.mxu0 0.0
        %1883 = vmatpush1.xpose.msra.mxu0 0.0
        %1884 = vmatprep.subr.mxu0 0.0
        %1885 = vmatpush1.xpose.msra.mxu0 0.0
        %1886 = vmatprep.subr.mxu0 0.0
        %1887 = vmatpush1.xpose.msra.mxu0 0.0
        %1888 = vmatprep.subr.mxu0 0.0
        %1889 = vmatpush1.xpose.msra.mxu0 0.0
        %1890 = vmatprep.mubr.f32.mxu0 0.0
        %1891 = vmatmul.mubr.f32.gmra.mrb[0].mxu0 %v1740
        %v1892 = vpop.f32.mrb[0].mxu0
        %v1893 = vadd.f32 0.0, %v1892
        %v1894 = vpop.f32.mrb[0].mxu0
        %v1895 = vadd.f32 0.0, %v1894
        %1896 = vdwg.mxu0
        %v1897 = vadd.f32 %v1707, %v1893
        %v1898 = vadd.f32 %v1708, %v1895
        %v1899 = vld [vmem:[%s2] sm:$0xff]
        %1901 = vset.pattern.permute.xlu0 0
        %1902 = vperm.xlu0 %1901, %v1899
        %v1903 = vpop.permute.xlu0 %1902
        %v1905 = vadd.f32 %v1897, %v1903
        %v1906 = vadd.f32 %v1898, %v1903
        %1907 = vst [vmem:[%s177] sm:$0xff] %v1905
        %vm1908 = vcmask 785408
        %1909 = vst.msk [vmem:[%s177 + $0x8] sm:$0xff] %vm1908, %v1906
        %s1910 = sand.u32 %s107, 1
        %s1911 = scalar_lea.sflag [#allocation3], %s1910
        %s1912 = sand.u32 %s107, 1
        %s1913 = smul.addr %s1912, 16
        %s1914 = scalar_lea.vmem [#allocation2], %s1913
        // Predicated region
        $region33: #{tpu_custom_call.1} parent=31 // pred_check
          %p1915 = pneg %p117
        $region34: #{tpu_custom_call.1} parent=31 // pred_check_branch
          %1917 = sbr.rel (%p1915) target = $region36
        $region35: #{tpu_custom_call.1} parent=31 // pred_region
          %s1918 = smul.u32 2, %s22
          %s1920 = ssub.s32 256, 256
          %1921 = vsyncadd %s1911, %s1920
          %s1922 = smul.addr %s21, 2
          %s1923 = sadd.s32 %s1918, %s1922
          %s1924 = smul.addr %s1923, 128
          %s1925 = scalar_lea.hbm %s3, %s1924
          %s1927 = sshll.u32 %s1914, 4
          %s1928 = int_to_ptr.vmem [resolvable:$true] %s1927
          %1930 = dma.vmem_to_hbm [thread:$0]  %s1928, 256, %s1925, %s1911
        $region36: #{tpu_custom_call.1} parent=31 // pred_fallthru
          _
      $region32: #{tpu_custom_call.1} parent=5 // pred_fallthru
        _
      %p1931 = scmp.le.s32.totalorder 2, %s12
      // Predicated region
      $region37: #{tpu_custom_call.1} parent=5 // pred_check
        %p1932 = pneg %p1931
      $region38: #{tpu_custom_call.1} parent=5 // pred_check_branch
        %1934 = sbr.rel (%p1932) target = $region40
      $region39: #{tpu_custom_call.1} parent=5 // pred_region
        %s1935 = ssub.s32 %s12, 2
        // Predicated region
        $region41: #{tpu_custom_call.1} parent=39 // pred_check
          %p1936 = pneg %p123
        $region42: #{tpu_custom_call.1} parent=39 // pred_check_branch
          %1938 = sbr.rel (%p1936) target = $region44
        $region43: #{tpu_custom_call.1} parent=39 // pred_region
          %s1939 = sand.u32 %s108, 1
          %s1940 = scalar_lea.sflag [#allocation3], %s1939
          %s1941 = sand.u32 %s108, 1
          %s1942 = smul.addr %s1941, 16
          %s1943 = scalar_lea.vmem [#allocation2], %s1942
          %1944 = dma.done %s1940, 256
        $region44: #{tpu_custom_call.1} parent=39 // pred_fallthru
          _
      $region40: #{tpu_custom_call.1} parent=5 // pred_fallthru
        _
    $region6: #{tpu_custom_call.1} parent=1 // loop_footer
      %s16 = sadd.s32 1, %s12
    $region7: #{tpu_custom_call.1} parent=1 // loop_footer_branch
      %11 = sbr.rel target = $region3
    $region8: #{tpu_custom_call.1} parent=1 // loop_exit
      _
    %1945 = vsyncpa [#allocation3], 1
    %s1946 = scalar_lea.sflag [#allocation3], 1
    %1947 = vsyncpa %s1946, 1

// kernel: tpu_custom_call.1
$region0: #{tpu_custom_call.1}
  #allocation0 [shape = 'u32[]', space=smem, size = 0x4, offset = 0x4, fixed_abs, tag = 'smem constant byte address 0x4 - core index']
  #allocation1 [shape = 'u32[144,128]{1,0:T(1,128)}', space=vmem, size = 0x12000, scoped, tag = 'internal scratch']
  %s0 = inlined_call_operand.vmem [shape: f32[2,16,18,4], index: 0, kind: input, shape index: {}]
  %s1 = inlined_call_operand.vmem [shape: f32[9,8,4], index: 1, kind: input, shape index: {}]
  %s2 = inlined_call_operand.vmem [shape: f32[8,1], index: 2, kind: input, shape index: {}]
  %s3 = inlined_call_operand.hbm [shape: f32[2,8,224], index: 3, kind: output, shape index: {}]
  %s4 = sld [smem:[#allocation0]]
  $region45: #{tpu_custom_call.1} parent=0
    _
  %s6 = ssub.s32 1, %s4
  %s7 = scalar_select 0, %s6, %s4
  $region1: #{tpu_custom_call.1} parent=0
    #allocation2 [shape = 'u8[16384]{0}', space=vmem, size = 0x4000, scoped, tag = 'output window, operand 0']
    #allocation3 [shape = 's32[2]{0}', space=sflag, size = 0x8, scoped, tag = 'scoped memory for tpu_custom_call.1']
    %8 = vsyncpa [#allocation3], 0
    %s9 = scalar_lea.sflag [#allocation3], 1
    %10 = vsyncpa %s9, 0
    loop: start=0, step=1, limit=4
    $region2: #{tpu_custom_call.1} parent=1 // loop_pre_header
      _
    $region3: #{tpu_custom_call.1} parent=1 // loop_header
      %s12 = sphi 0, %s16
      %p13 = scmp.ge.s32.totalorder %s12, 4
      %s19 = sphi 0, %s31
      %s20 = sphi 0, %s27
      %s21 = sphi 0, %s19
      %s22 = sphi 0, %s20
      %s23 = sphi 0, %s21
      %s24 = sphi 0, %s22
      %s34 = sphi 0, %s36
      %s37 = sphi 0, %s34
      %s38 = sphi 0, %s37
      %s54 = sphi 0, %s38
      %s58 = sphi 0, %s58
      %s60 = sphi 0, %s58
      %s61 = sphi 0, %s60
      %s75 = sphi 0, %s61
      %s79 = sphi 0, %s79
      %s81 = sphi 0, %s79
      %s82 = sphi 0, %s81
      %s96 = sphi 0, %s82
      %s104 = sphi 0, %s106
      %s107 = sphi 0, %s104
      %s108 = sphi 0, %s107
      %s124 = sphi 0, %s108
    $region4: #{tpu_custom_call.1} parent=1 // loop_header_branch
      %15 = sbr.rel (%p13) target = $region8
    $region5: #{tpu_custom_call.1} parent=1 // loop_body
      %s17 = ssub.s32 %s12, 1
      %s18 = ssub.s32 %s12, 2
      %s25 = sadd.s32 1, %s20
      %p26 = scmp.ge.s32.totalorder %s25, 1
      %s27 = scalar_select %p26, 0, %s25
      %s28 = sadd.s32 1, %s19
      %s29 = scalar_select %p26, %s28, %s19
      %p30 = scmp.ge.s32.totalorder %s29, 2
      %s31 = scalar_select %p30, 0, %s29
      %s32 = ssub.s32 %s19, %s31
      %p33 = scmp.eq.s32.totalorder %s32, 0
      %s35 = sadd.s32 %s34, 1
      %s36 = scalar_select %p33, %s34, %s35
      %p39 = pneg %p33
      %p40 = scmp.eq.s32.totalorder %s12, 1
      %p41 = por %p39, %p40
      %p42 = scmp.ne.s32.totalorder %s34, %s37
      %p43 = scmp.eq.s32.totalorder %s12, 0
      %p44 = por %p42, %p43
      %p45 = scmp.ne.s32.totalorder %s34, %s37
      %p46 = scmp.eq.s32.totalorder %s17, 1
      %p47 = por %p45, %p46
      %p48 = scmp.ne.s32.totalorder %s37, %s38
      %p49 = scmp.eq.s32.totalorder %s17, 0
      %p50 = por %p48, %p49
      %p51 = scmp.ne.s32.totalorder %s37, %s38
      %p52 = scmp.eq.s32.totalorder %s18, 1
      %p53 = por %p51, %p52
      %p55 = scmp.ne.s32.totalorder %s38, %s54
      %p56 = scmp.eq.s32.totalorder %s18, 0
      %p57 = por %p55, %p56
      %s59 = sadd.s32 %s58, 1
      %p62 = scmp.eq.s32.totalorder %s12, 1
      %p63 = scmp.ne.s32.totalorder %s58, %s60
      %p64 = scmp.eq.s32.totalorder %s12, 0
      %p65 = por %p63, %p64
      %p66 = scmp.ne.s32.totalorder %s58, %s60
      %p67 = scmp.eq.s32.totalorder %s17, 1
      %p68 = por %p66, %p67
      %p69 = scmp.ne.s32.totalorder %s60, %s61
      %p70 = scmp.eq.s32.totalorder %s17, 0
      %p71 = por %p69, %p70
      %p72 = scmp.ne.s32.totalorder %s60, %s61
      %p73 = scmp.eq.s32.totalorder %s18, 1
      %p74 = por %p72, %p73
      %p76 = scmp.ne.s32.totalorder %s61, %s75
      %p77 = scmp.eq.s32.totalorder %s18, 0
      %p78 = por %p76, %p77
      %s80 = sadd.s32 %s79, 1
      %p83 = scmp.eq.s32.totalorder %s12, 1
      %p84 = scmp.ne.s32.totalorder %s79, %s81
      %p85 = scmp.eq.s32.totalorder %s12, 0
      %p86 = por %p84, %p85
      %p87 = scmp.ne.s32.totalorder %s79, %s81
      %p88 = scmp.eq.s32.totalorder %s17, 1
      %p89 = por %p87, %p88
      %p90 = scmp.ne.s32.totalorder %s81, %s82
      %p91 = scmp.eq.s32.totalorder %s17, 0
      %p92 = por %p90, %p91
      %p93 = scmp.ne.s32.totalorder %s81, %s82
      %p94 = scmp.eq.s32.totalorder %s18, 1
      %p95 = por %p93, %p94
      %p97 = scmp.ne.s32.totalorder %s82, %s96
      %p98 = scmp.eq.s32.totalorder %s18, 0
      %p99 = por %p97, %p98
      %s100 = ssub.s32 %s19, %s31
      %s101 = ssub.s32 %s20, %s27
      %s102 = sor.u32 %s100, %s101
      %p103 = scmp.eq.s32.totalorder %s102, 0
      %s105 = sadd.s32 %s104, 1
      %s106 = scalar_select %p103, %s104, %s105
      %p109 = pneg %p103
      %p110 = scmp.eq.s32.totalorder %s12, 1
      %p111 = por %p109, %p110
      %p112 = scmp.ne.s32.totalorder %s104, %s107
      %p113 = scmp.eq.s32.totalorder %s12, 0
      %p114 = por %p112, %p113
      %p115 = scmp.ne.s32.totalorder %s104, %s107
      %p116 = scmp.eq.s32.totalorder %s17, 1
      %p117 = por %p115, %p116
      %p118 = scmp.ne.s32.totalorder %s107, %s108
      %p119 = scmp.eq.s32.totalorder %s17, 0
      %p120 = por %p118, %p119
      %p121 = scmp.ne.s32.totalorder %s107, %s108
      %p122 = scmp.eq.s32.totalorder %s18, 1
      %p123 = por %p121, %p122
      %p125 = scmp.ne.s32.totalorder %s108, %s124
      %p126 = scmp.eq.s32.totalorder %s18, 0
      %p127 = por %p125, %p126
      %p128 = scmp.le.s32.totalorder 1, %s12
      %p129 = scmp.lt.s32.totalorder %s12, 3
      %p130 = pnand %p128, %p129
      %p131 = pneg %p130
      // Predicated region
      $region9: #{tpu_custom_call.1} parent=5 // pred_check
        _
      $region10: #{tpu_custom_call.1} parent=5 // pred_check_branch
        %133 = sbr.rel (%p130) target = $region12
      $region11: #{tpu_custom_call.1} parent=5 // pred_region
        %s134 = ssub.s32 %s12, 1
        // Predicated region
        $region13: #{tpu_custom_call.1} parent=11 // pred_check
          %p135 = pneg %p71
        $region14: #{tpu_custom_call.1} parent=11 // pred_check_branch
          %137 = sbr.rel (%p135) target = $region16
        $region15: #{tpu_custom_call.1} parent=11 // pred_region
          _
        $region16: #{tpu_custom_call.1} parent=11 // pred_fallthru
          _
        // Predicated region
        $region17: #{tpu_custom_call.1} parent=11 // pred_check
          %p138 = pneg %p92
        $region18: #{tpu_custom_call.1} parent=11 // pred_check_branch
          %140 = sbr.rel (%p138) target = $region20
        $region19: #{tpu_custom_call.1} parent=11 // pred_region
          _
        $region20: #{tpu_custom_call.1} parent=11 // pred_fallthru
          _
      $region12: #{tpu_custom_call.1} parent=5 // pred_fallthru
        _
      %p141 = scmp.lt.s32.totalorder %s12, 2
      // Predicated region
      $region21: #{tpu_custom_call.1} parent=5 // pred_check
        %p142 = pneg %p141
      $region22: #{tpu_custom_call.1} parent=5 // pred_check_branch
        %144 = sbr.rel (%p142) target = $region24
      $region23: #{tpu_custom_call.1} parent=5 // pred_region
        // Predicated region
        $region25: #{tpu_custom_call.1} parent=23 // pred_check
          %p145 = pneg %p44
        $region26: #{tpu_custom_call.1} parent=23 // pred_check_branch
          %147 = sbr.rel (%p145) target = $region28
        $region27: #{tpu_custom_call.1} parent=23 // pred_region
          %p148 = scmp.lt.s32.totalorder %s19, 1
          %s149 = scalar_select %p148, %s19, 1
          %s150 = smul.addr %s149, 48
          %s151 = smul.addr %s150, 8
          %s152 = scalar_lea.vmem %s0, %s151
        $region28: #{tpu_custom_call.1} parent=23 // pred_fallthru
          _
      $region24: #{tpu_custom_call.1} parent=5 // pred_fallthru
        _
      %p153 = scmp.le.s32.totalorder 1, %s12
      %p154 = scmp.lt.s32.totalorder %s12, 3
      %p155 = pnand %p153, %p154
      %p156 = pneg %p155
      // Predicated region
      $region29: #{tpu_custom_call.1} parent=5 // pred_check
        _
      $region30: #{tpu_custom_call.1} parent=5 // pred_check_branch
        %158 = sbr.rel (%p155) target = $region32
      $region31: #{tpu_custom_call.1} parent=5 // pred_region
        %s159 = ssub.s32 %s12, 1
        %p160 = scmp.lt.s32.totalorder %s21, 1
        %s161 = scalar_select %p160, %s21, 1
        %s162 = smul.addr %s161, 48
        %s163 = smul.addr %s162, 8
        %s164 = scalar_lea.vmem %s0, %s163
        %p165 = pneg %p50
        %p166 = pneg %p47
        %p167 = pneg %p71
        %p168 = pneg %p68
        %p169 = pneg %p92
        %p170 = pneg %p89
        %p171 = pneg %p120
        %p172 = pneg %p117
        %s173 = sand.u32 %s107, 1
        %s174 = scalar_lea.sflag [#allocation3], %s173
        %s175 = sand.u32 %s107, 1
        %s176 = smul.addr %s175, 16
        %s177 = scalar_lea.vmem [#allocation2], %s176
        %p178 = scmp.lt.s32.totalorder %s21, 1
        %s179 = scalar_select %p178, %s21, 1
        %s180 = smul.addr %s179, 48
        %s181 = smul.addr %s180, 8
        %s182 = scalar_lea.vmem %s0, %s181
        %s183 = smul.u32 2, %s22
        %s184 = smul.u32 %s22, 14
        %s185 = smul.u32 %s184, 24
        %s186 = scalar_lea.vmem %s182, %s185
        %v187 = vld [vmem:[%s186] sm:$0xff]
        %v188 = vld [vmem:[%s186 + $0x8] sm:$0xff]
        %v189 = vld [vmem:[%s186 + $0x18] sm:$0xff]
        %v190 = vld [vmem:[%s186 + $0x20] sm:$0xff]
        %v191 = vld [vmem:[%s186 + $0x30] sm:$0xff]
        %v192 = vld [vmem:[%s186 + $0x38] sm:$0xff]
        %v193 = vld [vmem:[%s186 + $0x48] sm:$0xff]
        %v194 = vld [vmem:[%s186 + $0x50] sm:$0xff]
        %v195 = vld [vmem:[%s186 + $0x60] sm:$0xff]
        %v196 = vld [vmem:[%s186 + $0x68] sm:$0xff]
        %v197 = vld [vmem:[%s186 + $0x78] sm:$0xff]
        %v198 = vld [vmem:[%s186 + $0x80] sm:$0xff]
        %v199 = vld [vmem:[%s186 + $0x90] sm:$0xff]
        %v200 = vld [vmem:[%s186 + $0x98] sm:$0xff]
        %v201 = vld [vmem:[%s186 + $0xa8] sm:$0xff]
        %v202 = vld [vmem:[%s186 + $0xb0] sm:$0xff]
        %v203 = vld [vmem:[%s186 + $0xc0] sm:$0xff]
        %v204 = vld [vmem:[%s186 + $0xc8] sm:$0xff]
        %v205 = vld [vmem:[%s186 + $0xd8] sm:$0xff]
        %v206 = vld [vmem:[%s186 + $0xe0] sm:$0xff]
        %v207 = vld [vmem:[%s186 + $0xf0] sm:$0xff]
        %v208 = vld [vmem:[%s186 + $0xf8] sm:$0xff]
        %v209 = vld [vmem:[%s186 + $0x108] sm:$0xff]
        %v210 = vld [vmem:[%s186 + $0x110] sm:$0xff]
        %v211 = vld [vmem:[%s186 + $0x120] sm:$0xff]
        %v212 = vld [vmem:[%s186 + $0x128] sm:$0xff]
        %v213 = vld [vmem:[%s186 + $0x138] sm:$0xff]
        %v214 = vld [vmem:[%s186 + $0x140] sm:$0xff]
        %v215 = vld [vmem:[%s1] sm:$0xff]
        %v216 = vld [vmem:[%s186 + $0x1] sm:$0xff]
        %v217 = vld [vmem:[%s186 + $0x9] sm:$0xff]
        %v218 = vld [vmem:[%s186 + $0x19] sm:$0xff]
        %v219 = vld [vmem:[%s186 + $0x21] sm:$0xff]
        %v220 = vld [vmem:[%s186 + $0x31] sm:$0xff]
        %v221 = vld [vmem:[%s186 + $0x39] sm:$0xff]
        %v222 = vld [vmem:[%s186 + $0x49] sm:$0xff]
        %v223 = vld [vmem:[%s186 + $0x51] sm:$0xff]
        %v224 = vld [vmem:[%s186 + $0x61] sm:$0xff]
        %v225 = vld [vmem:[%s186 + $0x69] sm:$0xff]
        %v226 = vld [vmem:[%s186 + $0x79] sm:$0xff]
        %v227 = vld [vmem:[%s186 + $0x81] sm:$0xff]
        %v228 = vld [vmem:[%s186 + $0x91] sm:$0xff]
        %v229 = vld [vmem:[%s186 + $0x99] sm:$0xff]
        %v230 = vld [vmem:[%s186 + $0xa9] sm:$0xff]
        %v231 = vld [vmem:[%s186 + $0xb1] sm:$0xff]
        %v232 = vld [vmem:[%s186 + $0xc1] sm:$0xff]
        %v233 = vld [vmem:[%s186 + $0xc9] sm:$0xff]
        %v234 = vld [vmem:[%s186 + $0xd9] sm:$0xff]
        %v235 = vld [vmem:[%s186 + $0xe1] sm:$0xff]
        %v236 = vld [vmem:[%s186 + $0xf1] sm:$0xff]
        %v237 = vld [vmem:[%s186 + $0xf9] sm:$0xff]
        %v238 = vld [vmem:[%s186 + $0x109] sm:$0xff]
        %v239 = vld [vmem:[%s186 + $0x111] sm:$0xff]
        %v240 = vld [vmem:[%s186 + $0x121] sm:$0xff]
        %v241 = vld [vmem:[%s186 + $0x129] sm:$0xff]
        %v242 = vld [vmem:[%s186 + $0x139] sm:$0xff]
        %v243 = vld [vmem:[%s186 + $0x141] sm:$0xff]
        %s244 = scalar_lea.vmem %s1, 8
        %v245 = vld [vmem:[%s244] sm:$0xff]
        %vm246 = vcmask 31744
        %v248 = vsel %vm246, %v245, 0
        %v251 = vsel %vm246, %v216, 0
        %v254 = vsel %vm246, %v217, 0
        %v257 = vsel %vm246, %v218, 0
        %v260 = vsel %vm246, %v219, 0
        %v263 = vsel %vm246, %v220, 0
        %v266 = vsel %vm246, %v221, 0
        %v269 = vsel %vm246, %v222, 0
        %v272 = vsel %vm246, %v223, 0
        %v275 = vsel %vm246, %v224, 0
        %v278 = vsel %vm246, %v225, 0
        %v281 = vsel %vm246, %v226, 0
        %v284 = vsel %vm246, %v227, 0
        %v287 = vsel %vm246, %v228, 0
        %v290 = vsel %vm246, %v229, 0
        %v293 = vsel %vm246, %v230, 0
        %v296 = vsel %vm246, %v231, 0
        %v299 = vsel %vm246, %v232, 0
        %v302 = vsel %vm246, %v233, 0
        %v305 = vsel %vm246, %v234, 0
        %v308 = vsel %vm246, %v235, 0
        %v311 = vsel %vm246, %v236, 0
        %v314 = vsel %vm246, %v237, 0
        %v317 = vsel %vm246, %v238, 0
        %v320 = vsel %vm246, %v239, 0
        %v323 = vsel %vm246, %v240, 0
        %v326 = vsel %vm246, %v241, 0
        %v329 = vsel %vm246, %v242, 0
        %v332 = vsel %vm246, %v243, 0
        %334 = vmatprep.subr.mxu0 0.0
        %335 = vmatpush1.xpose.msra.mxu0 %v251
        %336 = vmatprep.subr.mxu0 0.0
        %337 = vmatpush1.xpose.msra.mxu0 %v254
        %338 = vmatprep.subr.mxu0 0.0
        %339 = vmatpush1.xpose.msra.mxu0 %v257
        %340 = vmatprep.subr.mxu0 0.0
        %341 = vmatpush1.xpose.msra.mxu0 %v260
        %342 = vmatprep.subr.mxu0 0.0
        %343 = vmatpush1.xpose.msra.mxu0 %v263
        %344 = vmatprep.subr.mxu0 0.0
        %345 = vmatpush1.xpose.msra.mxu0 %v266
        %346 = vmatprep.subr.mxu0 0.0
        %347 = vmatpush1.xpose.msra.mxu0 %v269
        %348 = vmatprep.subr.mxu0 0.0
        %349 = vmatpush1.xpose.msra.mxu0 %v272
        %350 = vmatprep.subr.mxu0 0.0
        %351 = vmatpush1.xpose.msra.mxu0 %v275
        %352 = vmatprep.subr.mxu0 0.0
        %353 = vmatpush1.xpose.msra.mxu0 %v278
        %354 = vmatprep.subr.mxu0 0.0
        %355 = vmatpush1.xpose.msra.mxu0 %v281
        %356 = vmatprep.subr.mxu0 0.0
        %357 = vmatpush1.xpose.msra.mxu0 %v284
        %358 = vmatprep.subr.mxu0 0.0
        %359 = vmatpush1.xpose.msra.mxu0 %v287
        %360 = vmatprep.subr.mxu0 0.0
        %361 = vmatpush1.xpose.msra.mxu0 %v290
        %362 = vmatprep.subr.mxu0 0.0
        %363 = vmatpush1.xpose.msra.mxu0 %v293
        %364 = vmatprep.subr.mxu0 0.0
        %365 = vmatpush1.xpose.msra.mxu0 %v296
        %366 = vmatprep.subr.mxu0 0.0
        %367 = vmatpush1.xpose.msra.mxu0 %v299
        %368 = vmatprep.subr.mxu0 0.0
        %369 = vmatpush1.xpose.msra.mxu0 %v302
        %370 = vmatprep.subr.mxu0 0.0
        %371 = vmatpush1.xpose.msra.mxu0 %v305
        %372 = vmatprep.subr.mxu0 0.0
        %373 = vmatpush1.xpose.msra.mxu0 %v308
        %374 = vmatprep.subr.mxu0 0.0
        %375 = vmatpush1.xpose.msra.mxu0 %v311
        %376 = vmatprep.subr.mxu0 0.0
        %377 = vmatpush1.xpose.msra.mxu0 %v314
        %378 = vmatprep.subr.mxu0 0.0
        %379 = vmatpush1.xpose.msra.mxu0 %v317
        %380 = vmatprep.subr.mxu0 0.0
        %381 = vmatpush1.xpose.msra.mxu0 %v320
        %382 = vmatprep.subr.mxu0 0.0
        %383 = vmatpush1.xpose.msra.mxu0 %v323
        %384 = vmatprep.subr.mxu0 0.0
        %385 = vmatpush1.xpose.msra.mxu0 %v326
        %386 = vmatprep.subr.mxu0 0.0
        %387 = vmatpush1.xpose.msra.mxu0 %v329
        %388 = vmatprep.subr.mxu0 0.0
        %389 = vmatpush1.xpose.msra.mxu0 %v332
        %390 = vmatprep.subr.mxu0 0.0
        %391 = vmatpush1.xpose.msra.mxu0 0.0
        %392 = vmatprep.subr.mxu0 0.0
        %393 = vmatpush1.xpose.msra.mxu0 0.0
        %394 = vmatprep.subr.mxu0 0.0
        %395 = vmatpush1.xpose.msra.mxu0 0.0
        %396 = vmatprep.subr.mxu0 0.0
        %397 = vmatpush1.xpose.msra.mxu0 0.0
        %398 = vmatprep.mubr.f32.mxu0 0.0
        %399 = vmatmul.mubr.f32.gmra.mrb[0].mxu0 %v248
        %v400 = vpop.f32.mrb[0].mxu0
        %v401 = vadd.f32 0.0, %v400
        %v402 = vpop.f32.mrb[0].mxu0
        %v403 = vadd.f32 0.0, %v402
        %404 = vdwg.mxu0
        %v406 = vsel %vm246, %v215, 0
        %v409 = vsel %vm246, %v187, 0
        %v412 = vsel %vm246, %v188, 0
        %v415 = vsel %vm246, %v189, 0
        %v418 = vsel %vm246, %v190, 0
        %v421 = vsel %vm246, %v191, 0
        %v424 = vsel %vm246, %v192, 0
        %v427 = vsel %vm246, %v193, 0
        %v430 = vsel %vm246, %v194, 0
        %v433 = vsel %vm246, %v195, 0
        %v436 = vsel %vm246, %v196, 0
        %v439 = vsel %vm246, %v197, 0
        %v442 = vsel %vm246, %v198, 0
        %v445 = vsel %vm246, %v199, 0
        %v448 = vsel %vm246, %v200, 0
        %v451 = vsel %vm246, %v201, 0
        %v454 = vsel %vm246, %v202, 0
        %v457 = vsel %vm246, %v203, 0
        %v460 = vsel %vm246, %v204, 0
        %v463 = vsel %vm246, %v205, 0
        %v466 = vsel %vm246, %v206, 0
        %v469 = vsel %vm246, %v207, 0
        %v472 = vsel %vm246, %v208, 0
        %v475 = vsel %vm246, %v209, 0
        %v478 = vsel %vm246, %v210, 0
        %v481 = vsel %vm246, %v211, 0
        %v484 = vsel %vm246, %v212, 0
        %v487 = vsel %vm246, %v213, 0
        %v490 = vsel %vm246, %v214, 0
        %492 = vmatprep.subr.mxu0 0.0
        %493 = vmatpush1.xpose.msra.mxu0 %v409
        %494 = vmatprep.subr.mxu0 0.0
        %495 = vmatpush1.xpose.msra.mxu0 %v412
        %496 = vmatprep.subr.mxu0 0.0
        %497 = vmatpush1.xpose.msra.mxu0 %v415
        %498 = vmatprep.subr.mxu0 0.0
        %499 = vmatpush1.xpose.msra.mxu0 %v418
        %500 = vmatprep.subr.mxu0 0.0
        %501 = vmatpush1.xpose.msra.mxu0 %v421
        %502 = vmatprep.subr.mxu0 0.0
        %503 = vmatpush1.xpose.msra.mxu0 %v424
        %504 = vmatprep.subr.mxu0 0.0
        %505 = vmatpush1.xpose.msra.mxu0 %v427
        %506 = vmatprep.subr.mxu0 0.0
        %507 = vmatpush1.xpose.msra.mxu0 %v430
        %508 = vmatprep.subr.mxu0 0.0
        %509 = vmatpush1.xpose.msra.mxu0 %v433
        %510 = vmatprep.subr.mxu0 0.0
        %511 = vmatpush1.xpose.msra.mxu0 %v436
        %512 = vmatprep.subr.mxu0 0.0
        %513 = vmatpush1.xpose.msra.mxu0 %v439
        %514 = vmatprep.subr.mxu0 0.0
        %515 = vmatpush1.xpose.msra.mxu0 %v442
        %516 = vmatprep.subr.mxu0 0.0
        %517 = vmatpush1.xpose.msra.mxu0 %v445
        %518 = vmatprep.subr.mxu0 0.0
        %519 = vmatpush1.xpose.msra.mxu0 %v448
        %520 = vmatprep.subr.mxu0 0.0
        %521 = vmatpush1.xpose.msra.mxu0 %v451
        %522 = vmatprep.subr.mxu0 0.0
        %523 = vmatpush1.xpose.msra.mxu0 %v454
        %524 = vmatprep.subr.mxu0 0.0
        %525 = vmatpush1.xpose.msra.mxu0 %v457
        %526 = vmatprep.subr.mxu0 0.0
        %527 = vmatpush1.xpose.msra.mxu0 %v460
        %528 = vmatprep.subr.mxu0 0.0
        %529 = vmatpush1.xpose.msra.mxu0 %v463
        %530 = vmatprep.subr.mxu0 0.0
        %531 = vmatpush1.xpose.msra.mxu0 %v466
        %532 = vmatprep.subr.mxu0 0.0
        %533 = vmatpush1.xpose.msra.mxu0 %v469
        %534 = vmatprep.subr.mxu0 0.0
        %535 = vmatpush1.xpose.msra.mxu0 %v472
        %536 = vmatprep.subr.mxu0 0.0
        %537 = vmatpush1.xpose.msra.mxu0 %v475
        %538 = vmatprep.subr.mxu0 0.0
        %539 = vmatpush1.xpose.msra.mxu0 %v478
        %540 = vmatprep.subr.mxu0 0.0
        %541 = vmatpush1.xpose.msra.mxu0 %v481
        %542 = vmatprep.subr.mxu0 0.0
        %543 = vmatpush1.xpose.msra.mxu0 %v484
        %544 = vmatprep.subr.mxu0 0.0
        %545 = vmatpush1.xpose.msra.mxu0 %v487
        %546 = vmatprep.subr.mxu0 0.0
        %547 = vmatpush1.xpose.msra.mxu0 %v490
        %548 = vmatprep.subr.mxu0 0.0
        %549 = vmatpush1.xpose.msra.mxu0 0.0
        %550 = vmatprep.subr.mxu0 0.0
        %551 = vmatpush1.xpose.msra.mxu0 0.0
        %552 = vmatprep.subr.mxu0 0.0
        %553 = vmatpush1.xpose.msra.mxu0 0.0
        %554 = vmatprep.subr.mxu0 0.0
        %555 = vmatpush1.xpose.msra.mxu0 0.0
        %556 = vmatprep.mubr.f32.mxu0 0.0
        %557 = vmatmul.mubr.f32.gmra.mrb[0].mxu0 %v406
        %v558 = vpop.f32.mrb[0].mxu0
        %v559 = vadd.f32 %v401, %v558
        %v560 = vpop.f32.mrb[0].mxu0
        %v561 = vadd.f32 %v403, %v560
        %562 = vdwg.mxu0
        %v563 = vld [vmem:[%s186 + $0x2] sm:$0xff]
        %v564 = vld [vmem:[%s186 + $0xa] sm:$0xff]
        %v565 = vld [vmem:[%s186 + $0x1a] sm:$0xff]
        %v566 = vld [vmem:[%s186 + $0x22] sm:$0xff]
        %v567 = vld [vmem:[%s186 + $0x32] sm:$0xff]
        %v568 = vld [vmem:[%s186 + $0x3a] sm:$0xff]
        %v569 = vld [vmem:[%s186 + $0x4a] sm:$0xff]
        %v570 = vld [vmem:[%s186 + $0x52] sm:$0xff]
        %v571 = vld [vmem:[%s186 + $0x62] sm:$0xff]
        %v572 = vld [vmem:[%s186 + $0x6a] sm:$0xff]
        %v573 = vld [vmem:[%s186 + $0x7a] sm:$0xff]
        %v574 = vld [vmem:[%s186 + $0x82] sm:$0xff]
        %v575 = vld [vmem:[%s186 + $0x92] sm:$0xff]
        %v576 = vld [vmem:[%s186 + $0x9a] sm:$0xff]
        %v577 = vld [vmem:[%s186 + $0xaa] sm:$0xff]
        %v578 = vld [vmem:[%s186 + $0xb2] sm:$0xff]
        %v579 = vld [vmem:[%s186 + $0xc2] sm:$0xff]
        %v580 = vld [vmem:[%s186 + $0xca] sm:$0xff]
        %v581 = vld [vmem:[%s186 + $0xda] sm:$0xff]
        %v582 = vld [vmem:[%s186 + $0xe2] sm:$0xff]
        %v583 = vld [vmem:[%s186 + $0xf2] sm:$0xff]
        %v584 = vld [vmem:[%s186 + $0xfa] sm:$0xff]
        %v585 = vld [vmem:[%s186 + $0x10a] sm:$0xff]
        %v586 = vld [vmem:[%s186 + $0x112] sm:$0xff]
        %v587 = vld [vmem:[%s186 + $0x122] sm:$0xff]
        %v588 = vld [vmem:[%s186 + $0x12a] sm:$0xff]
        %v589 = vld [vmem:[%s186 + $0x13a] sm:$0xff]
        %v590 = vld [vmem:[%s186 + $0x142] sm:$0xff]
        %s591 = scalar_lea.vmem %s1, 16
        %v592 = vld [vmem:[%s591] sm:$0xff]
        %v594 = vsel %vm246, %v592, 0
        %v597 = vsel %vm246, %v563, 0
        %v600 = vsel %vm246, %v564, 0
        %v603 = vsel %vm246, %v565, 0
        %v606 = vsel %vm246, %v566, 0
        %v609 = vsel %vm246, %v567, 0
        %v612 = vsel %vm246, %v568, 0
        %v615 = vsel %vm246, %v569, 0
        %v618 = vsel %vm246, %v570, 0
        %v621 = vsel %vm246, %v571, 0
        %v624 = vsel %vm246, %v572, 0
        %v627 = vsel %vm246, %v573, 0
        %v630 = vsel %vm246, %v574, 0
        %v633 = vsel %vm246, %v575, 0
        %v636 = vsel %vm246, %v576, 0
        %v639 = vsel %vm246, %v577, 0
        %v642 = vsel %vm246, %v578, 0
        %v645 = vsel %vm246, %v579, 0
        %v648 = vsel %vm246, %v580, 0
        %v651 = vsel %vm246, %v581, 0
        %v654 = vsel %vm246, %v582, 0
        %v657 = vsel %vm246, %v583, 0
        %v660 = vsel %vm246, %v584, 0
        %v663 = vsel %vm246, %v585, 0
        %v666 = vsel %vm246, %v586, 0
        %v669 = vsel %vm246, %v587, 0
        %v672 = vsel %vm246, %v588, 0
        %v675 = vsel %vm246, %v589, 0
        %v678 = vsel %vm246, %v590, 0
        %680 = vmatprep.subr.mxu0 0.0
        %681 = vmatpush1.xpose.msra.mxu0 %v597
        %682 = vmatprep.subr.mxu0 0.0
        %683 = vmatpush1.xpose.msra.mxu0 %v600
        %684 = vmatprep.subr.mxu0 0.0
        %685 = vmatpush1.xpose.msra.mxu0 %v603
        %686 = vmatprep.subr.mxu0 0.0
        %687 = vmatpush1.xpose.msra.mxu0 %v606
        %688 = vmatprep.subr.mxu0 0.0
        %689 = vmatpush1.xpose.msra.mxu0 %v609
        %690 = vmatprep.subr.mxu0 0.0
        %691 = vmatpush1.xpose.msra.mxu0 %v612
        %692 = vmatprep.subr.mxu0 0.0
        %693 = vmatpush1.xpose.msra.mxu0 %v615
        %694 = vmatprep.subr.mxu0 0.0
        %695 = vmatpush1.xpose.msra.mxu0 %v618
        %696 = vmatprep.subr.mxu0 0.0
        %697 = vmatpush1.xpose.msra.mxu0 %v621
        %698 = vmatprep.subr.mxu0 0.0
        %699 = vmatpush1.xpose.msra.mxu0 %v624
        %700 = vmatprep.subr.mxu0 0.0
        %701 = vmatpush1.xpose.msra.mxu0 %v627
        %702 = vmatprep.subr.mxu0 0.0
        %703 = vmatpush1.xpose.msra.mxu0 %v630
        %704 = vmatprep.subr.mxu0 0.0
        %705 = vmatpush1.xpose.msra.mxu0 %v633
        %706 = vmatprep.subr.mxu0 0.0
        %707 = vmatpush1.xpose.msra.mxu0 %v636
        %708 = vmatprep.subr.mxu0 0.0
        %709 = vmatpush1.xpose.msra.mxu0 %v639
        %710 = vmatprep.subr.mxu0 0.0
        %711 = vmatpush1.xpose.msra.mxu0 %v642
        %712 = vmatprep.subr.mxu0 0.0
        %713 = vmatpush1.xpose.msra.mxu0 %v645
        %714 = vmatprep.subr.mxu0 0.0
        %715 = vmatpush1.xpose.msra.mxu0 %v648
        %716 = vmatprep.subr.mxu0 0.0
        %717 = vmatpush1.xpose.msra.mxu0 %v651
        %718 = vmatprep.subr.mxu0 0.0
        %719 = vmatpush1.xpose.msra.mxu0 %v654
        %720 = vmatprep.subr.mxu0 0.0
        %721 = vmatpush1.xpose.msra.mxu0 %v657
        %722 = vmatprep.subr.mxu0 0.0
        %723 = vmatpush1.xpose.msra.mxu0 %v660
        %724 = vmatprep.subr.mxu0 0.0
        %725 = vmatpush1.xpose.msra.mxu0 %v663
        %726 = vmatprep.subr.mxu0 0.0
        %727 = vmatpush1.xpose.msra.mxu0 %v666
        %728 = vmatprep.subr.mxu0 0.0
        %729 = vmatpush1.xpose.msra.mxu0 %v669
        %730 = vmatprep.subr.mxu0 0.0
        %731 = vmatpush1.xpose.msra.mxu0 %v672
        %732 = vmatprep.subr.mxu0 0.0
        %733 = vmatpush1.xpose.msra.mxu0 %v675
        %734 = vmatprep.subr.mxu0 0.0
        %735 = vmatpush1.xpose.msra.mxu0 %v678
        %736 = vmatprep.subr.mxu0 0.0
        %737 = vmatpush1.xpose.msra.mxu0 0.0
        %738 = vmatprep.subr.mxu0 0.0
        %739 = vmatpush1.xpose.msra.mxu0 0.0
        %740 = vmatprep.subr.mxu0 0.0
        %741 = vmatpush1.xpose.msra.mxu0 0.0
        %742 = vmatprep.subr.mxu0 0.0
        %743 = vmatpush1.xpose.msra.mxu0 0.0
        %744 = vmatprep.mubr.f32.mxu0 0.0
        %745 = vmatmul.mubr.f32.gmra.mrb[0].mxu0 %v594
        %v746 = vpop.f32.mrb[0].mxu0
        %v747 = vadd.f32 0.0, %v746
        %v748 = vpop.f32.mrb[0].mxu0
        %v749 = vadd.f32 0.0, %v748
        %750 = vdwg.mxu0
        %v751 = vadd.f32 %v559, %v747
        %v752 = vadd.f32 %v561, %v749
        %s753 = sadd.s32 %s184, 1
        %s754 = smul.u32 %s753, 24
        %s755 = scalar_lea.vmem %s182, %s754
        %v756 = vld [vmem:[%s755] sm:$0xff]
        %v757 = vld [vmem:[%s755 + $0x8] sm:$0xff]
        %v758 = vld [vmem:[%s755 + $0x18] sm:$0xff]
        %v759 = vld [vmem:[%s755 + $0x20] sm:$0xff]
        %v760 = vld [vmem:[%s755 + $0x30] sm:$0xff]
        %v761 = vld [vmem:[%s755 + $0x38] sm:$0xff]
        %v762 = vld [vmem:[%s755 + $0x48] sm:$0xff]
        %v763 = vld [vmem:[%s755 + $0x50] sm:$0xff]
        %v764 = vld [vmem:[%s755 + $0x60] sm:$0xff]
        %v765 = vld [vmem:[%s755 + $0x68] sm:$0xff]
        %v766 = vld [vmem:[%s755 + $0x78] sm:$0xff]
        %v767 = vld [vmem:[%s755 + $0x80] sm:$0xff]
        %v768 = vld [vmem:[%s755 + $0x90] sm:$0xff]
        %v769 = vld [vmem:[%s755 + $0x98] sm:$0xff]
        %v770 = vld [vmem:[%s755 + $0xa8] sm:$0xff]
        %v771 = vld [vmem:[%s755 + $0xb0] sm:$0xff]
        %v772 = vld [vmem:[%s755 + $0xc0] sm:$0xff]
        %v773 = vld [vmem:[%s755 + $0xc8] sm:$0xff]
        %v774 = vld [vmem:[%s755 + $0xd8] sm:$0xff]
        %v775 = vld [vmem:[%s755 + $0xe0] sm:$0xff]
        %v776 = vld [vmem:[%s755 + $0xf0] sm:$0xff]
        %v777 = vld [vmem:[%s755 + $0xf8] sm:$0xff]
        %v778 = vld [vmem:[%s755 + $0x108] sm:$0xff]
        %v779 = vld [vmem:[%s755 + $0x110] sm:$0xff]
        %v780 = vld [vmem:[%s755 + $0x120] sm:$0xff]
        %v781 = vld [vmem:[%s755 + $0x128] sm:$0xff]
        %v782 = vld [vmem:[%s755 + $0x138] sm:$0xff]
        %v783 = vld [vmem:[%s755 + $0x140] sm:$0xff]
        %s784 = scalar_lea.vmem %s1, 24
        %v785 = vld [vmem:[%s784] sm:$0xff]
        %v787 = vsel %vm246, %v785, 0
        %v790 = vsel %vm246, %v756, 0
        %v793 = vsel %vm246, %v757, 0
        %v796 = vsel %vm246, %v758, 0
        %v799 = vsel %vm246, %v759, 0
        %v802 = vsel %vm246, %v760, 0
        %v805 = vsel %vm246, %v761, 0
        %v808 = vsel %vm246, %v762, 0
        %v811 = vsel %vm246, %v763, 0
        %v814 = vsel %vm246, %v764, 0
        %v817 = vsel %vm246, %v765, 0
        %v820 = vsel %vm246, %v766, 0
        %v823 = vsel %vm246, %v767, 0
        %v826 = vsel %vm246, %v768, 0
        %v829 = vsel %vm246, %v769, 0
        %v832 = vsel %vm246, %v770, 0
        %v835 = vsel %vm246, %v771, 0
        %v838 = vsel %vm246, %v772, 0
        %v841 = vsel %vm246, %v773, 0
        %v844 = vsel %vm246, %v774, 0
        %v847 = vsel %vm246, %v775, 0
        %v850 = vsel %vm246, %v776, 0
        %v853 = vsel %vm246, %v777, 0
        %v856 = vsel %vm246, %v778, 0
        %v859 = vsel %vm246, %v779, 0
        %v862 = vsel %vm246, %v780, 0
        %v865 = vsel %vm246, %v781, 0
        %v868 = vsel %vm246, %v782, 0
        %v871 = vsel %vm246, %v783, 0
        %873 = vmatprep.subr.mxu0 0.0
        %874 = vmatpush1.xpose.msra.mxu0 %v790
        %875 = vmatprep.subr.mxu0 0.0
        %876 = vmatpush1.xpose.msra.mxu0 %v793
        %877 = vmatprep.subr.mxu0 0.0
        %878 = vmatpush1.xpose.msra.mxu0 %v796
        %879 = vmatprep.subr.mxu0 0.0
        %880 = vmatpush1.xpose.msra.mxu0 %v799
        %881 = vmatprep.subr.mxu0 0.0
        %882 = vmatpush1.xpose.msra.mxu0 %v802
        %883 = vmatprep.subr.mxu0 0.0
        %884 = vmatpush1.xpose.msra.mxu0 %v805
        %885 = vmatprep.subr.mxu0 0.0
        %886 = vmatpush1.xpose.msra.mxu0 %v808
        %887 = vmatprep.subr.mxu0 0.0
        %888 = vmatpush1.xpose.msra.mxu0 %v811
        %889 = vmatprep.subr.mxu0 0.0
        %890 = vmatpush1.xpose.msra.mxu0 %v814
        %891 = vmatprep.subr.mxu0 0.0
        %892 = vmatpush1.xpose.msra.mxu0 %v817
        %893 = vmatprep.subr.mxu0 0.0
        %894 = vmatpush1.xpose.msra.mxu0 %v820
        %895 = vmatprep.subr.mxu0 0.0
        %896 = vmatpush1.xpose.msra.mxu0 %v823
        %897 = vmatprep.subr.mxu0 0.0
        %898 = vmatpush1.xpose.msra.mxu0 %v826
        %899 = vmatprep.subr.mxu0 0.0
        %900 = vmatpush1.xpose.msra.mxu0 %v829
        %901 = vmatprep.subr.mxu0 0.0
        %902 = vmatpush1.xpose.msra.mxu0 %v832
        %903 = vmatprep.subr.mxu0 0.0
        %904 = vmatpush1.xpose.msra.mxu0 %v835
        %905 = vmatprep.subr.mxu0 0.0
        %906 = vmatpush1.xpose.msra.mxu0 %v838
        %907 = vmatprep.subr.mxu0 0.0
        %908 = vmatpush1.xpose.msra.mxu0 %v841
        %909 = vmatprep.subr.mxu0 0.0
        %910 = vmatpush1.xpose.msra.mxu0 %v844
        %911 = vmatprep.subr.mxu0 0.0
        %912 = vmatpush1.xpose.msra.mxu0 %v847
        %913 = vmatprep.subr.mxu0 0.0
        %914 = vmatpush1.xpose.msra.mxu0 %v850
        %915 = vmatprep.subr.mxu0 0.0
        %916 = vmatpush1.xpose.msra.mxu0 %v853
        %917 = vmatprep.subr.mxu0 0.0
        %918 = vmatpush1.xpose.msra.mxu0 %v856
        %919 = vmatprep.subr.mxu0 0.0
        %920 = vmatpush1.xpose.msra.mxu0 %v859
        %921 = vmatprep.subr.mxu0 0.0
        %922 = vmatpush1.xpose.msra.mxu0 %v862
        %923 = vmatprep.subr.mxu0 0.0
        %924 = vmatpush1.xpose.msra.mxu0 %v865
        %925 = vmatprep.subr.mxu0 0.0
        %926 = vmatpush1.xpose.msra.mxu0 %v868
        %927 = vmatprep.subr.mxu0 0.0
        %928 = vmatpush1.xpose.msra.mxu0 %v871
        %929 = vmatprep.subr.mxu0 0.0
        %930 = vmatpush1.xpose.msra.mxu0 0.0
        %931 = vmatprep.subr.mxu0 0.0
        %932 = vmatpush1.xpose.msra.mxu0 0.0
        %933 = vmatprep.subr.mxu0 0.0
        %934 = vmatpush1.xpose.msra.mxu0 0.0
        %935 = vmatprep.subr.mxu0 0.0
        %936 = vmatpush1.xpose.msra.mxu0 0.0
        %937 = vmatprep.mubr.f32.mxu0 0.0
        %938 = vmatmul.mubr.f32.gmra.mrb[0].mxu0 %v787
        %v939 = vpop.f32.mrb[0].mxu0
        %v940 = vadd.f32 0.0, %v939
        %v941 = vpop.f32.mrb[0].mxu0
        %v942 = vadd.f32 0.0, %v941
        %943 = vdwg.mxu0
        %v944 = vadd.f32 %v751, %v940
        %v945 = vadd.f32 %v752, %v942
        %v946 = vld [vmem:[%s755 + $0x1] sm:$0xff]
        %v947 = vld [vmem:[%s755 + $0x9] sm:$0xff]
        %v948 = vld [vmem:[%s755 + $0x19] sm:$0xff]
        %v949 = vld [vmem:[%s755 + $0x21] sm:$0xff]
        %v950 = vld [vmem:[%s755 + $0x31] sm:$0xff]
        %v951 = vld [vmem:[%s755 + $0x39] sm:$0xff]
        %v952 = vld [vmem:[%s755 + $0x49] sm:$0xff]
        %v953 = vld [vmem:[%s755 + $0x51] sm:$0xff]
        %v954 = vld [vmem:[%s755 + $0x61] sm:$0xff]
        %v955 = vld [vmem:[%s755 + $0x69] sm:$0xff]
        %v956 = vld [vmem:[%s755 + $0x79] sm:$0xff]
        %v957 = vld [vmem:[%s755 + $0x81] sm:$0xff]
        %v958 = vld [vmem:[%s755 + $0x91] sm:$0xff]
        %v959 = vld [vmem:[%s755 + $0x99] sm:$0xff]
        %v960 = vld [vmem:[%s755 + $0xa9] sm:$0xff]
        %v961 = vld [vmem:[%s755 + $0xb1] sm:$0xff]
        %v962 = vld [vmem:[%s755 + $0xc1] sm:$0xff]
        %v963 = vld [vmem:[%s755 + $0xc9] sm:$0xff]
        %v964 = vld [vmem:[%s755 + $0xd9] sm:$0xff]
        %v965 = vld [vmem:[%s755 + $0xe1] sm:$0xff]
        %v966 = vld [vmem:[%s755 + $0xf1] sm:$0xff]
        %v967 = vld [vmem:[%s755 + $0xf9] sm:$0xff]
        %v968 = vld [vmem:[%s755 + $0x109] sm:$0xff]
        %v969 = vld [vmem:[%s755 + $0x111] sm:$0xff]
        %v970 = vld [vmem:[%s755 + $0x121] sm:$0xff]
        %v971 = vld [vmem:[%s755 + $0x129] sm:$0xff]
        %v972 = vld [vmem:[%s755 + $0x139] sm:$0xff]
        %v973 = vld [vmem:[%s755 + $0x141] sm:$0xff]
        %s974 = scalar_lea.vmem %s1, 32
        %v975 = vld [vmem:[%s974] sm:$0xff]
        %v977 = vsel %vm246, %v975, 0
        %v980 = vsel %vm246, %v946, 0
        %v983 = vsel %vm246, %v947, 0
        %v986 = vsel %vm246, %v948, 0
        %v989 = vsel %vm246, %v949, 0
        %v992 = vsel %vm246, %v950, 0
        %v995 = vsel %vm246, %v951, 0
        %v998 = vsel %vm246, %v952, 0
        %v1001 = vsel %vm246, %v953, 0
        %v1004 = vsel %vm246, %v954, 0
        %v1007 = vsel %vm246, %v955, 0
        %v1010 = vsel %vm246, %v956, 0
        %v1013 = vsel %vm246, %v957, 0
        %v1016 = vsel %vm246, %v958, 0
        %v1019 = vsel %vm246, %v959, 0
        %v1022 = vsel %vm246, %v960, 0
        %v1025 = vsel %vm246, %v961, 0
        %v1028 = vsel %vm246, %v962, 0
        %v1031 = vsel %vm246, %v963, 0
        %v1034 = vsel %vm246, %v964, 0
        %v1037 = vsel %vm246, %v965, 0
        %v1040 = vsel %vm246, %v966, 0
        %v1043 = vsel %vm246, %v967, 0
        %v1046 = vsel %vm246, %v968, 0
        %v1049 = vsel %vm246, %v969, 0
        %v1052 = vsel %vm246, %v970, 0
        %v1055 = vsel %vm246, %v971, 0
        %v1058 = vsel %vm246, %v972, 0
        %v1061 = vsel %vm246, %v973, 0
        %1063 = vmatprep.subr.mxu0 0.0
        %1064 = vmatpush1.xpose.msra.mxu0 %v980
        %1065 = vmatprep.subr.mxu0 0.0
        %1066 = vmatpush1.xpose.msra.mxu0 %v983
        %1067 = vmatprep.subr.mxu0 0.0
        %1068 = vmatpush1.xpose.msra.mxu0 %v986
        %1069 = vmatprep.subr.mxu0 0.0
        %1070 = vmatpush1.xpose.msra.mxu0 %v989
        %1071 = vmatprep.subr.mxu0 0.0
        %1072 = vmatpush1.xpose.msra.mxu0 %v992
        %1073 = vmatprep.subr.mxu0 0.0
        %1074 = vmatpush1.xpose.msra.mxu0 %v995
        %1075 = vmatprep.subr.mxu0 0.0
        %1076 = vmatpush1.xpose.msra.mxu0 %v998
        %1077 = vmatprep.subr.mxu0 0.0
        %1078 = vmatpush1.xpose.msra.mxu0 %v1001
        %1079 = vmatprep.subr.mxu0 0.0
        %1080 = vmatpush1.xpose.msra.mxu0 %v1004
        %1081 = vmatprep.subr.mxu0 0.0
        %1082 = vmatpush1.xpose.msra.mxu0 %v1007
        %1083 = vmatprep.subr.mxu0 0.0
        %1084 = vmatpush1.xpose.msra.mxu0 %v1010
        %1085 = vmatprep.subr.mxu0 0.0
        %1086 = vmatpush1.xpose.msra.mxu0 %v1013
        %1087 = vmatprep.subr.mxu0 0.0
        %1088 = vmatpush1.xpose.msra.mxu0 %v1016
        %1089 = vmatprep.subr.mxu0 0.0
        %1090 = vmatpush1.xpose.msra.mxu0 %v1019
        %1091 = vmatprep.subr.mxu0 0.0
        %1092 = vmatpush1.xpose.msra.mxu0 %v1022
        %1093 = vmatprep.subr.mxu0 0.0
        %1094 = vmatpush1.xpose.msra.mxu0 %v1025
        %1095 = vmatprep.subr.mxu0 0.0
        %1096 = vmatpush1.xpose.msra.mxu0 %v1028
        %1097 = vmatprep.subr.mxu0 0.0
        %1098 = vmatpush1.xpose.msra.mxu0 %v1031
        %1099 = vmatprep.subr.mxu0 0.0
        %1100 = vmatpush1.xpose.msra.mxu0 %v1034
        %1101 = vmatprep.subr.mxu0 0.0
        %1102 = vmatpush1.xpose.msra.mxu0 %v1037
        %1103 = vmatprep.subr.mxu0 0.0
        %1104 = vmatpush1.xpose.msra.mxu0 %v1040
        %1105 = vmatprep.subr.mxu0 0.0
        %1106 = vmatpush1.xpose.msra.mxu0 %v1043
        %1107 = vmatprep.subr.mxu0 0.0
        %1108 = vmatpush1.xpose.msra.mxu0 %v1046
        %1109 = vmatprep.subr.mxu0 0.0
        %1110 = vmatpush1.xpose.msra.mxu0 %v1049
        %1111 = vmatprep.subr.mxu0 0.0
        %1112 = vmatpush1.xpose.msra.mxu0 %v1052
        %1113 = vmatprep.subr.mxu0 0.0
        %1114 = vmatpush1.xpose.msra.mxu0 %v1055
        %1115 = vmatprep.subr.mxu0 0.0
        %1116 = vmatpush1.xpose.msra.mxu0 %v1058
        %1117 = vmatprep.subr.mxu0 0.0
        %1118 = vmatpush1.xpose.msra.mxu0 %v1061
        %1119 = vmatprep.subr.mxu0 0.0
        %1120 = vmatpush1.xpose.msra.mxu0 0.0
        %1121 = vmatprep.subr.mxu0 0.0
        %1122 = vmatpush1.xpose.msra.mxu0 0.0
        %1123 = vmatprep.subr.mxu0 0.0
        %1124 = vmatpush1.xpose.msra.mxu0 0.0
        %1125 = vmatprep.subr.mxu0 0.0
        %1126 = vmatpush1.xpose.msra.mxu0 0.0
        %1127 = vmatprep.mubr.f32.mxu0 0.0
        %1128 = vmatmul.mubr.f32.gmra.mrb[0].mxu0 %v977
        %v1129 = vpop.f32.mrb[0].mxu0
        %v1130 = vadd.f32 0.0, %v1129
        %v1131 = vpop.f32.mrb[0].mxu0
        %v1132 = vadd.f32 0.0, %v1131
        %1133 = vdwg.mxu0
        %v1134 = vadd.f32 %v944, %v1130
        %v1135 = vadd.f32 %v945, %v1132
        %v1136 = vld [vmem:[%s755 + $0x2] sm:$0xff]
        %v1137 = vld [vmem:[%s755 + $0xa] sm:$0xff]
        %v1138 = vld [vmem:[%s755 + $0x1a] sm:$0xff]
        %v1139 = vld [vmem:[%s755 + $0x22] sm:$0xff]
        %v1140 = vld [vmem:[%s755 + $0x32] sm:$0xff]
        %v1141 = vld [vmem:[%s755 + $0x3a] sm:$0xff]
        %v1142 = vld [vmem:[%s755 + $0x4a] sm:$0xff]
        %v1143 = vld [vmem:[%s755 + $0x52] sm:$0xff]
        %v1144 = vld [vmem:[%s755 + $0x62] sm:$0xff]
        %v1145 = vld [vmem:[%s755 + $0x6a] sm:$0xff]
        %v1146 = vld [vmem:[%s755 + $0x7a] sm:$0xff]
        %v1147 = vld [vmem:[%s755 + $0x82] sm:$0xff]
        %v1148 = vld [vmem:[%s755 + $0x92] sm:$0xff]
        %v1149 = vld [vmem:[%s755 + $0x9a] sm:$0xff]
        %v1150 = vld [vmem:[%s755 + $0xaa] sm:$0xff]
        %v1151 = vld [vmem:[%s755 + $0xb2] sm:$0xff]
        %v1152 = vld [vmem:[%s755 + $0xc2] sm:$0xff]
        %v1153 = vld [vmem:[%s755 + $0xca] sm:$0xff]
        %v1154 = vld [vmem:[%s755 + $0xda] sm:$0xff]
        %v1155 = vld [vmem:[%s755 + $0xe2] sm:$0xff]
        %v1156 = vld [vmem:[%s755 + $0xf2] sm:$0xff]
        %v1157 = vld [vmem:[%s755 + $0xfa] sm:$0xff]
        %v1158 = vld [vmem:[%s755 + $0x10a] sm:$0xff]
        %v1159 = vld [vmem:[%s755 + $0x112] sm:$0xff]
        %v1160 = vld [vmem:[%s755 + $0x122] sm:$0xff]
        %v1161 = vld [vmem:[%s755 + $0x12a] sm:$0xff]
        %v1162 = vld [vmem:[%s755 + $0x13a] sm:$0xff]
        %v1163 = vld [vmem:[%s755 + $0x142] sm:$0xff]
        %s1164 = scalar_lea.vmem %s1, 40
        %v1165 = vld [vmem:[%s1164] sm:$0xff]
        %v1167 = vsel %vm246, %v1165, 0
        %v1170 = vsel %vm246, %v1136, 0
        %v1173 = vsel %vm246, %v1137, 0
        %v1176 = vsel %vm246, %v1138, 0
        %v1179 = vsel %vm246, %v1139, 0
        %v1182 = vsel %vm246, %v1140, 0
        %v1185 = vsel %vm246, %v1141, 0
        %v1188 = vsel %vm246, %v1142, 0
        %v1191 = vsel %vm246, %v1143, 0
        %v1194 = vsel %vm246, %v1144, 0
        %v1197 = vsel %vm246, %v1145, 0
        %v1200 = vsel %vm246, %v1146, 0
        %v1203 = vsel %vm246, %v1147, 0
        %v1206 = vsel %vm246, %v1148, 0
        %v1209 = vsel %vm246, %v1149, 0
        %v1212 = vsel %vm246, %v1150, 0
        %v1215 = vsel %vm246, %v1151, 0
        %v1218 = vsel %vm246, %v1152, 0
        %v1221 = vsel %vm246, %v1153, 0
        %v1224 = vsel %vm246, %v1154, 0
        %v1227 = vsel %vm246, %v1155, 0
        %v1230 = vsel %vm246, %v1156, 0
        %v1233 = vsel %vm246, %v1157, 0
        %v1236 = vsel %vm246, %v1158, 0
        %v1239 = vsel %vm246, %v1159, 0
        %v1242 = vsel %vm246, %v1160, 0
        %v1245 = vsel %vm246, %v1161, 0
        %v1248 = vsel %vm246, %v1162, 0
        %v1251 = vsel %vm246, %v1163, 0
        %1253 = vmatprep.subr.mxu0 0.0
        %1254 = vmatpush1.xpose.msra.mxu0 %v1170
        %1255 = vmatprep.subr.mxu0 0.0
        %1256 = vmatpush1.xpose.msra.mxu0 %v1173
        %1257 = vmatprep.subr.mxu0 0.0
        %1258 = vmatpush1.xpose.msra.mxu0 %v1176
        %1259 = vmatprep.subr.mxu0 0.0
        %1260 = vmatpush1.xpose.msra.mxu0 %v1179
        %1261 = vmatprep.subr.mxu0 0.0
        %1262 = vmatpush1.xpose.msra.mxu0 %v1182
        %1263 = vmatprep.subr.mxu0 0.0
        %1264 = vmatpush1.xpose.msra.mxu0 %v1185
        %1265 = vmatprep.subr.mxu0 0.0
        %1266 = vmatpush1.xpose.msra.mxu0 %v1188
        %1267 = vmatprep.subr.mxu0 0.0
        %1268 = vmatpush1.xpose.msra.mxu0 %v1191
        %1269 = vmatprep.subr.mxu0 0.0
        %1270 = vmatpush1.xpose.msra.mxu0 %v1194
        %1271 = vmatprep.subr.mxu0 0.0
        %1272 = vmatpush1.xpose.msra.mxu0 %v1197
        %1273 = vmatprep.subr.mxu0 0.0
        %1274 = vmatpush1.xpose.msra.mxu0 %v1200
        %1275 = vmatprep.subr.mxu0 0.0
        %1276 = vmatpush1.xpose.msra.mxu0 %v1203
        %1277 = vmatprep.subr.mxu0 0.0
        %1278 = vmatpush1.xpose.msra.mxu0 %v1206
        %1279 = vmatprep.subr.mxu0 0.0
        %1280 = vmatpush1.xpose.msra.mxu0 %v1209
        %1281 = vmatprep.subr.mxu0 0.0
        %1282 = vmatpush1.xpose.msra.mxu0 %v1212
        %1283 = vmatprep.subr.mxu0 0.0
        %1284 = vmatpush1.xpose.msra.mxu0 %v1215
        %1285 = vmatprep.subr.mxu0 0.0
        %1286 = vmatpush1.xpose.msra.mxu0 %v1218
        %1287 = vmatprep.subr.mxu0 0.0
        %1288 = vmatpush1.xpose.msra.mxu0 %v1221
        %1289 = vmatprep.subr.mxu0 0.0
        %1290 = vmatpush1.xpose.msra.mxu0 %v1224
        %1291 = vmatprep.subr.mxu0 0.0
        %1292 = vmatpush1.xpose.msra.mxu0 %v1227
        %1293 = vmatprep.subr.mxu0 0.0
        %1294 = vmatpush1.xpose.msra.mxu0 %v1230
        %1295 = vmatprep.subr.mxu0 0.0
        %1296 = vmatpush1.xpose.msra.mxu0 %v1233
        %1297 = vmatprep.subr.mxu0 0.0
        %1298 = vmatpush1.xpose.msra.mxu0 %v1236
        %1299 = vmatprep.subr.mxu0 0.0
        %1300 = vmatpush1.xpose.msra.mxu0 %v1239
        %1301 = vmatprep.subr.mxu0 0.0
        %1302 = vmatpush1.xpose.msra.mxu0 %v1242
        %1303 = vmatprep.subr.mxu0 0.0
        %1304 = vmatpush1.xpose.msra.mxu0 %v1245
        %1305 = vmatprep.subr.mxu0 0.0
        %1306 = vmatpush1.xpose.msra.mxu0 %v1248
        %1307 = vmatprep.subr.mxu0 0.0
        %1308 = vmatpush1.xpose.msra.mxu0 %v1251
        %1309 = vmatprep.subr.mxu0 0.0
        %1310 = vmatpush1.xpose.msra.mxu0 0.0
        %1311 = vmatprep.subr.mxu0 0.0
        %1312 = vmatpush1.xpose.msra.mxu0 0.0
        %1313 = vmatprep.subr.mxu0 0.0
        %1314 = vmatpush1.xpose.msra.mxu0 0.0
        %1315 = vmatprep.subr.mxu0 0.0
        %1316 = vmatpush1.xpose.msra.mxu0 0.0
        %1317 = vmatprep.mubr.f32.mxu0 0.0
        %1318 = vmatmul.mubr.f32.gmra.mrb[0].mxu0 %v1167
        %v1319 = vpop.f32.mrb[0].mxu0
        %v1320 = vadd.f32 0.0, %v1319
        %v1321 = vpop.f32.mrb[0].mxu0
        %v1322 = vadd.f32 0.0, %v1321
        %1323 = vdwg.mxu0
        %v1324 = vadd.f32 %v1134, %v1320
        %v1325 = vadd.f32 %v1135, %v1322
        %s1326 = sadd.s32 %s184, 2
        %s1327 = smul.u32 %s1326, 24
        %s1328 = scalar_lea.vmem %s182, %s1327
        %v1329 = vld [vmem:[%s1328] sm:$0xff]
        %v1330 = vld [vmem:[%s1328 + $0x8] sm:$0xff]
        %v1331 = vld [vmem:[%s1328 + $0x18] sm:$0xff]
        %v1332 = vld [vmem:[%s1328 + $0x20] sm:$0xff]
        %v1333 = vld [vmem:[%s1328 + $0x30] sm:$0xff]
        %v1334 = vld [vmem:[%s1328 + $0x38] sm:$0xff]
        %v1335 = vld [vmem:[%s1328 + $0x48] sm:$0xff]
        %v1336 = vld [vmem:[%s1328 + $0x50] sm:$0xff]
        %v1337 = vld [vmem:[%s1328 + $0x60] sm:$0xff]
        %v1338 = vld [vmem:[%s1328 + $0x68] sm:$0xff]
        %v1339 = vld [vmem:[%s1328 + $0x78] sm:$0xff]
        %v1340 = vld [vmem:[%s1328 + $0x80] sm:$0xff]
        %v1341 = vld [vmem:[%s1328 + $0x90] sm:$0xff]
        %v1342 = vld [vmem:[%s1328 + $0x98] sm:$0xff]
        %v1343 = vld [vmem:[%s1328 + $0xa8] sm:$0xff]
        %v1344 = vld [vmem:[%s1328 + $0xb0] sm:$0xff]
        %v1345 = vld [vmem:[%s1328 + $0xc0] sm:$0xff]
        %v1346 = vld [vmem:[%s1328 + $0xc8] sm:$0xff]
        %v1347 = vld [vmem:[%s1328 + $0xd8] sm:$0xff]
        %v1348 = vld [vmem:[%s1328 + $0xe0] sm:$0xff]
        %v1349 = vld [vmem:[%s1328 + $0xf0] sm:$0xff]
        %v1350 = vld [vmem:[%s1328 + $0xf8] sm:$0xff]
        %v1351 = vld [vmem:[%s1328 + $0x108] sm:$0xff]
        %v1352 = vld [vmem:[%s1328 + $0x110] sm:$0xff]
        %v1353 = vld [vmem:[%s1328 + $0x120] sm:$0xff]
        %v1354 = vld [vmem:[%s1328 + $0x128] sm:$0xff]
        %v1355 = vld [vmem:[%s1328 + $0x138] sm:$0xff]
        %v1356 = vld [vmem:[%s1328 + $0x140] sm:$0xff]
        %s1357 = scalar_lea.vmem %s1, 48
        %v1358 = vld [vmem:[%s1357] sm:$0xff]
        %v1360 = vsel %vm246, %v1358, 0
        %v1363 = vsel %vm246, %v1329, 0
        %v1366 = vsel %vm246, %v1330, 0
        %v1369 = vsel %vm246, %v1331, 0
        %v1372 = vsel %vm246, %v1332, 0
        %v1375 = vsel %vm246, %v1333, 0
        %v1378 = vsel %vm246, %v1334, 0
        %v1381 = vsel %vm246, %v1335, 0
        %v1384 = vsel %vm246, %v1336, 0
        %v1387 = vsel %vm246, %v1337, 0
        %v1390 = vsel %vm246, %v1338, 0
        %v1393 = vsel %vm246, %v1339, 0
        %v1396 = vsel %vm246, %v1340, 0
        %v1399 = vsel %vm246, %v1341, 0
        %v1402 = vsel %vm246, %v1342, 0
        %v1405 = vsel %vm246, %v1343, 0
        %v1408 = vsel %vm246, %v1344, 0
        %v1411 = vsel %vm246, %v1345, 0
        %v1414 = vsel %vm246, %v1346, 0
        %v1417 = vsel %vm246, %v1347, 0
        %v1420 = vsel %vm246, %v1348, 0
        %v1423 = vsel %vm246, %v1349, 0
        %v1426 = vsel %vm246, %v1350, 0
        %v1429 = vsel %vm246, %v1351, 0
        %v1432 = vsel %vm246, %v1352, 0
        %v1435 = vsel %vm246, %v1353, 0
        %v1438 = vsel %vm246, %v1354, 0
        %v1441 = vsel %vm246, %v1355, 0
        %v1444 = vsel %vm246, %v1356, 0
        %1446 = vmatprep.subr.mxu0 0.0
        %1447 = vmatpush1.xpose.msra.mxu0 %v1363
        %1448 = vmatprep.subr.mxu0 0.0
        %1449 = vmatpush1.xpose.msra.mxu0 %v1366
        %1450 = vmatprep.subr.mxu0 0.0
        %1451 = vmatpush1.xpose.msra.mxu0 %v1369
        %1452 = vmatprep.subr.mxu0 0.0
        %1453 = vmatpush1.xpose.msra.mxu0 %v1372
        %1454 = vmatprep.subr.mxu0 0.0
        %1455 = vmatpush1.xpose.msra.mxu0 %v1375
        %1456 = vmatprep.subr.mxu0 0.0
        %1457 = vmatpush1.xpose.msra.mxu0 %v1378
        %1458 = vmatprep.subr.mxu0 0.0
        %1459 = vmatpush1.xpose.msra.mxu0 %v1381
        %1460 = vmatprep.subr.mxu0 0.0
        %1461 = vmatpush1.xpose.msra.mxu0 %v1384
        %1462 = vmatprep.subr.mxu0 0.0
        %1463 = vmatpush1.xpose.msra.mxu0 %v1387
        %1464 = vmatprep.subr.mxu0 0.0
        %1465 = vmatpush1.xpose.msra.mxu0 %v1390
        %1466 = vmatprep.subr.mxu0 0.0
        %1467 = vmatpush1.xpose.msra.mxu0 %v1393
        %1468 = vmatprep.subr.mxu0 0.0
        %1469 = vmatpush1.xpose.msra.mxu0 %v1396
        %1470 = vmatprep.subr.mxu0 0.0
        %1471 = vmatpush1.xpose.msra.mxu0 %v1399
        %1472 = vmatprep.subr.mxu0 0.0
        %1473 = vmatpush1.xpose.msra.mxu0 %v1402
        %1474 = vmatprep.subr.mxu0 0.0
        %1475 = vmatpush1.xpose.msra.mxu0 %v1405
        %1476 = vmatprep.subr.mxu0 0.0
        %1477 = vmatpush1.xpose.msra.mxu0 %v1408
        %1478 = vmatprep.subr.mxu0 0.0
        %1479 = vmatpush1.xpose.msra.mxu0 %v1411
        %1480 = vmatprep.subr.mxu0 0.0
        %1481 = vmatpush1.xpose.msra.mxu0 %v1414
        %1482 = vmatprep.subr.mxu0 0.0
        %1483 = vmatpush1.xpose.msra.mxu0 %v1417
        %1484 = vmatprep.subr.mxu0 0.0
        %1485 = vmatpush1.xpose.msra.mxu0 %v1420
        %1486 = vmatprep.subr.mxu0 0.0
        %1487 = vmatpush1.xpose.msra.mxu0 %v1423
        %1488 = vmatprep.subr.mxu0 0.0
        %1489 = vmatpush1.xpose.msra.mxu0 %v1426
        %1490 = vmatprep.subr.mxu0 0.0
        %1491 = vmatpush1.xpose.msra.mxu0 %v1429
        %1492 = vmatprep.subr.mxu0 0.0
        %1493 = vmatpush1.xpose.msra.mxu0 %v1432
        %1494 = vmatprep.subr.mxu0 0.0
        %1495 = vmatpush1.xpose.msra.mxu0 %v1435
        %1496 = vmatprep.subr.mxu0 0.0
        %1497 = vmatpush1.xpose.msra.mxu0 %v1438
        %1498 = vmatprep.subr.mxu0 0.0
        %1499 = vmatpush1.xpose.msra.mxu0 %v1441
        %1500 = vmatprep.subr.mxu0 0.0
        %1501 = vmatpush1.xpose.msra.mxu0 %v1444
        %1502 = vmatprep.subr.mxu0 0.0
        %1503 = vmatpush1.xpose.msra.mxu0 0.0
        %1504 = vmatprep.subr.mxu0 0.0
        %1505 = vmatpush1.xpose.msra.mxu0 0.0
        %1506 = vmatprep.subr.mxu0 0.0
        %1507 = vmatpush1.xpose.msra.mxu0 0.0
        %1508 = vmatprep.subr.mxu0 0.0
        %1509 = vmatpush1.xpose.msra.mxu0 0.0
        %1510 = vmatprep.mubr.f32.mxu0 0.0
        %1511 = vmatmul.mubr.f32.gmra.mrb[0].mxu0 %v1360
        %v1512 = vpop.f32.mrb[0].mxu0
        %v1513 = vadd.f32 0.0, %v1512
        %v1514 = vpop.f32.mrb[0].mxu0
        %v1515 = vadd.f32 0.0, %v1514
        %1516 = vdwg.mxu0
        %v1517 = vadd.f32 %v1324, %v1513
        %v1518 = vadd.f32 %v1325, %v1515
        %v1519 = vld [vmem:[%s1328 + $0x1] sm:$0xff]
        %v1520 = vld [vmem:[%s1328 + $0x9] sm:$0xff]
        %v1521 = vld [vmem:[%s1328 + $0x19] sm:$0xff]
        %v1522 = vld [vmem:[%s1328 + $0x21] sm:$0xff]
        %v1523 = vld [vmem:[%s1328 + $0x31] sm:$0xff]
        %v1524 = vld [vmem:[%s1328 + $0x39] sm:$0xff]
        %v1525 = vld [vmem:[%s1328 + $0x49] sm:$0xff]
        %v1526 = vld [vmem:[%s1328 + $0x51] sm:$0xff]
        %v1527 = vld [vmem:[%s1328 + $0x61] sm:$0xff]
        %v1528 = vld [vmem:[%s1328 + $0x69] sm:$0xff]
        %v1529 = vld [vmem:[%s1328 + $0x79] sm:$0xff]
        %v1530 = vld [vmem:[%s1328 + $0x81] sm:$0xff]
        %v1531 = vld [vmem:[%s1328 + $0x91] sm:$0xff]
        %v1532 = vld [vmem:[%s1328 + $0x99] sm:$0xff]
        %v1533 = vld [vmem:[%s1328 + $0xa9] sm:$0xff]
        %v1534 = vld [vmem:[%s1328 + $0xb1] sm:$0xff]
        %v1535 = vld [vmem:[%s1328 + $0xc1] sm:$0xff]
        %v1536 = vld [vmem:[%s1328 + $0xc9] sm:$0xff]
        %v1537 = vld [vmem:[%s1328 + $0xd9] sm:$0xff]
        %v1538 = vld [vmem:[%s1328 + $0xe1] sm:$0xff]
        %v1539 = vld [vmem:[%s1328 + $0xf1] sm:$0xff]
        %v1540 = vld [vmem:[%s1328 + $0xf9] sm:$0xff]
        %v1541 = vld [vmem:[%s1328 + $0x109] sm:$0xff]
        %v1542 = vld [vmem:[%s1328 + $0x111] sm:$0xff]
        %v1543 = vld [vmem:[%s1328 + $0x121] sm:$0xff]
        %v1544 = vld [vmem:[%s1328 + $0x129] sm:$0xff]
        %v1545 = vld [vmem:[%s1328 + $0x139] sm:$0xff]
        %v1546 = vld [vmem:[%s1328 + $0x141] sm:$0xff]
        %s1547 = scalar_lea.vmem %s1, 56
        %v1548 = vld [vmem:[%s1547] sm:$0xff]
        %v1550 = vsel %vm246, %v1548, 0
        %v1553 = vsel %vm246, %v1519, 0
        %v1556 = vsel %vm246, %v1520, 0
        %v1559 = vsel %vm246, %v1521, 0
        %v1562 = vsel %vm246, %v1522, 0
        %v1565 = vsel %vm246, %v1523, 0
        %v1568 = vsel %vm246, %v1524, 0
        %v1571 = vsel %vm246, %v1525, 0
        %v1574 = vsel %vm246, %v1526, 0
        %v1577 = vsel %vm246, %v1527, 0
        %v1580 = vsel %vm246, %v1528, 0
        %v1583 = vsel %vm246, %v1529, 0
        %v1586 = vsel %vm246, %v1530, 0
        %v1589 = vsel %vm246, %v1531, 0
        %v1592 = vsel %vm246, %v1532, 0
        %v1595 = vsel %vm246, %v1533, 0
        %v1598 = vsel %vm246, %v1534, 0
        %v1601 = vsel %vm246, %v1535, 0
        %v1604 = vsel %vm246, %v1536, 0
        %v1607 = vsel %vm246, %v1537, 0
        %v1610 = vsel %vm246, %v1538, 0
        %v1613 = vsel %vm246, %v1539, 0
        %v1616 = vsel %vm246, %v1540, 0
        %v1619 = vsel %vm246, %v1541, 0
        %v1622 = vsel %vm246, %v1542, 0
        %v1625 = vsel %vm246, %v1543, 0
        %v1628 = vsel %vm246, %v1544, 0
        %v1631 = vsel %vm246, %v1545, 0
        %v1634 = vsel %vm246, %v1546, 0
        %1636 = vmatprep.subr.mxu0 0.0
        %1637 = vmatpush1.xpose.msra.mxu0 %v1553
        %1638 = vmatprep.subr.mxu0 0.0
        %1639 = vmatpush1.xpose.msra.mxu0 %v1556
        %1640 = vmatprep.subr.mxu0 0.0
        %1641 = vmatpush1.xpose.msra.mxu0 %v1559
        %1642 = vmatprep.subr.mxu0 0.0
        %1643 = vmatpush1.xpose.msra.mxu0 %v1562
        %1644 = vmatprep.subr.mxu0 0.0
        %1645 = vmatpush1.xpose.msra.mxu0 %v1565
        %1646 = vmatprep.subr.mxu0 0.0
        %1647 = vmatpush1.xpose.msra.mxu0 %v1568
        %1648 = vmatprep.subr.mxu0 0.0
        %1649 = vmatpush1.xpose.msra.mxu0 %v1571
        %1650 = vmatprep.subr.mxu0 0.0
        %1651 = vmatpush1.xpose.msra.mxu0 %v1574
        %1652 = vmatprep.subr.mxu0 0.0
        %1653 = vmatpush1.xpose.msra.mxu0 %v1577
        %1654 = vmatprep.subr.mxu0 0.0
        %1655 = vmatpush1.xpose.msra.mxu0 %v1580
        %1656 = vmatprep.subr.mxu0 0.0
        %1657 = vmatpush1.xpose.msra.mxu0 %v1583
        %1658 = vmatprep.subr.mxu0 0.0
        %1659 = vmatpush1.xpose.msra.mxu0 %v1586
        %1660 = vmatprep.subr.mxu0 0.0
        %1661 = vmatpush1.xpose.msra.mxu0 %v1589
        %1662 = vmatprep.subr.mxu0 0.0
        %1663 = vmatpush1.xpose.msra.mxu0 %v1592
        %1664 = vmatprep.subr.mxu0 0.0
        %1665 = vmatpush1.xpose.msra.mxu0 %v1595
        %1666 = vmatprep.subr.mxu0 0.0
        %1667 = vmatpush1.xpose.msra.mxu0 %v1598
        %1668 = vmatprep.subr.mxu0 0.0
        %1669 = vmatpush1.xpose.msra.mxu0 %v1601
        %1670 = vmatprep.subr.mxu0 0.0
        %1671 = vmatpush1.xpose.msra.mxu0 %v1604
        %1672 = vmatprep.subr.mxu0 0.0
        %1673 = vmatpush1.xpose.msra.mxu0 %v1607
        %1674 = vmatprep.subr.mxu0 0.0
        %1675 = vmatpush1.xpose.msra.mxu0 %v1610
        %1676 = vmatprep.subr.mxu0 0.0
        %1677 = vmatpush1.xpose.msra.mxu0 %v1613
        %1678 = vmatprep.subr.mxu0 0.0
        %1679 = vmatpush1.xpose.msra.mxu0 %v1616
        %1680 = vmatprep.subr.mxu0 0.0
        %1681 = vmatpush1.xpose.msra.mxu0 %v1619
        %1682 = vmatprep.subr.mxu0 0.0
        %1683 = vmatpush1.xpose.msra.mxu0 %v1622
        %1684 = vmatprep.subr.mxu0 0.0
        %1685 = vmatpush1.xpose.msra.mxu0 %v1625
        %1686 = vmatprep.subr.mxu0 0.0
        %1687 = vmatpush1.xpose.msra.mxu0 %v1628
        %1688 = vmatprep.subr.mxu0 0.0
        %1689 = vmatpush1.xpose.msra.mxu0 %v1631
        %1690 = vmatprep.subr.mxu0 0.0
        %1691 = vmatpush1.xpose.msra.mxu0 %v1634
        %1692 = vmatprep.subr.mxu0 0.0
        %1693 = vmatpush1.xpose.msra.mxu0 0.0
        %1694 = vmatprep.subr.mxu0 0.0
        %1695 = vmatpush1.xpose.msra.mxu0 0.0
        %1696 = vmatprep.subr.mxu0 0.0
        %1697 = vmatpush1.xpose.msra.mxu0 0.0
        %1698 = vmatprep.subr.mxu0 0.0
        %1699 = vmatpush1.xpose.msra.mxu0 0.0
        %1700 = vmatprep.mubr.f32.mxu0 0.0
        %1701 = vmatmul.mubr.f32.gmra.mrb[0].mxu0 %v1550
        %v1702 = vpop.f32.mrb[0].mxu0
        %v1703 = vadd.f32 0.0, %v1702
        %v1704 = vpop.f32.mrb[0].mxu0
        %v1705 = vadd.f32 0.0, %v1704
        %1706 = vdwg.mxu0
        %v1707 = vadd.f32 %v1517, %v1703
        %v1708 = vadd.f32 %v1518, %v1705
        %v1709 = vld [vmem:[%s1328 + $0x2] sm:$0xff]
        %v1710 = vld [vmem:[%s1328 + $0xa] sm:$0xff]
        %v1711 = vld [vmem:[%s1328 + $0x1a] sm:$0xff]
        %v1712 = vld [vmem:[%s1328 + $0x22] sm:$0xff]
        %v1713 = vld [vmem:[%s1328 + $0x32] sm:$0xff]
        %v1714 = vld [vmem:[%s1328 + $0x3a] sm:$0xff]
        %v1715 = vld [vmem:[%s1328 + $0x4a] sm:$0xff]
        %v1716 = vld [vmem:[%s1328 + $0x52] sm:$0xff]
        %v1717 = vld [vmem:[%s1328 + $0x62] sm:$0xff]
        %v1718 = vld [vmem:[%s1328 + $0x6a] sm:$0xff]
        %v1719 = vld [vmem:[%s1328 + $0x7a] sm:$0xff]
        %v1720 = vld [vmem:[%s1328 + $0x82] sm:$0xff]
        %v1721 = vld [vmem:[%s1328 + $0x92] sm:$0xff]
        %v1722 = vld [vmem:[%s1328 + $0x9a] sm:$0xff]
        %v1723 = vld [vmem:[%s1328 + $0xaa] sm:$0xff]
        %v1724 = vld [vmem:[%s1328 + $0xb2] sm:$0xff]
        %v1725 = vld [vmem:[%s1328 + $0xc2] sm:$0xff]
        %v1726 = vld [vmem:[%s1328 + $0xca] sm:$0xff]
        %v1727 = vld [vmem:[%s1328 + $0xda] sm:$0xff]
        %v1728 = vld [vmem:[%s1328 + $0xe2] sm:$0xff]
        %v1729 = vld [vmem:[%s1328 + $0xf2] sm:$0xff]
        %v1730 = vld [vmem:[%s1328 + $0xfa] sm:$0xff]
        %v1731 = vld [vmem:[%s1328 + $0x10a] sm:$0xff]
        %v1732 = vld [vmem:[%s1328 + $0x112] sm:$0xff]
        %v1733 = vld [vmem:[%s1328 + $0x122] sm:$0xff]
        %v1734 = vld [vmem:[%s1328 + $0x12a] sm:$0xff]
        %v1735 = vld [vmem:[%s1328 + $0x13a] sm:$0xff]
        %v1736 = vld [vmem:[%s1328 + $0x142] sm:$0xff]
        %s1737 = scalar_lea.vmem %s1, 64
        %v1738 = vld [vmem:[%s1737] sm:$0xff]
        %v1740 = vsel %vm246, %v1738, 0
        %v1743 = vsel %vm246, %v1709, 0
        %v1746 = vsel %vm246, %v1710, 0
        %v1749 = vsel %vm246, %v1711, 0
        %v1752 = vsel %vm246, %v1712, 0
        %v1755 = vsel %vm246, %v1713, 0
        %v1758 = vsel %vm246, %v1714, 0
        %v1761 = vsel %vm246, %v1715, 0
        %v1764 = vsel %vm246, %v1716, 0
        %v1767 = vsel %vm246, %v1717, 0
        %v1770 = vsel %vm246, %v1718, 0
        %v1773 = vsel %vm246, %v1719, 0
        %v1776 = vsel %vm246, %v1720, 0
        %v1779 = vsel %vm246, %v1721, 0
        %v1782 = vsel %vm246, %v1722, 0
        %v1785 = vsel %vm246, %v1723, 0
        %v1788 = vsel %vm246, %v1724, 0
        %v1791 = vsel %vm246, %v1725, 0
        %v1794 = vsel %vm246, %v1726, 0
        %v1797 = vsel %vm246, %v1727, 0
        %v1800 = vsel %vm246, %v1728, 0
        %v1803 = vsel %vm246, %v1729, 0
        %v1806 = vsel %vm246, %v1730, 0
        %v1809 = vsel %vm246, %v1731, 0
        %v1812 = vsel %vm246, %v1732, 0
        %v1815 = vsel %vm246, %v1733, 0
        %v1818 = vsel %vm246, %v1734, 0
        %v1821 = vsel %vm246, %v1735, 0
        %v1824 = vsel %vm246, %v1736, 0
        %1826 = vmatprep.subr.mxu0 0.0
        %1827 = vmatpush1.xpose.msra.mxu0 %v1743
        %1828 = vmatprep.subr.mxu0 0.0
        %1829 = vmatpush1.xpose.msra.mxu0 %v1746
        %1830 = vmatprep.subr.mxu0 0.0
        %1831 = vmatpush1.xpose.msra.mxu0 %v1749
        %1832 = vmatprep.subr.mxu0 0.0
        %1833 = vmatpush1.xpose.msra.mxu0 %v1752
        %1834 = vmatprep.subr.mxu0 0.0
        %1835 = vmatpush1.xpose.msra.mxu0 %v1755
        %1836 = vmatprep.subr.mxu0 0.0
        %1837 = vmatpush1.xpose.msra.mxu0 %v1758
        %1838 = vmatprep.subr.mxu0 0.0
        %1839 = vmatpush1.xpose.msra.mxu0 %v1761
        %1840 = vmatprep.subr.mxu0 0.0
        %1841 = vmatpush1.xpose.msra.mxu0 %v1764
        %1842 = vmatprep.subr.mxu0 0.0
        %1843 = vmatpush1.xpose.msra.mxu0 %v1767
        %1844 = vmatprep.subr.mxu0 0.0
        %1845 = vmatpush1.xpose.msra.mxu0 %v1770
        %1846 = vmatprep.subr.mxu0 0.0
        %1847 = vmatpush1.xpose.msra.mxu0 %v1773
        %1848 = vmatprep.subr.mxu0 0.0
        %1849 = vmatpush1.xpose.msra.mxu0 %v1776
        %1850 = vmatprep.subr.mxu0 0.0
        %1851 = vmatpush1.xpose.msra.mxu0 %v1779
        %1852 = vmatprep.subr.mxu0 0.0
        %1853 = vmatpush1.xpose.msra.mxu0 %v1782
        %1854 = vmatprep.subr.mxu0 0.0
        %1855 = vmatpush1.xpose.msra.mxu0 %v1785
        %1856 = vmatprep.subr.mxu0 0.0
        %1857 = vmatpush1.xpose.msra.mxu0 %v1788
        %1858 = vmatprep.subr.mxu0 0.0
        %1859 = vmatpush1.xpose.msra.mxu0 %v1791
        %1860 = vmatprep.subr.mxu0 0.0
        %1861 = vmatpush1.xpose.msra.mxu0 %v1794
        %1862 = vmatprep.subr.mxu0 0.0
        %1863 = vmatpush1.xpose.msra.mxu0 %v1797
        %1864 = vmatprep.subr.mxu0 0.0
        %1865 = vmatpush1.xpose.msra.mxu0 %v1800
        %1866 = vmatprep.subr.mxu0 0.0
        %1867 = vmatpush1.xpose.msra.mxu0 %v1803
        %1868 = vmatprep.subr.mxu0 0.0
        %1869 = vmatpush1.xpose.msra.mxu0 %v1806
        %1870 = vmatprep.subr.mxu0 0.0
        %1871 = vmatpush1.xpose.msra.mxu0 %v1809
        %1872 = vmatprep.subr.mxu0 0.0
        %1873 = vmatpush1.xpose.msra.mxu0 %v1812
        %1874 = vmatprep.subr.mxu0 0.0
        %1875 = vmatpush1.xpose.msra.mxu0 %v1815
        %1876 = vmatprep.subr.mxu0 0.0
        %1877 = vmatpush1.xpose.msra.mxu0 %v1818
        %1878 = vmatprep.subr.mxu0 0.0
        %1879 = vmatpush1.xpose.msra.mxu0 %v1821
        %1880 = vmatprep.subr.mxu0 0.0
        %1881 = vmatpush1.xpose.msra.mxu0 %v1824
        %1882 = vmatprep.subr.mxu0 0.0
        %1883 = vmatpush1.xpose.msra.mxu0 0.0
        %1884 = vmatprep.subr.mxu0 0.0
        %1885 = vmatpush1.xpose.msra.mxu0 0.0
        %1886 = vmatprep.subr.mxu0 0.0
        %1887 = vmatpush1.xpose.msra.mxu0 0.0
        %1888 = vmatprep.subr.mxu0 0.0
        %1889 = vmatpush1.xpose.msra.mxu0 0.0
        %1890 = vmatprep.mubr.f32.mxu0 0.0
        %1891 = vmatmul.mubr.f32.gmra.mrb[0].mxu0 %v1740
        %v1892 = vpop.f32.mrb[0].mxu0
        %v1893 = vadd.f32 0.0, %v1892
        %v1894 = vpop.f32.mrb[0].mxu0
        %v1895 = vadd.f32 0.0, %v1894
        %1896 = vdwg.mxu0
        %v1897 = vadd.f32 %v1707, %v1893
        %v1898 = vadd.f32 %v1708, %v1895
        %v1899 = vld [vmem:[%s2] sm:$0xff]
        %1901 = vset.pattern.permute.xlu0 0
        %1902 = vperm.xlu0 %1901, %v1899
        %v1903 = vpop.permute.xlu0 %1902
        %v1905 = vadd.f32 %v1897, %v1903
        %v1906 = vadd.f32 %v1898, %v1903
        %1907 = vst [vmem:[%s177] sm:$0xff] %v1905
        %vm1908 = vcmask 785408
        %1909 = vst.msk [vmem:[%s177 + $0x8] sm:$0xff] %vm1908, %v1906
        %s1910 = sand.u32 %s107, 1
        %s1911 = scalar_lea.sflag [#allocation3], %s1910
        %s1912 = sand.u32 %s107, 1
        %s1913 = smul.addr %s1912, 16
        %s1914 = scalar_lea.vmem [#allocation2], %s1913
        // Predicated region
        $region33: #{tpu_custom_call.1} parent=31 // pred_check
          %p1915 = pneg %p117
        $region34: #{tpu_custom_call.1} parent=31 // pred_check_branch
          %1917 = sbr.rel (%p1915) target = $region36
        $region35: #{tpu_custom_call.1} parent=31 // pred_region
          %s1918 = smul.u32 2, %s22
          %s1920 = ssub.s32 256, 256
          %1921 = vsyncadd %s1911, %s1920
          %s1922 = smul.addr %s21, 2
          %s1923 = sadd.s32 %s1918, %s1922
          %s1924 = smul.addr %s1923, 128
          %s1925 = scalar_lea.hbm %s3, %s1924
          %s1927 = sshll.u32 %s1914, 4
          %s1928 = int_to_ptr.vmem [resolvable:$true] %s1927
          %1930 = dma.vmem_to_hbm [thread:$0]  %s1928, 256, %s1925, %s1911
        $region36: #{tpu_custom_call.1} parent=31 // pred_fallthru
          _
      $region32: #{tpu_custom_call.1} parent=5 // pred_fallthru
        _
      %p1931 = scmp.le.s32.totalorder 2, %s12
      // Predicated region
      $region37: #{tpu_custom_call.1} parent=5 // pred_check
        %p1932 = pneg %p1931
      $region38: #{tpu_custom_call.1} parent=5 // pred_check_branch
        %1934 = sbr.rel (%p1932) target = $region40
      $region39: #{tpu_custom_call.1} parent=5 // pred_region
        %s1935 = ssub.s32 %s12, 2
        // Predicated region
        $region41: #{tpu_custom_call.1} parent=39 // pred_check
          %p1936 = pneg %p123
        $region42: #{tpu_custom_call.1} parent=39 // pred_check_branch
          %1938 = sbr.rel (%p1936) target = $region44
        $region43: #{tpu_custom_call.1} parent=39 // pred_region
          %s1939 = sand.u32 %s108, 1
          %s1940 = scalar_lea.sflag [#allocation3], %s1939
          %s1941 = sand.u32 %s108, 1
          %s1942 = smul.addr %s1941, 16
          %s1943 = scalar_lea.vmem [#allocation2], %s1942
          %1944 = dma.done %s1940, 256
        $region44: #{tpu_custom_call.1} parent=39 // pred_fallthru
          _
      $region40: #{tpu_custom_call.1} parent=5 // pred_fallthru
        _
    $region6: #{tpu_custom_call.1} parent=1 // loop_footer
      %s16 = sadd.s32 1, %s12
    $region7: #{tpu_custom_call.1} parent=1 // loop_footer_branch
      %11 = sbr.rel target = $region3
    $region8: #{tpu_custom_call.1} parent=1 // loop_exit
      _
    %1945 = vsyncpa [#allocation3], 1
    %s1946 = scalar_lea.sflag [#allocation3], 1
    %1947 = vsyncpa %s1946, 1

</llo_original>
